<compile_context>
chip_gen: v7x
topology: tpu7x:2x2x1
jax: 0.10.0
libtpu: 0.0.40
codegen_flags: <defaults>
</compile_context>

<pallas_src>
import functools

import jax
import jax.numpy as jnp
from jax.experimental import pallas as pl
from jax.experimental.pallas import tpu as pltpu

_LANE = 128
_SUBLANE = 8


def _round_up(a: int, b: int) -> int:
    return ((a + b - 1) // b) * b


def _classifier_kernel(x_ref, w1_ref, b1_ref, w2_ref, b2_ref, o_ref):
    """Fused Linear -> ReLU -> Linear(->1) -> Sigmoid for one batch tile.

    x_ref : (bm, L)  input rows (f32 or bf16)
    w1_ref: (L, H)   first-layer weight, pre-transposed (same dtype as x)
    b1_ref: (1, H)   first-layer bias (f32)
    w2_ref: (1, H)   second-layer weight as a row (f32)
    b2_ref: (1,)     second-layer bias, scalar in SMEM
    o_ref : (bm,)    sigmoid outputs -- one lane-dense row of the (G, bm) output
    """
    # Layer 1 on the MXU, f32 accumulation.
    h = jnp.dot(x_ref[...], w1_ref[...], preferred_element_type=jnp.float32)
    h = jnp.maximum(h + b1_ref[...], 0.0)
    # Layer 2 (output width 1): VPU multiply + XLU lane-reduce; produces the
    # lane-dense (bm,) row directly and keeps the MXU/result-FIFO path free.
    z = jnp.sum(h * w2_ref[...], axis=-1) + b2_ref[0]
    o_ref[...] = jax.nn.sigmoid(z)


@functools.lru_cache(maxsize=None)
def _single_buffer_supported() -> bool:
    """Probe whether BlockSpec(pipeline_mode=pl.Buffered(1)) lowers & runs correctly
    on this backend; fall back to default double-buffering otherwise."""
    try:
        def probe(w_ref, o_ref):
            o_ref[...] = w_ref[...] + 1.0

        f = pl.pallas_call(
            probe,
            out_shape=jax.ShapeDtypeStruct((2 * _SUBLANE, _LANE), jnp.float32),
            grid=(2,),
            in_specs=[pl.BlockSpec((_SUBLANE, _LANE), lambda i: (0, 0),
                                   pipeline_mode=pl.Buffered(1))],
            out_specs=pl.BlockSpec((_SUBLANE, _LANE), lambda i: (i, 0)),
        )
        res = jax.block_until_ready(f(jnp.zeros((_SUBLANE, _LANE), jnp.float32)))
        return bool(jnp.allclose(res, 1.0))
    except Exception:  # any construction/lowering/compile failure -> safe fallback
        return False


@functools.partial(jax.jit, static_argnames=("block_m",))
def classifier_forward(x, w1_t, b1, w2, b2, *, block_m=2048):
    """Runs the fused classifier head.

    x:    (N, latent_dim) float32 (or bfloat16 for the reduced-bandwidth path)
    w1_t: (latent_dim, hidden_dim)  -- torch weight (hidden, latent) transposed
    b1:   (1, hidden_dim)
    w2:   (1, hidden_dim)           -- torch second-layer weight (row, no transpose)
    b2:   (1, 1)
    returns (N, 1) float32
    """
    n, latent_dim = x.shape
    hidden_dim = w1_t.shape[1]
    if x.dtype not in (jnp.float32, jnp.bfloat16):
        raise TypeError(
            f"classifier_forward: expected float32 or bfloat16 input, got {x.dtype}")

    # x is streamed as-is (casting it here would add a full HBM read+write pass).
    compute_dtype = x.dtype
    w1_t = w1_t.astype(compute_dtype)            # no-op when dtypes already agree
    b1 = b1.reshape(1, hidden_dim).astype(jnp.float32)
    w2 = w2.reshape(1, hidden_dim).astype(jnp.float32)
    b2 = b2.reshape(1).astype(jnp.float32)

    # Batch tile: always a multiple of 128 rows (lane-dense output row; also covers
    # bf16 sublane packing), targeting ~1-4 MB of x per grid step.
    bm = int(min(block_m, _round_up(n, _LANE)))
    bm = max(_LANE, _round_up(bm, _LANE))

    itemsize = jnp.dtype(compute_dtype).itemsize
    w_bufs = 1 if _single_buffer_supported() else 2

    def vmem_bytes(m: int) -> int:
        return (2 * m * latent_dim * itemsize                     # x, double-buffered
                + 2 * _SUBLANE * m * 4                            # out rows (sublane-padded), x2
                + w_bufs * latent_dim * hidden_dim * itemsize     # W1^T (resident)
                + w_bufs * 2 * _SUBLANE * hidden_dim * 4          # b1 + w2 (resident)
                + 2 * m * hidden_dim * 4)                         # h + elementwise temps

    budget = 44 * 2**20                       # safe under v7x's 64 MiB per TensorCore
    while bm > _LANE and vmem_bytes(bm) > budget:
        bm = max(_LANE, _round_up(bm // 2, _LANE))
    vmem_limit = int(min(48 * 2**20, max(16 * 2**20, vmem_bytes(bm) + (4 << 20))))

    num_blocks = pl.cdiv(n, bm)
    resident = dict(pipeline_mode=pl.Buffered(1)) if w_bufs == 1 else {}

    cost = pl.CostEstimate(
        flops=2 * n * latent_dim * hidden_dim + 3 * n * hidden_dim,
        transcendentals=n,
        bytes_accessed=(n * latent_dim * itemsize
                        + latent_dim * hidden_dim * itemsize
                        + 2 * hidden_dim * 4 + 4
                        + num_blocks * bm * 4),
    )

    out = pl.pallas_call(
        _classifier_kernel,
        out_shape=jax.ShapeDtypeStruct((num_blocks, bm), jnp.float32),
        grid_spec=pltpu.PrefetchScalarGridSpec(
            num_scalar_prefetch=0,
            grid=(num_blocks,),
            in_specs=[
                # x tile; the last tile may be ragged (rows >= n hold garbage that is
                # row-isolated and discarded by the final slice below).
                pl.BlockSpec((bm, latent_dim), lambda i: (i, 0)),
                # Grid-invariant operands: constant block index -> never re-fetched;
                # single-buffered when supported to halve their VMEM footprint.
                pl.BlockSpec((latent_dim, hidden_dim), lambda i: (0, 0), **resident),
                pl.BlockSpec((1, hidden_dim), lambda i: (0, 0), **resident),
                pl.BlockSpec((1, hidden_dim), lambda i: (0, 0), **resident),
                pl.BlockSpec(memory_space=pltpu.MemorySpace.SMEM),   # b2 scalar
            ],
            # Lane-dense output: one (bm,) row per grid step (leading dim squeezed).
            out_specs=pl.BlockSpec((None, bm), lambda i: (i, 0)),
        ),
        compiler_params=pltpu.CompilerParams(
            dimension_semantics=("parallel",),
            vmem_limit_bytes=vmem_limit,
        ),
        cost_estimate=cost,
    )(x, w1_t, b1, w2, b2)

    # (num_blocks, bm) -> (N, 1); touches only ~4*N bytes.
    return out.reshape(-1)[:n].reshape(n, 1)


def init_params(key, latent_dim, hidden_dim):
    """Deterministic synthetic parameters mirroring the torch module's shapes / init
    styles: kaiming-normal W1, xavier-normal W2, small-uniform biases."""
    k1, k2, k3, k4 = jax.random.split(key, 4)
    w1 = jax.random.normal(k1, (hidden_dim, latent_dim), jnp.float32) * jnp.sqrt(
        2.0 / latent_dim)                                   # kaiming_normal_
    w2 = jax.random.normal(k2, (1, hidden_dim), jnp.float32) * jnp.sqrt(
        2.0 / (hidden_dim + 1))                             # xavier_normal_
    b1 = jax.random.uniform(
        k3, (1, hidden_dim), jnp.float32,
        -1.0 / jnp.sqrt(latent_dim), 1.0 / jnp.sqrt(latent_dim))
    b2 = jax.random.uniform(
        k4, (1, 1), jnp.float32,
        -1.0 / jnp.sqrt(hidden_dim), 1.0 / jnp.sqrt(hidden_dim))
    # W1 pre-transposed to (in, out); W2 kept as a (1, hidden) row.
    return w1.T, b1, w2, b2


def reference_forward(x, w1_t, b1, w2, b2):
    h = jnp.maximum(x @ w1_t + b1, 0.0)
    return jax.nn.sigmoid(h @ w2.T + b2)


if __name__ == "__main__":
    # Small shapes consistent with the module (latent_dim -> hidden_dim -> 1).
    # N = 300 is deliberately NOT a multiple of 128 to exercise the ragged tile path.
    N, LATENT_DIM, HIDDEN_DIM = 300, 256, 128

    key = jax.random.PRNGKey(0)
    kx, kp = jax.random.split(key)
    x = jax.random.normal(kx, (N, LATENT_DIM), jnp.float32)
    w1_t, b1, w2, b2 = init_params(kp, LATENT_DIM, HIDDEN_DIM)

    ref = reference_forward(x, w1_t, b1, w2, b2)

    # Default config: N rounds up into a single 384-row tile (block > valid rows).
    out = jax.block_until_ready(classifier_forward(x, w1_t, b1, w2, b2))
    assert out.shape == (N, 1) and out.dtype == jnp.float32
    assert jnp.allclose(out, ref, atol=1e-5, rtol=1e-5)

    # Small tile -> 3-step grid with a ragged last block (exercises the pipelined
    # multi-step path and the discarded garbage rows of the tail tile).
    out_tiled = jax.block_until_ready(
        classifier_forward(x, w1_t, b1, w2, b2, block_m=128))
    assert out_tiled.shape == (N, 1)
    assert jnp.allclose(out_tiled, ref, atol=1e-5, rtol=1e-5)

    # bf16 streaming path: x already arrives as bf16 (cast happens upstream, NOT in
    # this jit), halving HBM bytes of the dominant x stream; f32 MXU accumulation.
    x_bf16 = x.astype(jnp.bfloat16)
    out_bf16 = jax.block_until_ready(classifier_forward(x_bf16, w1_t, b1, w2, b2))
    assert out_bf16.shape == (N, 1) and out_bf16.dtype == jnp.float32
    assert jnp.allclose(out_bf16, ref, atol=2e-2, rtol=2e-2)

    # NOTE: Classifier.forward(batch_size=...) just splits the batch and concatenates;
    # numerically identical to a single full-batch pass.
    # TODO(synk): fit/predict/WeightedBCELoss/reporters are host-side training
    # bookkeeping, not part of the forward pass, and are intentionally not kernels.
    print("KERNEL_OK")
</pallas_src>

<mosaic_0001>
module attributes {stable_mosaic.version = 11 : i64} {
  func.func @_classifier_kernel(%arg0: i32, %arg1: memref<384x256xf32, #tpu.memory_space<vmem>>, %arg2: memref<256x128xf32, #tpu.memory_space<vmem>>, %arg3: memref<1x128xf32, #tpu.memory_space<vmem>>, %arg4: memref<1x128xf32, #tpu.memory_space<vmem>>, %arg5: memref<1xf32, #tpu.memory_space<smem>>, %arg6: memref<1x384xf32, #tpu.memory_space<vmem>>) attributes {dimension_semantics = [#tpu.dimension_semantics<parallel>], iteration_bounds = array<i64: 1>, scalar_prefetch = 0 : i64, scratch_operands = 0 : i64, tpu.core_type = #tpu.core_type<tc>, window_params = [{transform_indices = @transform_0, window_bounds = array<i64: 384, 256>}, {pipeline_mode = #tpu.pipeline_mode<synchronous>, transform_indices = @transform_1, window_bounds = array<i64: 256, 128>}, {pipeline_mode = #tpu.pipeline_mode<synchronous>, transform_indices = @transform_2, window_bounds = array<i64: 1, 128>}, {pipeline_mode = #tpu.pipeline_mode<synchronous>, transform_indices = @transform_3, window_bounds = array<i64: 1, 128>}, {transform_indices = @transform_4, window_bounds = array<i64: 1>}, {transform_indices = @transform_5, window_bounds = array<i64: 1, 384>}]} {
    %c0 = arith.constant 0 : index
    %c0_0 = arith.constant 0 : index
    %0 = vector.load %arg1[%c0, %c0_0] : memref<384x256xf32, #tpu.memory_space<vmem>>, vector<384x256xf32>
    %c0_1 = arith.constant 0 : index
    %c0_2 = arith.constant 0 : index
    %1 = vector.load %arg2[%c0_1, %c0_2] : memref<256x128xf32, #tpu.memory_space<vmem>>, vector<256x128xf32>
    %cst = arith.constant dense<0.000000e+00> : vector<384x128xf32>
    %2 = tpu.matmul %0, %1, %cst {dimension_numbers = #tpu.dot_dimension_numbers<[1], [0], [0], [1], [0, 0, 1, 1], [], []>} : vector<384x256xf32>, vector<256x128xf32>, vector<384x128xf32> -> vector<384x128xf32>
    %c0_3 = arith.constant 0 : index
    %c0_4 = arith.constant 0 : index
    %3 = vector.load %arg3[%c0_3, %c0_4] : memref<1x128xf32, #tpu.memory_space<vmem>>, vector<1x128xf32>
    %4 = vector.broadcast %3 : vector<1x128xf32> to vector<384x128xf32>
    %5 = arith.addf %2, %4 : vector<384x128xf32>
    %cst_5 = arith.constant 0.000000e+00 : f32
    %6 = vector.broadcast %cst_5 : f32 to vector<384x128xf32>
    %7 = arith.maximumf %5, %6 : vector<384x128xf32>
    %c0_6 = arith.constant 0 : index
    %c0_7 = arith.constant 0 : index
    %8 = vector.load %arg4[%c0_6, %c0_7] : memref<1x128xf32, #tpu.memory_space<vmem>>, vector<1x128xf32>
    %9 = vector.broadcast %8 : vector<1x128xf32> to vector<384x128xf32>
    %10 = arith.mulf %7, %9 : vector<384x128xf32>
    %cst_8 = arith.constant dense<0.000000e+00> : vector<384xf32>
    %11 = vector.multi_reduction <add>, %10, %cst_8 [1] : vector<384x128xf32> to vector<384xf32>
    %c0_9 = arith.constant 0 : index
    %12 = memref.load %arg5[%c0_9] : memref<1xf32, #tpu.memory_space<smem>>
    %13 = vector.broadcast %12 : f32 to vector<384xf32>
    %14 = arith.addf %11, %13 : vector<384xf32>
    %15 = arith.negf %14 : vector<384xf32>
    %16 = math.exp %15 : vector<384xf32>
    %cst_10 = arith.constant 1.000000e+00 : f32
    %17 = vector.broadcast %cst_10 : f32 to vector<384xf32>
    %18 = arith.addf %17, %16 : vector<384xf32>
    %19 = arith.divf %17, %18 : vector<384xf32>
    %c0_11 = arith.constant 0 : index
    %c0_12 = arith.constant 0 : index
    %20 = vector.load %arg6[%c0_11, %c0_12] : memref<1x384xf32, #tpu.memory_space<vmem>>, vector<1x384xf32>
    %21 = vector.shape_cast %20 : vector<1x384xf32> to vector<384xf32>
    %22 = vector.shape_cast %19 : vector<384xf32> to vector<1x384xf32>
    tpu.vector_store %arg6[%c0_11, %c0_12], %22 {strides = array<i32>} : memref<1x384xf32, #tpu.memory_space<vmem>>, vector<1x384xf32>,
    return
  }
  func.func @transform_0(%arg0: i32) -> (i32, i32) {
    %c0_i32 = arith.constant 0 : i32
    %c0_i32_0 = arith.constant 0 : i32
    return %arg0, %c0_i32 : i32, i32
  }
  func.func @transform_1(%arg0: i32) -> (i32, i32) {
    %c0_i32 = arith.constant 0 : i32
    %c0_i32_0 = arith.constant 0 : i32
    %c0_i32_1 = arith.constant 0 : i32
    return %c0_i32, %c0_i32_0 : i32, i32
  }
  func.func @transform_2(%arg0: i32) -> (i32, i32) {
    %c0_i32 = arith.constant 0 : i32
    %c0_i32_0 = arith.constant 0 : i32
    %c0_i32_1 = arith.constant 0 : i32
    return %c0_i32, %c0_i32_0 : i32, i32
  }
  func.func @transform_3(%arg0: i32) -> (i32, i32) {
    %c0_i32 = arith.constant 0 : i32
    %c0_i32_0 = arith.constant 0 : i32
    %c0_i32_1 = arith.constant 0 : i32
    return %c0_i32, %c0_i32_0 : i32, i32
  }
  func.func @transform_4(%arg0: i32) -> i32 {
    %c0_i32 = arith.constant 0 : i32
    %c0_i32_0 = arith.constant 0 : i32
    return %c0_i32 : i32
  }
  func.func @transform_5(%arg0: i32) -> (i32, i32) {
    %c0_i32 = arith.constant 0 : i32
    %c0_i32_0 = arith.constant 0 : i32
    return %arg0, %c0_i32 : i32, i32
  }
}

</mosaic_0001>

<llo_original>
// kernel: classifier_forward.1
$region0: #{classifier_forward.1}
  #allocation0 [shape = 'u32[]', space=smem, size = 0x4, offset = 0x4, fixed_abs, tag = 'smem constant byte address 0x4 - core index']
  #allocation1 [shape = 'u32[144,128]{1,0:T(1,128)}', space=vmem, size = 0x12000, scoped, tag = 'internal scratch']
  #allocation2 [shape = 'f32[1]{0:T(128)S(6)}', space=smem, size = 0x200, scoped, tag = 'scoped memory for classifier_forward.1']
  %s0 = inlined_call_operand.hbm [shape: f32[300,256], index: 0, kind: input, shape index: {}]
  %s1 = inlined_call_operand.hbm [shape: f32[256,128], index: 1, kind: input, shape index: {}]
  %s2 = inlined_call_operand.vmem [shape: f32[1,128], index: 2, kind: input, shape index: {}]
  %s3 = inlined_call_operand.vmem [shape: f32[1,128], index: 3, kind: input, shape index: {}]
  %s4 = inlined_call_operand.<no memory space> [shape: f32[1], index: 4, kind: input, shape index: {}]
  %s5 = inlined_call_operand.vmem [shape: f32[1,384], index: 5, kind: output, shape index: {}]
  %s6 = sld [smem:[#allocation0]]
  $region38: #{classifier_forward.1} parent=0
    _
  %s8 = ssub.s32 1, %s6
  %s9 = scalar_select 0, %s8, %s6
  %10 = sst [smem:[#allocation2]] %s4
  $region1: #{classifier_forward.1} parent=0
    #allocation3 [shape = 'u8[393216]{0}', space=vmem, size = 0x60000, scoped, tag = 'input window, operand 0, single buffered']
    #allocation4 [shape = 's32[1]{0}', space=sflag, size = 0x4, scoped, tag = 'scoped memory for classifier_forward.1']
    #allocation5 [shape = 'u8[131072]{0}', space=vmem, size = 0x20000, scoped, tag = 'input window, operand 1, single buffered']
    #allocation6 [shape = 's32[1]{0}', space=sflag, size = 0x4, scoped, tag = 'scoped memory for classifier_forward.1']
    %11 = vsyncpa [#allocation4], 0
    %12 = vsyncpa [#allocation6], 0
    // Predicated region
    $region2: #{classifier_forward.1} parent=1 // pred_check
      _
    $region3: #{classifier_forward.1} parent=1 // pred_check_branch
      %14 = sbr.rel (0) target = $region5
    $region4: #{classifier_forward.1} parent=1 // pred_region
      %s16 = ssub.s32 12288, 9728
      %17 = vsyncadd [#allocation4], %s16
      %s18 = sshll.u32 [#allocation3], 4
      %s19 = int_to_ptr.vmem [resolvable:$true] %s18
      %24 = dma.hbm_to_vmem [thread:$0]  %s0, 9728, %s19, [#allocation4], 256, 256, 16
    $region5: #{classifier_forward.1} parent=1 // pred_fallthru
      _
    // Predicated region
    $region6: #{classifier_forward.1} parent=1 // pred_check
      _
    $region7: #{classifier_forward.1} parent=1 // pred_check_branch
      %26 = sbr.rel (0) target = $region9
    $region8: #{classifier_forward.1} parent=1 // pred_region
      %s28 = ssub.s32 4096, 4096
      %29 = vsyncadd [#allocation6], %s28
      %s30 = sshll.u32 [#allocation5], 4
      %s31 = int_to_ptr.vmem [resolvable:$true] %s30
      %36 = dma.hbm_to_vmem [thread:$0]  %s1, 4096, %s31, [#allocation6], 128, 128, 8
    $region9: #{classifier_forward.1} parent=1 // pred_fallthru
      _
    // Predicated region
    $region10: #{classifier_forward.1} parent=1 // pred_check
      _
    $region11: #{classifier_forward.1} parent=1 // pred_check_branch
      %38 = sbr.rel (0) target = $region13
    $region12: #{classifier_forward.1} parent=1 // pred_region
      _
    $region13: #{classifier_forward.1} parent=1 // pred_fallthru
      _
    // Predicated region
    $region14: #{classifier_forward.1} parent=1 // pred_check
      _
    $region15: #{classifier_forward.1} parent=1 // pred_check_branch
      %40 = sbr.rel (0) target = $region17
    $region16: #{classifier_forward.1} parent=1 // pred_region
      _
    $region17: #{classifier_forward.1} parent=1 // pred_fallthru
      _
    // Predicated region
    $region18: #{classifier_forward.1} parent=1 // pred_check
      _
    $region19: #{classifier_forward.1} parent=1 // pred_check_branch
      %42 = sbr.rel (0) target = $region21
    $region20: #{classifier_forward.1} parent=1 // pred_region
      _
    $region21: #{classifier_forward.1} parent=1 // pred_fallthru
      _
    // Predicated region
    $region22: #{classifier_forward.1} parent=1 // pred_check
      _
    $region23: #{classifier_forward.1} parent=1 // pred_check_branch
      %44 = sbr.rel (0) target = $region25
    $region24: #{classifier_forward.1} parent=1 // pred_region
      %45 = dma.done [#allocation4], 12288
    $region25: #{classifier_forward.1} parent=1 // pred_fallthru
      _
    // Predicated region
    $region26: #{classifier_forward.1} parent=1 // pred_check
      _
    $region27: #{classifier_forward.1} parent=1 // pred_check_branch
      %47 = sbr.rel (0) target = $region29
    $region28: #{classifier_forward.1} parent=1 // pred_region
      %48 = dma.done [#allocation6], 4096
    $region29: #{classifier_forward.1} parent=1 // pred_fallthru
      _
    %v49 = vld [vmem:[#allocation3] sm:$0xff]
    %v50 = vld [vmem:[#allocation3 + $0x8] sm:$0xff]
    %v51 = vld [vmem:[#allocation3 + $0x10] sm:$0xff]
    %v52 = vld [vmem:[#allocation3 + $0x18] sm:$0xff]
    %v53 = vld [vmem:[#allocation3 + $0x20] sm:$0xff]
    %v54 = vld [vmem:[#allocation3 + $0x28] sm:$0xff]
    %v55 = vld [vmem:[#allocation3 + $0x30] sm:$0xff]
    %v56 = vld [vmem:[#allocation3 + $0x38] sm:$0xff]
    %v57 = vld [vmem:[#allocation3 + $0x40] sm:$0xff]
    %v58 = vld [vmem:[#allocation3 + $0x48] sm:$0xff]
    %v59 = vld [vmem:[#allocation3 + $0x50] sm:$0xff]
    %v60 = vld [vmem:[#allocation3 + $0x58] sm:$0xff]
    %v61 = vld [vmem:[#allocation3 + $0x60] sm:$0xff]
    %v62 = vld [vmem:[#allocation3 + $0x68] sm:$0xff]
    %v63 = vld [vmem:[#allocation3 + $0x70] sm:$0xff]
    %v64 = vld [vmem:[#allocation3 + $0x78] sm:$0xff]
    %v65 = vld [vmem:[#allocation3 + $0x80] sm:$0xff]
    %v66 = vld [vmem:[#allocation3 + $0x88] sm:$0xff]
    %v67 = vld [vmem:[#allocation3 + $0x90] sm:$0xff]
    %v68 = vld [vmem:[#allocation3 + $0x98] sm:$0xff]
    %v69 = vld [vmem:[#allocation3 + $0xa0] sm:$0xff]
    %v70 = vld [vmem:[#allocation3 + $0xa8] sm:$0xff]
    %v71 = vld [vmem:[#allocation3 + $0xb0] sm:$0xff]
    %v72 = vld [vmem:[#allocation3 + $0xb8] sm:$0xff]
    %v73 = vld [vmem:[#allocation3 + $0xc0] sm:$0xff]
    %v74 = vld [vmem:[#allocation3 + $0xc8] sm:$0xff]
    %v75 = vld [vmem:[#allocation3 + $0xd0] sm:$0xff]
    %v76 = vld [vmem:[#allocation3 + $0xd8] sm:$0xff]
    %v77 = vld [vmem:[#allocation3 + $0xe0] sm:$0xff]
    %v78 = vld [vmem:[#allocation3 + $0xe8] sm:$0xff]
    %v79 = vld [vmem:[#allocation3 + $0xf0] sm:$0xff]
    %v80 = vld [vmem:[#allocation3 + $0xf8] sm:$0xff]
    %v81 = vld [vmem:[#allocation3 + $0x100] sm:$0xff]
    %v82 = vld [vmem:[#allocation3 + $0x108] sm:$0xff]
    %v83 = vld [vmem:[#allocation3 + $0x110] sm:$0xff]
    %v84 = vld [vmem:[#allocation3 + $0x118] sm:$0xff]
    %v85 = vld [vmem:[#allocation3 + $0x120] sm:$0xff]
    %v86 = vld [vmem:[#allocation3 + $0x128] sm:$0xff]
    %v87 = vld [vmem:[#allocation3 + $0x130] sm:$0xff]
    %v88 = vld [vmem:[#allocation3 + $0x138] sm:$0xff]
    %v89 = vld [vmem:[#allocation3 + $0x140] sm:$0xff]
    %v90 = vld [vmem:[#allocation3 + $0x148] sm:$0xff]
    %v91 = vld [vmem:[#allocation3 + $0x150] sm:$0xff]
    %v92 = vld [vmem:[#allocation3 + $0x158] sm:$0xff]
    %v93 = vld [vmem:[#allocation3 + $0x160] sm:$0xff]
    %v94 = vld [vmem:[#allocation3 + $0x168] sm:$0xff]
    %v95 = vld [vmem:[#allocation3 + $0x170] sm:$0xff]
    %v96 = vld [vmem:[#allocation3 + $0x178] sm:$0xff]
    %v97 = vld [vmem:[#allocation3 + $0x180] sm:$0xff]
    %v98 = vld [vmem:[#allocation3 + $0x188] sm:$0xff]
    %v99 = vld [vmem:[#allocation3 + $0x190] sm:$0xff]
    %v100 = vld [vmem:[#allocation3 + $0x198] sm:$0xff]
    %v101 = vld [vmem:[#allocation3 + $0x1a0] sm:$0xff]
    %v102 = vld [vmem:[#allocation3 + $0x1a8] sm:$0xff]
    %v103 = vld [vmem:[#allocation3 + $0x1b0] sm:$0xff]
    %v104 = vld [vmem:[#allocation3 + $0x1b8] sm:$0xff]
    %v105 = vld [vmem:[#allocation3 + $0x1c0] sm:$0xff]
    %v106 = vld [vmem:[#allocation3 + $0x1c8] sm:$0xff]
    %v107 = vld [vmem:[#allocation3 + $0x1d0] sm:$0xff]
    %v108 = vld [vmem:[#allocation3 + $0x1d8] sm:$0xff]
    %v109 = vld [vmem:[#allocation3 + $0x1e0] sm:$0xff]
    %v110 = vld [vmem:[#allocation3 + $0x1e8] sm:$0xff]
    %v111 = vld [vmem:[#allocation3 + $0x1f0] sm:$0xff]
    %v112 = vld [vmem:[#allocation3 + $0x1f8] sm:$0xff]
    %v113 = vld [vmem:[#allocation3 + $0x200] sm:$0xff]
    %v114 = vld [vmem:[#allocation3 + $0x208] sm:$0xff]
    %v115 = vld [vmem:[#allocation3 + $0x210] sm:$0xff]
    %v116 = vld [vmem:[#allocation3 + $0x218] sm:$0xff]
    %v117 = vld [vmem:[#allocation3 + $0x220] sm:$0xff]
    %v118 = vld [vmem:[#allocation3 + $0x228] sm:$0xff]
    %v119 = vld [vmem:[#allocation3 + $0x230] sm:$0xff]
    %v120 = vld [vmem:[#allocation3 + $0x238] sm:$0xff]
    %v121 = vld [vmem:[#allocation3 + $0x240] sm:$0xff]
    %v122 = vld [vmem:[#allocation3 + $0x248] sm:$0xff]
    %v123 = vld [vmem:[#allocation3 + $0x250] sm:$0xff]
    %v124 = vld [vmem:[#allocation3 + $0x258] sm:$0xff]
    %v125 = vld [vmem:[#allocation3 + $0x260] sm:$0xff]
    %v126 = vld [vmem:[#allocation3 + $0x268] sm:$0xff]
    %v127 = vld [vmem:[#allocation3 + $0x270] sm:$0xff]
    %v128 = vld [vmem:[#allocation3 + $0x278] sm:$0xff]
    %v129 = vld [vmem:[#allocation3 + $0x280] sm:$0xff]
    %v130 = vld [vmem:[#allocation3 + $0x288] sm:$0xff]
    %v131 = vld [vmem:[#allocation3 + $0x290] sm:$0xff]
    %v132 = vld [vmem:[#allocation3 + $0x298] sm:$0xff]
    %v133 = vld [vmem:[#allocation3 + $0x2a0] sm:$0xff]
    %v134 = vld [vmem:[#allocation3 + $0x2a8] sm:$0xff]
    %v135 = vld [vmem:[#allocation3 + $0x2b0] sm:$0xff]
    %v136 = vld [vmem:[#allocation3 + $0x2b8] sm:$0xff]
    %v137 = vld [vmem:[#allocation3 + $0x2c0] sm:$0xff]
    %v138 = vld [vmem:[#allocation3 + $0x2c8] sm:$0xff]
    %v139 = vld [vmem:[#allocation3 + $0x2d0] sm:$0xff]
    %v140 = vld [vmem:[#allocation3 + $0x2d8] sm:$0xff]
    %v141 = vld [vmem:[#allocation3 + $0x2e0] sm:$0xff]
    %v142 = vld [vmem:[#allocation3 + $0x2e8] sm:$0xff]
    %v143 = vld [vmem:[#allocation3 + $0x2f0] sm:$0xff]
    %v144 = vld [vmem:[#allocation3 + $0x2f8] sm:$0xff]
    %v145 = vld [vmem:[#allocation5] sm:$0xff]
    %v146 = vld [vmem:[#allocation5 + $0x8] sm:$0xff]
    %v147 = vld [vmem:[#allocation5 + $0x10] sm:$0xff]
    %v148 = vld [vmem:[#allocation5 + $0x18] sm:$0xff]
    %v149 = vld [vmem:[#allocation5 + $0x20] sm:$0xff]
    %v150 = vld [vmem:[#allocation5 + $0x28] sm:$0xff]
    %v151 = vld [vmem:[#allocation5 + $0x30] sm:$0xff]
    %v152 = vld [vmem:[#allocation5 + $0x38] sm:$0xff]
    %v153 = vld [vmem:[#allocation5 + $0x40] sm:$0xff]
    %v154 = vld [vmem:[#allocation5 + $0x48] sm:$0xff]
    %v155 = vld [vmem:[#allocation5 + $0x50] sm:$0xff]
    %v156 = vld [vmem:[#allocation5 + $0x58] sm:$0xff]
    %v157 = vld [vmem:[#allocation5 + $0x60] sm:$0xff]
    %v158 = vld [vmem:[#allocation5 + $0x68] sm:$0xff]
    %v159 = vld [vmem:[#allocation5 + $0x70] sm:$0xff]
    %v160 = vld [vmem:[#allocation5 + $0x78] sm:$0xff]
    %v161 = vld [vmem:[#allocation5 + $0x80] sm:$0xff]
    %v162 = vld [vmem:[#allocation5 + $0x88] sm:$0xff]
    %v163 = vld [vmem:[#allocation5 + $0x90] sm:$0xff]
    %v164 = vld [vmem:[#allocation5 + $0x98] sm:$0xff]
    %v165 = vld [vmem:[#allocation5 + $0xa0] sm:$0xff]
    %v166 = vld [vmem:[#allocation5 + $0xa8] sm:$0xff]
    %v167 = vld [vmem:[#allocation5 + $0xb0] sm:$0xff]
    %v168 = vld [vmem:[#allocation5 + $0xb8] sm:$0xff]
    %v169 = vld [vmem:[#allocation5 + $0xc0] sm:$0xff]
    %v170 = vld [vmem:[#allocation5 + $0xc8] sm:$0xff]
    %v171 = vld [vmem:[#allocation5 + $0xd0] sm:$0xff]
    %v172 = vld [vmem:[#allocation5 + $0xd8] sm:$0xff]
    %v173 = vld [vmem:[#allocation5 + $0xe0] sm:$0xff]
    %v174 = vld [vmem:[#allocation5 + $0xe8] sm:$0xff]
    %v175 = vld [vmem:[#allocation5 + $0xf0] sm:$0xff]
    %v176 = vld [vmem:[#allocation5 + $0xf8] sm:$0xff]
    %v177 = vld [vmem:[%s2] sm:$0x1]
    %v179 = vlaneseq
    %v180 = vshrl.u32 %v179, 7
    %v181 = vsub.s32 0, %v180
    %v182 = vrot.slane %v177, %v181
    %184 = vmatprep.subr.mxu0 0.0
    %185 = vmatpush1.msra.mxu0 %v145
    %186 = vmatprep.subr.mxu0 0.0
    %187 = vmatpush1.msra.mxu0 %v146
    %188 = vmatprep.subr.mxu0 0.0
    %189 = vmatpush1.msra.mxu0 %v147
    %190 = vmatprep.subr.mxu0 0.0
    %191 = vmatpush1.msra.mxu0 %v148
    %192 = vmatprep.subr.mxu0 0.0
    %193 = vmatpush1.msra.mxu0 %v149
    %194 = vmatprep.subr.mxu0 0.0
    %195 = vmatpush1.msra.mxu0 %v150
    %196 = vmatprep.subr.mxu0 0.0
    %197 = vmatpush1.msra.mxu0 %v151
    %198 = vmatprep.subr.mxu0 0.0
    %199 = vmatpush1.msra.mxu0 %v152
    %200 = vmatprep.subr.mxu0 0.0
    %201 = vmatpush1.msra.mxu0 %v153
    %202 = vmatprep.subr.mxu0 0.0
    %203 = vmatpush1.msra.mxu0 %v154
    %204 = vmatprep.subr.mxu0 0.0
    %205 = vmatpush1.msra.mxu0 %v155
    %206 = vmatprep.subr.mxu0 0.0
    %207 = vmatpush1.msra.mxu0 %v156
    %208 = vmatprep.subr.mxu0 0.0
    %209 = vmatpush1.msra.mxu0 %v157
    %210 = vmatprep.subr.mxu0 0.0
    %211 = vmatpush1.msra.mxu0 %v158
    %212 = vmatprep.subr.mxu0 0.0
    %213 = vmatpush1.msra.mxu0 %v159
    %214 = vmatprep.subr.mxu0 0.0
    %215 = vmatpush1.msra.mxu0 %v160
    %216 = vmatprep.subr.mxu0 0.0
    %217 = vmatpush1.msra.mxu0 %v161
    %218 = vmatprep.subr.mxu0 0.0
    %219 = vmatpush1.msra.mxu0 %v162
    %220 = vmatprep.subr.mxu0 0.0
    %221 = vmatpush1.msra.mxu0 %v163
    %222 = vmatprep.subr.mxu0 0.0
    %223 = vmatpush1.msra.mxu0 %v164
    %224 = vmatprep.subr.mxu0 0.0
    %225 = vmatpush1.msra.mxu0 %v165
    %226 = vmatprep.subr.mxu0 0.0
    %227 = vmatpush1.msra.mxu0 %v166
    %228 = vmatprep.subr.mxu0 0.0
    %229 = vmatpush1.msra.mxu0 %v167
    %230 = vmatprep.subr.mxu0 0.0
    %231 = vmatpush1.msra.mxu0 %v168
    %232 = vmatprep.subr.mxu0 0.0
    %233 = vmatpush1.msra.mxu0 %v169
    %234 = vmatprep.subr.mxu0 0.0
    %235 = vmatpush1.msra.mxu0 %v170
    %236 = vmatprep.subr.mxu0 0.0
    %237 = vmatpush1.msra.mxu0 %v171
    %238 = vmatprep.subr.mxu0 0.0
    %239 = vmatpush1.msra.mxu0 %v172
    %240 = vmatprep.subr.mxu0 0.0
    %241 = vmatpush1.msra.mxu0 %v173
    %242 = vmatprep.subr.mxu0 0.0
    %243 = vmatpush1.msra.mxu0 %v174
    %244 = vmatprep.subr.mxu0 0.0
    %245 = vmatpush1.msra.mxu0 %v175
    %246 = vmatprep.subr.mxu0 0.0
    %247 = vmatpush1.msra.mxu0 %v176
    %248 = vmatprep.mubr.f32.mxu0 %v50
    %249 = vmatmul.mubr.f32.gmra.mrb[0].mxu0 %v49
    %v250 = vpop.f32.mrb[0].mxu0
    %v251 = vadd.f32 %v182, %v250
    %v252 = vpop.f32.mrb[0].mxu0
    %253 = vmatprep.mubr.f32.mxu0 %v52
    %254 = vmatmul.mubr.f32.gmra.mrb[0].mxu0 %v51
    %v255 = vpop.f32.mrb[0].mxu0
    %v256 = vadd.f32 %v182, %v255
    %v257 = vpop.f32.mrb[0].mxu0
    %258 = vmatprep.mubr.f32.mxu0 %v54
    %259 = vmatmul.mubr.f32.gmra.mrb[0].mxu0 %v53
    %v260 = vpop.f32.mrb[0].mxu0
    %v261 = vadd.f32 %v182, %v260
    %v262 = vpop.f32.mrb[0].mxu0
    %263 = vmatprep.mubr.f32.mxu0 %v56
    %264 = vmatmul.mubr.f32.gmra.mrb[0].mxu0 %v55
    %v265 = vpop.f32.mrb[0].mxu0
    %v266 = vadd.f32 %v182, %v265
    %v267 = vpop.f32.mrb[0].mxu0
    %268 = vmatprep.mubr.f32.mxu0 %v58
    %269 = vmatmul.mubr.f32.gmra.mrb[0].mxu0 %v57
    %v270 = vpop.f32.mrb[0].mxu0
    %v271 = vadd.f32 %v182, %v270
    %v272 = vpop.f32.mrb[0].mxu0
    %273 = vmatprep.mubr.f32.mxu0 %v60
    %274 = vmatmul.mubr.f32.gmra.mrb[0].mxu0 %v59
    %v275 = vpop.f32.mrb[0].mxu0
    %v276 = vadd.f32 %v182, %v275
    %v277 = vpop.f32.mrb[0].mxu0
    %278 = vmatprep.mubr.f32.mxu0 %v62
    %279 = vmatmul.mubr.f32.gmra.mrb[0].mxu0 %v61
    %v280 = vpop.f32.mrb[0].mxu0
    %v281 = vadd.f32 %v182, %v280
    %v282 = vpop.f32.mrb[0].mxu0
    %283 = vmatprep.mubr.f32.mxu0 %v64
    %284 = vmatmul.mubr.f32.gmra.mrb[0].mxu0 %v63
    %v285 = vpop.f32.mrb[0].mxu0
    %v286 = vadd.f32 %v182, %v285
    %v287 = vpop.f32.mrb[0].mxu0
    %288 = vmatprep.mubr.f32.mxu0 %v66
    %289 = vmatmul.mubr.f32.gmra.mrb[0].mxu0 %v65
    %v290 = vpop.f32.mrb[0].mxu0
    %v291 = vadd.f32 %v182, %v290
    %v292 = vpop.f32.mrb[0].mxu0
    %293 = vmatprep.mubr.f32.mxu0 %v68
    %294 = vmatmul.mubr.f32.gmra.mrb[0].mxu0 %v67
    %v295 = vpop.f32.mrb[0].mxu0
    %v296 = vadd.f32 %v182, %v295
    %v297 = vpop.f32.mrb[0].mxu0
    %298 = vmatprep.mubr.f32.mxu0 %v70
    %299 = vmatmul.mubr.f32.gmra.mrb[0].mxu0 %v69
    %v300 = vpop.f32.mrb[0].mxu0
    %v301 = vadd.f32 %v182, %v300
    %v302 = vpop.f32.mrb[0].mxu0
    %303 = vmatprep.mubr.f32.mxu0 %v72
    %304 = vmatmul.mubr.f32.gmra.mrb[0].mxu0 %v71
    %v305 = vpop.f32.mrb[0].mxu0
    %v306 = vadd.f32 %v182, %v305
    %v307 = vpop.f32.mrb[0].mxu0
    %308 = vmatprep.mubr.f32.mxu0 %v74
    %309 = vmatmul.mubr.f32.gmra.mrb[0].mxu0 %v73
    %v310 = vpop.f32.mrb[0].mxu0
    %v311 = vadd.f32 %v182, %v310
    %v312 = vpop.f32.mrb[0].mxu0
    %313 = vmatprep.mubr.f32.mxu0 %v76
    %314 = vmatmul.mubr.f32.gmra.mrb[0].mxu0 %v75
    %v315 = vpop.f32.mrb[0].mxu0
    %v316 = vadd.f32 %v182, %v315
    %v317 = vpop.f32.mrb[0].mxu0
    %318 = vmatprep.mubr.f32.mxu0 %v78
    %319 = vmatmul.mubr.f32.gmra.mrb[0].mxu0 %v77
    %v320 = vpop.f32.mrb[0].mxu0
    %v321 = vadd.f32 %v182, %v320
    %v322 = vpop.f32.mrb[0].mxu0
    %323 = vmatprep.mubr.f32.mxu0 %v80
    %324 = vmatmul.mubr.f32.gmra.mrb[0].mxu0 %v79
    %v325 = vpop.f32.mrb[0].mxu0
    %v326 = vadd.f32 %v182, %v325
    %v327 = vpop.f32.mrb[0].mxu0
    %328 = vmatprep.mubr.f32.mxu0 %v82
    %329 = vmatmul.mubr.f32.gmra.mrb[0].mxu0 %v81
    %v330 = vpop.f32.mrb[0].mxu0
    %v331 = vadd.f32 %v182, %v330
    %v332 = vpop.f32.mrb[0].mxu0
    %333 = vmatprep.mubr.f32.mxu0 %v84
    %334 = vmatmul.mubr.f32.gmra.mrb[0].mxu0 %v83
    %v335 = vpop.f32.mrb[0].mxu0
    %v336 = vadd.f32 %v182, %v335
    %v337 = vpop.f32.mrb[0].mxu0
    %338 = vmatprep.mubr.f32.mxu0 %v86
    %339 = vmatmul.mubr.f32.gmra.mrb[0].mxu0 %v85
    %v340 = vpop.f32.mrb[0].mxu0
    %v341 = vadd.f32 %v182, %v340
    %v342 = vpop.f32.mrb[0].mxu0
    %343 = vmatprep.mubr.f32.mxu0 %v88
    %344 = vmatmul.mubr.f32.gmra.mrb[0].mxu0 %v87
    %v345 = vpop.f32.mrb[0].mxu0
    %v346 = vadd.f32 %v182, %v345
    %v347 = vpop.f32.mrb[0].mxu0
    %348 = vmatprep.mubr.f32.mxu0 %v90
    %349 = vmatmul.mubr.f32.gmra.mrb[0].mxu0 %v89
    %v350 = vpop.f32.mrb[0].mxu0
    %v351 = vadd.f32 %v182, %v350
    %v352 = vpop.f32.mrb[0].mxu0
    %353 = vmatprep.mubr.f32.mxu0 %v92
    %354 = vmatmul.mubr.f32.gmra.mrb[0].mxu0 %v91
    %v355 = vpop.f32.mrb[0].mxu0
    %v356 = vadd.f32 %v182, %v355
    %v357 = vpop.f32.mrb[0].mxu0
    %358 = vmatprep.mubr.f32.mxu0 %v94
    %359 = vmatmul.mubr.f32.gmra.mrb[0].mxu0 %v93
    %v360 = vpop.f32.mrb[0].mxu0
    %v361 = vadd.f32 %v182, %v360
    %v362 = vpop.f32.mrb[0].mxu0
    %363 = vmatprep.mubr.f32.mxu0 %v96
    %364 = vmatmul.mubr.f32.gmra.mrb[0].mxu0 %v95
    %v365 = vpop.f32.mrb[0].mxu0
    %v366 = vadd.f32 %v182, %v365
    %v367 = vpop.f32.mrb[0].mxu0
    %368 = vmatprep.mubr.f32.mxu0 %v98
    %369 = vmatmul.mubr.f32.gmra.mrb[0].mxu0 %v97
    %v370 = vpop.f32.mrb[0].mxu0
    %v371 = vadd.f32 %v182, %v370
    %v372 = vpop.f32.mrb[0].mxu0
    %373 = vmatprep.mubr.f32.mxu0 %v100
    %374 = vmatmul.mubr.f32.gmra.mrb[0].mxu0 %v99
    %v375 = vpop.f32.mrb[0].mxu0
    %v376 = vadd.f32 %v182, %v375
    %v377 = vpop.f32.mrb[0].mxu0
    %378 = vmatprep.mubr.f32.mxu0 %v102
    %379 = vmatmul.mubr.f32.gmra.mrb[0].mxu0 %v101
    %v380 = vpop.f32.mrb[0].mxu0
    %v381 = vadd.f32 %v182, %v380
    %v382 = vpop.f32.mrb[0].mxu0
    %383 = vmatprep.mubr.f32.mxu0 %v104
    %384 = vmatmul.mubr.f32.gmra.mrb[0].mxu0 %v103
    %v385 = vpop.f32.mrb[0].mxu0
    %v386 = vadd.f32 %v182, %v385
    %v387 = vpop.f32.mrb[0].mxu0
    %388 = vmatprep.mubr.f32.mxu0 %v106
    %389 = vmatmul.mubr.f32.gmra.mrb[0].mxu0 %v105
    %v390 = vpop.f32.mrb[0].mxu0
    %v391 = vadd.f32 %v182, %v390
    %v392 = vpop.f32.mrb[0].mxu0
    %393 = vmatprep.mubr.f32.mxu0 %v108
    %394 = vmatmul.mubr.f32.gmra.mrb[0].mxu0 %v107
    %v395 = vpop.f32.mrb[0].mxu0
    %v396 = vadd.f32 %v182, %v395
    %v397 = vpop.f32.mrb[0].mxu0
    %398 = vmatprep.mubr.f32.mxu0 %v110
    %399 = vmatmul.mubr.f32.gmra.mrb[0].mxu0 %v109
    %v400 = vpop.f32.mrb[0].mxu0
    %v401 = vadd.f32 %v182, %v400
    %v402 = vpop.f32.mrb[0].mxu0
    %403 = vmatprep.mubr.f32.mxu0 %v112
    %404 = vmatmul.mubr.f32.gmra.mrb[0].mxu0 %v111
    %v405 = vpop.f32.mrb[0].mxu0
    %v406 = vadd.f32 %v182, %v405
    %v407 = vpop.f32.mrb[0].mxu0
    %408 = vmatprep.mubr.f32.mxu0 %v114
    %409 = vmatmul.mubr.f32.gmra.mrb[0].mxu0 %v113
    %v410 = vpop.f32.mrb[0].mxu0
    %v411 = vadd.f32 %v182, %v410
    %v412 = vpop.f32.mrb[0].mxu0
    %413 = vmatprep.mubr.f32.mxu0 %v116
    %414 = vmatmul.mubr.f32.gmra.mrb[0].mxu0 %v115
    %v415 = vpop.f32.mrb[0].mxu0
    %v416 = vadd.f32 %v182, %v415
    %v417 = vpop.f32.mrb[0].mxu0
    %418 = vmatprep.mubr.f32.mxu0 %v118
    %419 = vmatmul.mubr.f32.gmra.mrb[0].mxu0 %v117
    %v420 = vpop.f32.mrb[0].mxu0
    %v421 = vadd.f32 %v182, %v420
    %v422 = vpop.f32.mrb[0].mxu0
    %423 = vmatprep.mubr.f32.mxu0 %v120
    %424 = vmatmul.mubr.f32.gmra.mrb[0].mxu0 %v119
    %v425 = vpop.f32.mrb[0].mxu0
    %v426 = vadd.f32 %v182, %v425
    %v427 = vpop.f32.mrb[0].mxu0
    %428 = vmatprep.mubr.f32.mxu0 %v122
    %429 = vmatmul.mubr.f32.gmra.mrb[0].mxu0 %v121
    %v430 = vpop.f32.mrb[0].mxu0
    %v431 = vadd.f32 %v182, %v430
    %v432 = vpop.f32.mrb[0].mxu0
    %433 = vmatprep.mubr.f32.mxu0 %v124
    %434 = vmatmul.mubr.f32.gmra.mrb[0].mxu0 %v123
    %v435 = vpop.f32.mrb[0].mxu0
    %v436 = vadd.f32 %v182, %v435
    %v437 = vpop.f32.mrb[0].mxu0
    %438 = vmatprep.mubr.f32.mxu0 %v126
    %439 = vmatmul.mubr.f32.gmra.mrb[0].mxu0 %v125
    %v440 = vpop.f32.mrb[0].mxu0
    %v441 = vadd.f32 %v182, %v440
    %v442 = vpop.f32.mrb[0].mxu0
    %443 = vmatprep.mubr.f32.mxu0 %v128
    %444 = vmatmul.mubr.f32.gmra.mrb[0].mxu0 %v127
    %v445 = vpop.f32.mrb[0].mxu0
    %v446 = vadd.f32 %v182, %v445
    %v447 = vpop.f32.mrb[0].mxu0
    %448 = vmatprep.mubr.f32.mxu0 %v130
    %449 = vmatmul.mubr.f32.gmra.mrb[0].mxu0 %v129
    %v450 = vpop.f32.mrb[0].mxu0
    %v451 = vadd.f32 %v182, %v450
    %v452 = vpop.f32.mrb[0].mxu0
    %453 = vmatprep.mubr.f32.mxu0 %v132
    %454 = vmatmul.mubr.f32.gmra.mrb[0].mxu0 %v131
    %v455 = vpop.f32.mrb[0].mxu0
    %v456 = vadd.f32 %v182, %v455
    %v457 = vpop.f32.mrb[0].mxu0
    %458 = vmatprep.mubr.f32.mxu0 %v134
    %459 = vmatmul.mubr.f32.gmra.mrb[0].mxu0 %v133
    %v460 = vpop.f32.mrb[0].mxu0
    %v461 = vadd.f32 %v182, %v460
    %v462 = vpop.f32.mrb[0].mxu0
    %463 = vmatprep.mubr.f32.mxu0 %v136
    %464 = vmatmul.mubr.f32.gmra.mrb[0].mxu0 %v135
    %v465 = vpop.f32.mrb[0].mxu0
    %v466 = vadd.f32 %v182, %v465
    %v467 = vpop.f32.mrb[0].mxu0
    %468 = vmatprep.mubr.f32.mxu0 %v138
    %469 = vmatmul.mubr.f32.gmra.mrb[0].mxu0 %v137
    %v470 = vpop.f32.mrb[0].mxu0
    %v471 = vadd.f32 %v182, %v470
    %v472 = vpop.f32.mrb[0].mxu0
    %473 = vmatprep.mubr.f32.mxu0 %v140
    %474 = vmatmul.mubr.f32.gmra.mrb[0].mxu0 %v139
    %v475 = vpop.f32.mrb[0].mxu0
    %v476 = vadd.f32 %v182, %v475
    %v477 = vpop.f32.mrb[0].mxu0
    %478 = vmatprep.mubr.f32.mxu0 %v142
    %479 = vmatmul.mubr.f32.gmra.mrb[0].mxu0 %v141
    %v480 = vpop.f32.mrb[0].mxu0
    %v481 = vadd.f32 %v182, %v480
    %v482 = vpop.f32.mrb[0].mxu0
    %483 = vmatprep.mubr.f32.mxu0 %v144
    %484 = vmatmul.mubr.f32.gmra.mrb[0].mxu0 %v143
    %v485 = vpop.f32.mrb[0].mxu0
    %v486 = vadd.f32 %v182, %v485
    %v487 = vpop.f32.mrb[0].mxu0
    %488 = vdwg.mxu0
    %v489 = vmax.f32 %v251, 0.0
    %v490 = vmax.f32 %v256, 0.0
    %v491 = vmax.f32 %v261, 0.0
    %v492 = vmax.f32 %v266, 0.0
    %v493 = vmax.f32 %v271, 0.0
    %v494 = vmax.f32 %v276, 0.0
    %v495 = vmax.f32 %v281, 0.0
    %v496 = vmax.f32 %v286, 0.0
    %v497 = vmax.f32 %v291, 0.0
    %v498 = vmax.f32 %v296, 0.0
    %v499 = vmax.f32 %v301, 0.0
    %v500 = vmax.f32 %v306, 0.0
    %v501 = vmax.f32 %v311, 0.0
    %v502 = vmax.f32 %v316, 0.0
    %v503 = vmax.f32 %v321, 0.0
    %v504 = vmax.f32 %v326, 0.0
    %v505 = vmax.f32 %v331, 0.0
    %v506 = vmax.f32 %v336, 0.0
    %v507 = vmax.f32 %v341, 0.0
    %v508 = vmax.f32 %v346, 0.0
    %v509 = vmax.f32 %v351, 0.0
    %v510 = vmax.f32 %v356, 0.0
    %v511 = vmax.f32 %v361, 0.0
    %v512 = vmax.f32 %v366, 0.0
    %v513 = vmax.f32 %v371, 0.0
    %v514 = vmax.f32 %v376, 0.0
    %v515 = vmax.f32 %v381, 0.0
    %v516 = vmax.f32 %v386, 0.0
    %v517 = vmax.f32 %v391, 0.0
    %v518 = vmax.f32 %v396, 0.0
    %v519 = vmax.f32 %v401, 0.0
    %v520 = vmax.f32 %v406, 0.0
    %v521 = vmax.f32 %v411, 0.0
    %v522 = vmax.f32 %v416, 0.0
    %v523 = vmax.f32 %v421, 0.0
    %v524 = vmax.f32 %v426, 0.0
    %v525 = vmax.f32 %v431, 0.0
    %v526 = vmax.f32 %v436, 0.0
    %v527 = vmax.f32 %v441, 0.0
    %v528 = vmax.f32 %v446, 0.0
    %v529 = vmax.f32 %v451, 0.0
    %v530 = vmax.f32 %v456, 0.0
    %v531 = vmax.f32 %v461, 0.0
    %v532 = vmax.f32 %v466, 0.0
    %v533 = vmax.f32 %v471, 0.0
    %v534 = vmax.f32 %v476, 0.0
    %v535 = vmax.f32 %v481, 0.0
    %v536 = vmax.f32 %v486, 0.0
    %v537 = vld [vmem:[%s3] sm:$0x1]
    %v539 = vlaneseq
    %v540 = vshrl.u32 %v539, 7
    %v541 = vsub.s32 0, %v540
    %v542 = vrot.slane %v537, %v541
    %v544 = vmul.f32 %v489, %v542
    %v545 = vmul.f32 %v490, %v542
    %v546 = vmul.f32 %v491, %v542
    %v547 = vmul.f32 %v492, %v542
    %v548 = vmul.f32 %v493, %v542
    %v549 = vmul.f32 %v494, %v542
    %v550 = vmul.f32 %v495, %v542
    %v551 = vmul.f32 %v496, %v542
    %v552 = vmul.f32 %v497, %v542
    %v553 = vmul.f32 %v498, %v542
    %v554 = vmul.f32 %v499, %v542
    %v555 = vmul.f32 %v500, %v542
    %v556 = vmul.f32 %v501, %v542
    %v557 = vmul.f32 %v502, %v542
    %v558 = vmul.f32 %v503, %v542
    %v559 = vmul.f32 %v504, %v542
    %v560 = vmul.f32 %v505, %v542
    %v561 = vmul.f32 %v506, %v542
    %v562 = vmul.f32 %v507, %v542
    %v563 = vmul.f32 %v508, %v542
    %v564 = vmul.f32 %v509, %v542
    %v565 = vmul.f32 %v510, %v542
    %v566 = vmul.f32 %v511, %v542
    %v567 = vmul.f32 %v512, %v542
    %v568 = vmul.f32 %v513, %v542
    %v569 = vmul.f32 %v514, %v542
    %v570 = vmul.f32 %v515, %v542
    %v571 = vmul.f32 %v516, %v542
    %v572 = vmul.f32 %v517, %v542
    %v573 = vmul.f32 %v518, %v542
    %v574 = vmul.f32 %v519, %v542
    %v575 = vmul.f32 %v520, %v542
    %v576 = vmul.f32 %v521, %v542
    %v577 = vmul.f32 %v522, %v542
    %v578 = vmul.f32 %v523, %v542
    %v579 = vmul.f32 %v524, %v542
    %v580 = vmul.f32 %v525, %v542
    %v581 = vmul.f32 %v526, %v542
    %v582 = vmul.f32 %v527, %v542
    %v583 = vmul.f32 %v528, %v542
    %v584 = vmul.f32 %v529, %v542
    %v585 = vmul.f32 %v530, %v542
    %v586 = vmul.f32 %v531, %v542
    %v587 = vmul.f32 %v532, %v542
    %v588 = vmul.f32 %v533, %v542
    %v589 = vmul.f32 %v534, %v542
    %v590 = vmul.f32 %v535, %v542
    %v591 = vmul.f32 %v536, %v542
    %592 = vadd.xlane.f32.xlu0 %v544
    %v593 = vpop.xlane.xlu0 %592
    %594 = vadd.xlane.f32.xlu0 %v545
    %v595 = vpop.xlane.xlu0 %594
    %596 = vadd.xlane.f32.xlu0 %v546
    %v597 = vpop.xlane.xlu0 %596
    %598 = vadd.xlane.f32.xlu0 %v547
    %v599 = vpop.xlane.xlu0 %598
    %600 = vadd.xlane.f32.xlu0 %v548
    %v601 = vpop.xlane.xlu0 %600
    %602 = vadd.xlane.f32.xlu0 %v549
    %v603 = vpop.xlane.xlu0 %602
    %604 = vadd.xlane.f32.xlu0 %v550
    %v605 = vpop.xlane.xlu0 %604
    %606 = vadd.xlane.f32.xlu0 %v551
    %v607 = vpop.xlane.xlu0 %606
    %608 = vadd.xlane.f32.xlu0 %v552
    %v609 = vpop.xlane.xlu0 %608
    %610 = vadd.xlane.f32.xlu0 %v553
    %v611 = vpop.xlane.xlu0 %610
    %612 = vadd.xlane.f32.xlu0 %v554
    %v613 = vpop.xlane.xlu0 %612
    %614 = vadd.xlane.f32.xlu0 %v555
    %v615 = vpop.xlane.xlu0 %614
    %616 = vadd.xlane.f32.xlu0 %v556
    %v617 = vpop.xlane.xlu0 %616
    %618 = vadd.xlane.f32.xlu0 %v557
    %v619 = vpop.xlane.xlu0 %618
    %620 = vadd.xlane.f32.xlu0 %v558
    %v621 = vpop.xlane.xlu0 %620
    %622 = vadd.xlane.f32.xlu0 %v559
    %v623 = vpop.xlane.xlu0 %622
    %624 = vadd.xlane.f32.xlu0 %v560
    %v625 = vpop.xlane.xlu0 %624
    %626 = vadd.xlane.f32.xlu0 %v561
    %v627 = vpop.xlane.xlu0 %626
    %628 = vadd.xlane.f32.xlu0 %v562
    %v629 = vpop.xlane.xlu0 %628
    %630 = vadd.xlane.f32.xlu0 %v563
    %v631 = vpop.xlane.xlu0 %630
    %632 = vadd.xlane.f32.xlu0 %v564
    %v633 = vpop.xlane.xlu0 %632
    %634 = vadd.xlane.f32.xlu0 %v565
    %v635 = vpop.xlane.xlu0 %634
    %636 = vadd.xlane.f32.xlu0 %v566
    %v637 = vpop.xlane.xlu0 %636
    %638 = vadd.xlane.f32.xlu0 %v567
    %v639 = vpop.xlane.xlu0 %638
    %640 = vadd.xlane.f32.xlu0 %v568
    %v641 = vpop.xlane.xlu0 %640
    %642 = vadd.xlane.f32.xlu0 %v569
    %v643 = vpop.xlane.xlu0 %642
    %644 = vadd.xlane.f32.xlu0 %v570
    %v645 = vpop.xlane.xlu0 %644
    %646 = vadd.xlane.f32.xlu0 %v571
    %v647 = vpop.xlane.xlu0 %646
    %648 = vadd.xlane.f32.xlu0 %v572
    %v649 = vpop.xlane.xlu0 %648
    %650 = vadd.xlane.f32.xlu0 %v573
    %v651 = vpop.xlane.xlu0 %650
    %652 = vadd.xlane.f32.xlu0 %v574
    %v653 = vpop.xlane.xlu0 %652
    %654 = vadd.xlane.f32.xlu0 %v575
    %v655 = vpop.xlane.xlu0 %654
    %656 = vadd.xlane.f32.xlu0 %v576
    %v657 = vpop.xlane.xlu0 %656
    %658 = vadd.xlane.f32.xlu0 %v577
    %v659 = vpop.xlane.xlu0 %658
    %660 = vadd.xlane.f32.xlu0 %v578
    %v661 = vpop.xlane.xlu0 %660
    %662 = vadd.xlane.f32.xlu0 %v579
    %v663 = vpop.xlane.xlu0 %662
    %664 = vadd.xlane.f32.xlu0 %v580
    %v665 = vpop.xlane.xlu0 %664
    %666 = vadd.xlane.f32.xlu0 %v581
    %v667 = vpop.xlane.xlu0 %666
    %668 = vadd.xlane.f32.xlu0 %v582
    %v669 = vpop.xlane.xlu0 %668
    %670 = vadd.xlane.f32.xlu0 %v583
    %v671 = vpop.xlane.xlu0 %670
    %672 = vadd.xlane.f32.xlu0 %v584
    %v673 = vpop.xlane.xlu0 %672
    %674 = vadd.xlane.f32.xlu0 %v585
    %v675 = vpop.xlane.xlu0 %674
    %676 = vadd.xlane.f32.xlu0 %v586
    %v677 = vpop.xlane.xlu0 %676
    %678 = vadd.xlane.f32.xlu0 %v587
    %v679 = vpop.xlane.xlu0 %678
    %680 = vadd.xlane.f32.xlu0 %v588
    %v681 = vpop.xlane.xlu0 %680
    %682 = vadd.xlane.f32.xlu0 %v589
    %v683 = vpop.xlane.xlu0 %682
    %684 = vadd.xlane.f32.xlu0 %v590
    %v685 = vpop.xlane.xlu0 %684
    %686 = vadd.xlane.f32.xlu0 %v591
    %v687 = vpop.xlane.xlu0 %686
    %s688 = sld [smem:[#allocation2]]
    %v689 = vstv %s688
    %v690 = vadd.f32 %v593, %v689
    %v691 = vadd.f32 %v595, %v689
    %v692 = vadd.f32 %v597, %v689
    %v693 = vadd.f32 %v599, %v689
    %v694 = vadd.f32 %v601, %v689
    %v695 = vadd.f32 %v603, %v689
    %v696 = vadd.f32 %v605, %v689
    %v697 = vadd.f32 %v607, %v689
    %v698 = vadd.f32 %v609, %v689
    %v699 = vadd.f32 %v611, %v689
    %v700 = vadd.f32 %v613, %v689
    %v701 = vadd.f32 %v615, %v689
    %v702 = vadd.f32 %v617, %v689
    %v703 = vadd.f32 %v619, %v689
    %v704 = vadd.f32 %v621, %v689
    %v705 = vadd.f32 %v623, %v689
    %v706 = vadd.f32 %v625, %v689
    %v707 = vadd.f32 %v627, %v689
    %v708 = vadd.f32 %v629, %v689
    %v709 = vadd.f32 %v631, %v689
    %v710 = vadd.f32 %v633, %v689
    %v711 = vadd.f32 %v635, %v689
    %v712 = vadd.f32 %v637, %v689
    %v713 = vadd.f32 %v639, %v689
    %v714 = vadd.f32 %v641, %v689
    %v715 = vadd.f32 %v643, %v689
    %v716 = vadd.f32 %v645, %v689
    %v717 = vadd.f32 %v647, %v689
    %v718 = vadd.f32 %v649, %v689
    %v719 = vadd.f32 %v651, %v689
    %v720 = vadd.f32 %v653, %v689
    %v721 = vadd.f32 %v655, %v689
    %v722 = vadd.f32 %v657, %v689
    %v723 = vadd.f32 %v659, %v689
    %v724 = vadd.f32 %v661, %v689
    %v725 = vadd.f32 %v663, %v689
    %v726 = vadd.f32 %v665, %v689
    %v727 = vadd.f32 %v667, %v689
    %v728 = vadd.f32 %v669, %v689
    %v729 = vadd.f32 %v671, %v689
    %v730 = vadd.f32 %v673, %v689
    %v731 = vadd.f32 %v675, %v689
    %v732 = vadd.f32 %v677, %v689
    %v733 = vadd.f32 %v679, %v689
    %v734 = vadd.f32 %v681, %v689
    %v735 = vadd.f32 %v683, %v689
    %v736 = vadd.f32 %v685, %v689
    %v737 = vadd.f32 %v687, %v689
    %v738 = vxor.u32 %v690, 2147483648
    %v739 = vxor.u32 %v691, 2147483648
    %v740 = vxor.u32 %v692, 2147483648
    %v741 = vxor.u32 %v693, 2147483648
    %v742 = vxor.u32 %v694, 2147483648
    %v743 = vxor.u32 %v695, 2147483648
    %v744 = vxor.u32 %v696, 2147483648
    %v745 = vxor.u32 %v697, 2147483648
    %v746 = vxor.u32 %v698, 2147483648
    %v747 = vxor.u32 %v699, 2147483648
    %v748 = vxor.u32 %v700, 2147483648
    %v749 = vxor.u32 %v701, 2147483648
    %v750 = vxor.u32 %v702, 2147483648
    %v751 = vxor.u32 %v703, 2147483648
    %v752 = vxor.u32 %v704, 2147483648
    %v753 = vxor.u32 %v705, 2147483648
    %v754 = vxor.u32 %v706, 2147483648
    %v755 = vxor.u32 %v707, 2147483648
    %v756 = vxor.u32 %v708, 2147483648
    %v757 = vxor.u32 %v709, 2147483648
    %v758 = vxor.u32 %v710, 2147483648
    %v759 = vxor.u32 %v711, 2147483648
    %v760 = vxor.u32 %v712, 2147483648
    %v761 = vxor.u32 %v713, 2147483648
    %v762 = vxor.u32 %v714, 2147483648
    %v763 = vxor.u32 %v715, 2147483648
    %v764 = vxor.u32 %v716, 2147483648
    %v765 = vxor.u32 %v717, 2147483648
    %v766 = vxor.u32 %v718, 2147483648
    %v767 = vxor.u32 %v719, 2147483648
    %v768 = vxor.u32 %v720, 2147483648
    %v769 = vxor.u32 %v721, 2147483648
    %v770 = vxor.u32 %v722, 2147483648
    %v771 = vxor.u32 %v723, 2147483648
    %v772 = vxor.u32 %v724, 2147483648
    %v773 = vxor.u32 %v725, 2147483648
    %v774 = vxor.u32 %v726, 2147483648
    %v775 = vxor.u32 %v727, 2147483648
    %v776 = vxor.u32 %v728, 2147483648
    %v777 = vxor.u32 %v729, 2147483648
    %v778 = vxor.u32 %v730, 2147483648
    %v779 = vxor.u32 %v731, 2147483648
    %v780 = vxor.u32 %v732, 2147483648
    %v781 = vxor.u32 %v733, 2147483648
    %v782 = vxor.u32 %v734, 2147483648
    %v783 = vxor.u32 %v735, 2147483648
    %v784 = vxor.u32 %v736, 2147483648
    %v785 = vxor.u32 %v737, 2147483648
    %v786 = vmul.f32 %v738, 1.442695
    %v787 = vpow.pop %v786
    %v788 = vmul.f32 %v739, 1.442695
    %v789 = vpow.pop %v788
    %v790 = vmul.f32 %v740, 1.442695
    %v791 = vpow.pop %v790
    %v792 = vmul.f32 %v741, 1.442695
    %v793 = vpow.pop %v792
    %v794 = vmul.f32 %v742, 1.442695
    %v795 = vpow.pop %v794
    %v796 = vmul.f32 %v743, 1.442695
    %v797 = vpow.pop %v796
    %v798 = vmul.f32 %v744, 1.442695
    %v799 = vpow.pop %v798
    %v800 = vmul.f32 %v745, 1.442695
    %v801 = vpow.pop %v800
    %v802 = vmul.f32 %v746, 1.442695
    %v803 = vpow.pop %v802
    %v804 = vmul.f32 %v747, 1.442695
    %v805 = vpow.pop %v804
    %v806 = vmul.f32 %v748, 1.442695
    %v807 = vpow.pop %v806
    %v808 = vmul.f32 %v749, 1.442695
    %v809 = vpow.pop %v808
    %v810 = vmul.f32 %v750, 1.442695
    %v811 = vpow.pop %v810
    %v812 = vmul.f32 %v751, 1.442695
    %v813 = vpow.pop %v812
    %v814 = vmul.f32 %v752, 1.442695
    %v815 = vpow.pop %v814
    %v816 = vmul.f32 %v753, 1.442695
    %v817 = vpow.pop %v816
    %v818 = vmul.f32 %v754, 1.442695
    %v819 = vpow.pop %v818
    %v820 = vmul.f32 %v755, 1.442695
    %v821 = vpow.pop %v820
    %v822 = vmul.f32 %v756, 1.442695
    %v823 = vpow.pop %v822
    %v824 = vmul.f32 %v757, 1.442695
    %v825 = vpow.pop %v824
    %v826 = vmul.f32 %v758, 1.442695
    %v827 = vpow.pop %v826
    %v828 = vmul.f32 %v759, 1.442695
    %v829 = vpow.pop %v828
    %v830 = vmul.f32 %v760, 1.442695
    %v831 = vpow.pop %v830
    %v832 = vmul.f32 %v761, 1.442695
    %v833 = vpow.pop %v832
    %v834 = vmul.f32 %v762, 1.442695
    %v835 = vpow.pop %v834
    %v836 = vmul.f32 %v763, 1.442695
    %v837 = vpow.pop %v836
    %v838 = vmul.f32 %v764, 1.442695
    %v839 = vpow.pop %v838
    %v840 = vmul.f32 %v765, 1.442695
    %v841 = vpow.pop %v840
    %v842 = vmul.f32 %v766, 1.442695
    %v843 = vpow.pop %v842
    %v844 = vmul.f32 %v767, 1.442695
    %v845 = vpow.pop %v844
    %v846 = vmul.f32 %v768, 1.442695
    %v847 = vpow.pop %v846
    %v848 = vmul.f32 %v769, 1.442695
    %v849 = vpow.pop %v848
    %v850 = vmul.f32 %v770, 1.442695
    %v851 = vpow.pop %v850
    %v852 = vmul.f32 %v771, 1.442695
    %v853 = vpow.pop %v852
    %v854 = vmul.f32 %v772, 1.442695
    %v855 = vpow.pop %v854
    %v856 = vmul.f32 %v773, 1.442695
    %v857 = vpow.pop %v856
    %v858 = vmul.f32 %v774, 1.442695
    %v859 = vpow.pop %v858
    %v860 = vmul.f32 %v775, 1.442695
    %v861 = vpow.pop %v860
    %v862 = vmul.f32 %v776, 1.442695
    %v863 = vpow.pop %v862
    %v864 = vmul.f32 %v777, 1.442695
    %v865 = vpow.pop %v864
    %v866 = vmul.f32 %v778, 1.442695
    %v867 = vpow.pop %v866
    %v868 = vmul.f32 %v779, 1.442695
    %v869 = vpow.pop %v868
    %v870 = vmul.f32 %v780, 1.442695
    %v871 = vpow.pop %v870
    %v872 = vmul.f32 %v781, 1.442695
    %v873 = vpow.pop %v872
    %v874 = vmul.f32 %v782, 1.442695
    %v875 = vpow.pop %v874
    %v876 = vmul.f32 %v783, 1.442695
    %v877 = vpow.pop %v876
    %v878 = vmul.f32 %v784, 1.442695
    %v879 = vpow.pop %v878
    %v880 = vmul.f32 %v785, 1.442695
    %v881 = vpow.pop %v880
    %v882 = vadd.f32 %v787, 1.0
    %v883 = vadd.f32 %v789, 1.0
    %v884 = vadd.f32 %v791, 1.0
    %v885 = vadd.f32 %v793, 1.0
    %v886 = vadd.f32 %v795, 1.0
    %v887 = vadd.f32 %v797, 1.0
    %v888 = vadd.f32 %v799, 1.0
    %v889 = vadd.f32 %v801, 1.0
    %v890 = vadd.f32 %v803, 1.0
    %v891 = vadd.f32 %v805, 1.0
    %v892 = vadd.f32 %v807, 1.0
    %v893 = vadd.f32 %v809, 1.0
    %v894 = vadd.f32 %v811, 1.0
    %v895 = vadd.f32 %v813, 1.0
    %v896 = vadd.f32 %v815, 1.0
    %v897 = vadd.f32 %v817, 1.0
    %v898 = vadd.f32 %v819, 1.0
    %v899 = vadd.f32 %v821, 1.0
    %v900 = vadd.f32 %v823, 1.0
    %v901 = vadd.f32 %v825, 1.0
    %v902 = vadd.f32 %v827, 1.0
    %v903 = vadd.f32 %v829, 1.0
    %v904 = vadd.f32 %v831, 1.0
    %v905 = vadd.f32 %v833, 1.0
    %v906 = vadd.f32 %v835, 1.0
    %v907 = vadd.f32 %v837, 1.0
    %v908 = vadd.f32 %v839, 1.0
    %v909 = vadd.f32 %v841, 1.0
    %v910 = vadd.f32 %v843, 1.0
    %v911 = vadd.f32 %v845, 1.0
    %v912 = vadd.f32 %v847, 1.0
    %v913 = vadd.f32 %v849, 1.0
    %v914 = vadd.f32 %v851, 1.0
    %v915 = vadd.f32 %v853, 1.0
    %v916 = vadd.f32 %v855, 1.0
    %v917 = vadd.f32 %v857, 1.0
    %v918 = vadd.f32 %v859, 1.0
    %v919 = vadd.f32 %v861, 1.0
    %v920 = vadd.f32 %v863, 1.0
    %v921 = vadd.f32 %v865, 1.0
    %v922 = vadd.f32 %v867, 1.0
    %v923 = vadd.f32 %v869, 1.0
    %v924 = vadd.f32 %v871, 1.0
    %v925 = vadd.f32 %v873, 1.0
    %v926 = vadd.f32 %v875, 1.0
    %v927 = vadd.f32 %v877, 1.0
    %v928 = vadd.f32 %v879, 1.0
    %v929 = vadd.f32 %v881, 1.0
    %v930 = vrcp.pop %v882
    %v931 = vmul.f32 1.0, %v930
    %v932 = vrcp.pop %v883
    %v933 = vmul.f32 1.0, %v932
    %v934 = vrcp.pop %v884
    %v935 = vmul.f32 1.0, %v934
    %v936 = vrcp.pop %v885
    %v937 = vmul.f32 1.0, %v936
    %v938 = vrcp.pop %v886
    %v939 = vmul.f32 1.0, %v938
    %v940 = vrcp.pop %v887
    %v941 = vmul.f32 1.0, %v940
    %v942 = vrcp.pop %v888
    %v943 = vmul.f32 1.0, %v942
    %v944 = vrcp.pop %v889
    %v945 = vmul.f32 1.0, %v944
    %v946 = vrcp.pop %v890
    %v947 = vmul.f32 1.0, %v946
    %v948 = vrcp.pop %v891
    %v949 = vmul.f32 1.0, %v948
    %v950 = vrcp.pop %v892
    %v951 = vmul.f32 1.0, %v950
    %v952 = vrcp.pop %v893
    %v953 = vmul.f32 1.0, %v952
    %v954 = vrcp.pop %v894
    %v955 = vmul.f32 1.0, %v954
    %v956 = vrcp.pop %v895
    %v957 = vmul.f32 1.0, %v956
    %v958 = vrcp.pop %v896
    %v959 = vmul.f32 1.0, %v958
    %v960 = vrcp.pop %v897
    %v961 = vmul.f32 1.0, %v960
    %v962 = vrcp.pop %v898
    %v963 = vmul.f32 1.0, %v962
    %v964 = vrcp.pop %v899
    %v965 = vmul.f32 1.0, %v964
    %v966 = vrcp.pop %v900
    %v967 = vmul.f32 1.0, %v966
    %v968 = vrcp.pop %v901
    %v969 = vmul.f32 1.0, %v968
    %v970 = vrcp.pop %v902
    %v971 = vmul.f32 1.0, %v970
    %v972 = vrcp.pop %v903
    %v973 = vmul.f32 1.0, %v972
    %v974 = vrcp.pop %v904
    %v975 = vmul.f32 1.0, %v974
    %v976 = vrcp.pop %v905
    %v977 = vmul.f32 1.0, %v976
    %v978 = vrcp.pop %v906
    %v979 = vmul.f32 1.0, %v978
    %v980 = vrcp.pop %v907
    %v981 = vmul.f32 1.0, %v980
    %v982 = vrcp.pop %v908
    %v983 = vmul.f32 1.0, %v982
    %v984 = vrcp.pop %v909
    %v985 = vmul.f32 1.0, %v984
    %v986 = vrcp.pop %v910
    %v987 = vmul.f32 1.0, %v986
    %v988 = vrcp.pop %v911
    %v989 = vmul.f32 1.0, %v988
    %v990 = vrcp.pop %v912
    %v991 = vmul.f32 1.0, %v990
    %v992 = vrcp.pop %v913
    %v993 = vmul.f32 1.0, %v992
    %v994 = vrcp.pop %v914
    %v995 = vmul.f32 1.0, %v994
    %v996 = vrcp.pop %v915
    %v997 = vmul.f32 1.0, %v996
    %v998 = vrcp.pop %v916
    %v999 = vmul.f32 1.0, %v998
    %v1000 = vrcp.pop %v917
    %v1001 = vmul.f32 1.0, %v1000
    %v1002 = vrcp.pop %v918
    %v1003 = vmul.f32 1.0, %v1002
    %v1004 = vrcp.pop %v919
    %v1005 = vmul.f32 1.0, %v1004
    %v1006 = vrcp.pop %v920
    %v1007 = vmul.f32 1.0, %v1006
    %v1008 = vrcp.pop %v921
    %v1009 = vmul.f32 1.0, %v1008
    %v1010 = vrcp.pop %v922
    %v1011 = vmul.f32 1.0, %v1010
    %v1012 = vrcp.pop %v923
    %v1013 = vmul.f32 1.0, %v1012
    %v1014 = vrcp.pop %v924
    %v1015 = vmul.f32 1.0, %v1014
    %v1016 = vrcp.pop %v925
    %v1017 = vmul.f32 1.0, %v1016
    %v1018 = vrcp.pop %v926
    %v1019 = vmul.f32 1.0, %v1018
    %v1020 = vrcp.pop %v927
    %v1021 = vmul.f32 1.0, %v1020
    %v1022 = vrcp.pop %v928
    %v1023 = vmul.f32 1.0, %v1022
    %v1024 = vrcp.pop %v929
    %v1025 = vmul.f32 1.0, %v1024
    %v1074 = vlaneseq
    %v1075 = vshrl.u32 %v1074, 7
    %v1076 = vsub.s32 0, %v1075
    %v1077 = vrot.slane %v931, %v1076
    %v1078 = vlaneseq
    %v1079 = vshrl.u32 %v1078, 7
    %v1080 = vsub.s32 1, %v1079
    %v1081 = vrot.slane %v931, %v1080
    %v1082 = vlaneseq
    %v1083 = vshrl.u32 %v1082, 7
    %v1084 = vsub.s32 2, %v1083
    %v1085 = vrot.slane %v931, %v1084
    %v1086 = vlaneseq
    %v1087 = vshrl.u32 %v1086, 7
    %v1088 = vsub.s32 3, %v1087
    %v1089 = vrot.slane %v931, %v1088
    %v1090 = vlaneseq
    %v1091 = vshrl.u32 %v1090, 7
    %v1092 = vsub.s32 4, %v1091
    %v1093 = vrot.slane %v931, %v1092
    %v1094 = vlaneseq
    %v1095 = vshrl.u32 %v1094, 7
    %v1096 = vsub.s32 5, %v1095
    %v1097 = vrot.slane %v931, %v1096
    %v1098 = vlaneseq
    %v1099 = vshrl.u32 %v1098, 7
    %v1100 = vsub.s32 6, %v1099
    %v1101 = vrot.slane %v931, %v1100
    %v1102 = vlaneseq
    %v1103 = vshrl.u32 %v1102, 7
    %v1104 = vsub.s32 7, %v1103
    %v1105 = vrot.slane %v931, %v1104
    %v1106 = vlaneseq
    %v1107 = vshrl.u32 %v1106, 7
    %v1108 = vsub.s32 0, %v1107
    %v1109 = vrot.slane %v933, %v1108
    %v1110 = vlaneseq
    %v1111 = vshrl.u32 %v1110, 7
    %v1112 = vsub.s32 1, %v1111
    %v1113 = vrot.slane %v933, %v1112
    %v1114 = vlaneseq
    %v1115 = vshrl.u32 %v1114, 7
    %v1116 = vsub.s32 2, %v1115
    %v1117 = vrot.slane %v933, %v1116
    %v1118 = vlaneseq
    %v1119 = vshrl.u32 %v1118, 7
    %v1120 = vsub.s32 3, %v1119
    %v1121 = vrot.slane %v933, %v1120
    %v1122 = vlaneseq
    %v1123 = vshrl.u32 %v1122, 7
    %v1124 = vsub.s32 4, %v1123
    %v1125 = vrot.slane %v933, %v1124
    %v1126 = vlaneseq
    %v1127 = vshrl.u32 %v1126, 7
    %v1128 = vsub.s32 5, %v1127
    %v1129 = vrot.slane %v933, %v1128
    %v1130 = vlaneseq
    %v1131 = vshrl.u32 %v1130, 7
    %v1132 = vsub.s32 6, %v1131
    %v1133 = vrot.slane %v933, %v1132
    %v1134 = vlaneseq
    %v1135 = vshrl.u32 %v1134, 7
    %v1136 = vsub.s32 7, %v1135
    %v1137 = vrot.slane %v933, %v1136
    %v1138 = vlaneseq
    %v1139 = vshrl.u32 %v1138, 7
    %v1140 = vsub.s32 0, %v1139
    %v1141 = vrot.slane %v935, %v1140
    %v1142 = vlaneseq
    %v1143 = vshrl.u32 %v1142, 7
    %v1144 = vsub.s32 1, %v1143
    %v1145 = vrot.slane %v935, %v1144
    %v1146 = vlaneseq
    %v1147 = vshrl.u32 %v1146, 7
    %v1148 = vsub.s32 2, %v1147
    %v1149 = vrot.slane %v935, %v1148
    %v1150 = vlaneseq
    %v1151 = vshrl.u32 %v1150, 7
    %v1152 = vsub.s32 3, %v1151
    %v1153 = vrot.slane %v935, %v1152
    %v1154 = vlaneseq
    %v1155 = vshrl.u32 %v1154, 7
    %v1156 = vsub.s32 4, %v1155
    %v1157 = vrot.slane %v935, %v1156
    %v1158 = vlaneseq
    %v1159 = vshrl.u32 %v1158, 7
    %v1160 = vsub.s32 5, %v1159
    %v1161 = vrot.slane %v935, %v1160
    %v1162 = vlaneseq
    %v1163 = vshrl.u32 %v1162, 7
    %v1164 = vsub.s32 6, %v1163
    %v1165 = vrot.slane %v935, %v1164
    %v1166 = vlaneseq
    %v1167 = vshrl.u32 %v1166, 7
    %v1168 = vsub.s32 7, %v1167
    %v1169 = vrot.slane %v935, %v1168
    %v1170 = vlaneseq
    %v1171 = vshrl.u32 %v1170, 7
    %v1172 = vsub.s32 0, %v1171
    %v1173 = vrot.slane %v937, %v1172
    %v1174 = vlaneseq
    %v1175 = vshrl.u32 %v1174, 7
    %v1176 = vsub.s32 1, %v1175
    %v1177 = vrot.slane %v937, %v1176
    %v1178 = vlaneseq
    %v1179 = vshrl.u32 %v1178, 7
    %v1180 = vsub.s32 2, %v1179
    %v1181 = vrot.slane %v937, %v1180
    %v1182 = vlaneseq
    %v1183 = vshrl.u32 %v1182, 7
    %v1184 = vsub.s32 3, %v1183
    %v1185 = vrot.slane %v937, %v1184
    %v1186 = vlaneseq
    %v1187 = vshrl.u32 %v1186, 7
    %v1188 = vsub.s32 4, %v1187
    %v1189 = vrot.slane %v937, %v1188
    %v1190 = vlaneseq
    %v1191 = vshrl.u32 %v1190, 7
    %v1192 = vsub.s32 5, %v1191
    %v1193 = vrot.slane %v937, %v1192
    %v1194 = vlaneseq
    %v1195 = vshrl.u32 %v1194, 7
    %v1196 = vsub.s32 6, %v1195
    %v1197 = vrot.slane %v937, %v1196
    %v1198 = vlaneseq
    %v1199 = vshrl.u32 %v1198, 7
    %v1200 = vsub.s32 7, %v1199
    %v1201 = vrot.slane %v937, %v1200
    %v1202 = vlaneseq
    %v1203 = vshrl.u32 %v1202, 7
    %v1204 = vsub.s32 0, %v1203
    %v1205 = vrot.slane %v939, %v1204
    %v1206 = vlaneseq
    %v1207 = vshrl.u32 %v1206, 7
    %v1208 = vsub.s32 1, %v1207
    %v1209 = vrot.slane %v939, %v1208
    %v1210 = vlaneseq
    %v1211 = vshrl.u32 %v1210, 7
    %v1212 = vsub.s32 2, %v1211
    %v1213 = vrot.slane %v939, %v1212
    %v1214 = vlaneseq
    %v1215 = vshrl.u32 %v1214, 7
    %v1216 = vsub.s32 3, %v1215
    %v1217 = vrot.slane %v939, %v1216
    %v1218 = vlaneseq
    %v1219 = vshrl.u32 %v1218, 7
    %v1220 = vsub.s32 4, %v1219
    %v1221 = vrot.slane %v939, %v1220
    %v1222 = vlaneseq
    %v1223 = vshrl.u32 %v1222, 7
    %v1224 = vsub.s32 5, %v1223
    %v1225 = vrot.slane %v939, %v1224
    %v1226 = vlaneseq
    %v1227 = vshrl.u32 %v1226, 7
    %v1228 = vsub.s32 6, %v1227
    %v1229 = vrot.slane %v939, %v1228
    %v1230 = vlaneseq
    %v1231 = vshrl.u32 %v1230, 7
    %v1232 = vsub.s32 7, %v1231
    %v1233 = vrot.slane %v939, %v1232
    %v1234 = vlaneseq
    %v1235 = vshrl.u32 %v1234, 7
    %v1236 = vsub.s32 0, %v1235
    %v1237 = vrot.slane %v941, %v1236
    %v1238 = vlaneseq
    %v1239 = vshrl.u32 %v1238, 7
    %v1240 = vsub.s32 1, %v1239
    %v1241 = vrot.slane %v941, %v1240
    %v1242 = vlaneseq
    %v1243 = vshrl.u32 %v1242, 7
    %v1244 = vsub.s32 2, %v1243
    %v1245 = vrot.slane %v941, %v1244
    %v1246 = vlaneseq
    %v1247 = vshrl.u32 %v1246, 7
    %v1248 = vsub.s32 3, %v1247
    %v1249 = vrot.slane %v941, %v1248
    %v1250 = vlaneseq
    %v1251 = vshrl.u32 %v1250, 7
    %v1252 = vsub.s32 4, %v1251
    %v1253 = vrot.slane %v941, %v1252
    %v1254 = vlaneseq
    %v1255 = vshrl.u32 %v1254, 7
    %v1256 = vsub.s32 5, %v1255
    %v1257 = vrot.slane %v941, %v1256
    %v1258 = vlaneseq
    %v1259 = vshrl.u32 %v1258, 7
    %v1260 = vsub.s32 6, %v1259
    %v1261 = vrot.slane %v941, %v1260
    %v1262 = vlaneseq
    %v1263 = vshrl.u32 %v1262, 7
    %v1264 = vsub.s32 7, %v1263
    %v1265 = vrot.slane %v941, %v1264
    %v1266 = vlaneseq
    %v1267 = vshrl.u32 %v1266, 7
    %v1268 = vsub.s32 0, %v1267
    %v1269 = vrot.slane %v943, %v1268
    %v1270 = vlaneseq
    %v1271 = vshrl.u32 %v1270, 7
    %v1272 = vsub.s32 1, %v1271
    %v1273 = vrot.slane %v943, %v1272
    %v1274 = vlaneseq
    %v1275 = vshrl.u32 %v1274, 7
    %v1276 = vsub.s32 2, %v1275
    %v1277 = vrot.slane %v943, %v1276
    %v1278 = vlaneseq
    %v1279 = vshrl.u32 %v1278, 7
    %v1280 = vsub.s32 3, %v1279
    %v1281 = vrot.slane %v943, %v1280
    %v1282 = vlaneseq
    %v1283 = vshrl.u32 %v1282, 7
    %v1284 = vsub.s32 4, %v1283
    %v1285 = vrot.slane %v943, %v1284
    %v1286 = vlaneseq
    %v1287 = vshrl.u32 %v1286, 7
    %v1288 = vsub.s32 5, %v1287
    %v1289 = vrot.slane %v943, %v1288
    %v1290 = vlaneseq
    %v1291 = vshrl.u32 %v1290, 7
    %v1292 = vsub.s32 6, %v1291
    %v1293 = vrot.slane %v943, %v1292
    %v1294 = vlaneseq
    %v1295 = vshrl.u32 %v1294, 7
    %v1296 = vsub.s32 7, %v1295
    %v1297 = vrot.slane %v943, %v1296
    %v1298 = vlaneseq
    %v1299 = vshrl.u32 %v1298, 7
    %v1300 = vsub.s32 0, %v1299
    %v1301 = vrot.slane %v945, %v1300
    %v1302 = vlaneseq
    %v1303 = vshrl.u32 %v1302, 7
    %v1304 = vsub.s32 1, %v1303
    %v1305 = vrot.slane %v945, %v1304
    %v1306 = vlaneseq
    %v1307 = vshrl.u32 %v1306, 7
    %v1308 = vsub.s32 2, %v1307
    %v1309 = vrot.slane %v945, %v1308
    %v1310 = vlaneseq
    %v1311 = vshrl.u32 %v1310, 7
    %v1312 = vsub.s32 3, %v1311
    %v1313 = vrot.slane %v945, %v1312
    %v1314 = vlaneseq
    %v1315 = vshrl.u32 %v1314, 7
    %v1316 = vsub.s32 4, %v1315
    %v1317 = vrot.slane %v945, %v1316
    %v1318 = vlaneseq
    %v1319 = vshrl.u32 %v1318, 7
    %v1320 = vsub.s32 5, %v1319
    %v1321 = vrot.slane %v945, %v1320
    %v1322 = vlaneseq
    %v1323 = vshrl.u32 %v1322, 7
    %v1324 = vsub.s32 6, %v1323
    %v1325 = vrot.slane %v945, %v1324
    %v1326 = vlaneseq
    %v1327 = vshrl.u32 %v1326, 7
    %v1328 = vsub.s32 7, %v1327
    %v1329 = vrot.slane %v945, %v1328
    %v1330 = vlaneseq
    %v1331 = vshrl.u32 %v1330, 7
    %v1332 = vsub.s32 0, %v1331
    %v1333 = vrot.slane %v947, %v1332
    %v1334 = vlaneseq
    %v1335 = vshrl.u32 %v1334, 7
    %v1336 = vsub.s32 1, %v1335
    %v1337 = vrot.slane %v947, %v1336
    %v1338 = vlaneseq
    %v1339 = vshrl.u32 %v1338, 7
    %v1340 = vsub.s32 2, %v1339
    %v1341 = vrot.slane %v947, %v1340
    %v1342 = vlaneseq
    %v1343 = vshrl.u32 %v1342, 7
    %v1344 = vsub.s32 3, %v1343
    %v1345 = vrot.slane %v947, %v1344
    %v1346 = vlaneseq
    %v1347 = vshrl.u32 %v1346, 7
    %v1348 = vsub.s32 4, %v1347
    %v1349 = vrot.slane %v947, %v1348
    %v1350 = vlaneseq
    %v1351 = vshrl.u32 %v1350, 7
    %v1352 = vsub.s32 5, %v1351
    %v1353 = vrot.slane %v947, %v1352
    %v1354 = vlaneseq
    %v1355 = vshrl.u32 %v1354, 7
    %v1356 = vsub.s32 6, %v1355
    %v1357 = vrot.slane %v947, %v1356
    %v1358 = vlaneseq
    %v1359 = vshrl.u32 %v1358, 7
    %v1360 = vsub.s32 7, %v1359
    %v1361 = vrot.slane %v947, %v1360
    %v1362 = vlaneseq
    %v1363 = vshrl.u32 %v1362, 7
    %v1364 = vsub.s32 0, %v1363
    %v1365 = vrot.slane %v949, %v1364
    %v1366 = vlaneseq
    %v1367 = vshrl.u32 %v1366, 7
    %v1368 = vsub.s32 1, %v1367
    %v1369 = vrot.slane %v949, %v1368
    %v1370 = vlaneseq
    %v1371 = vshrl.u32 %v1370, 7
    %v1372 = vsub.s32 2, %v1371
    %v1373 = vrot.slane %v949, %v1372
    %v1374 = vlaneseq
    %v1375 = vshrl.u32 %v1374, 7
    %v1376 = vsub.s32 3, %v1375
    %v1377 = vrot.slane %v949, %v1376
    %v1378 = vlaneseq
    %v1379 = vshrl.u32 %v1378, 7
    %v1380 = vsub.s32 4, %v1379
    %v1381 = vrot.slane %v949, %v1380
    %v1382 = vlaneseq
    %v1383 = vshrl.u32 %v1382, 7
    %v1384 = vsub.s32 5, %v1383
    %v1385 = vrot.slane %v949, %v1384
    %v1386 = vlaneseq
    %v1387 = vshrl.u32 %v1386, 7
    %v1388 = vsub.s32 6, %v1387
    %v1389 = vrot.slane %v949, %v1388
    %v1390 = vlaneseq
    %v1391 = vshrl.u32 %v1390, 7
    %v1392 = vsub.s32 7, %v1391
    %v1393 = vrot.slane %v949, %v1392
    %v1394 = vlaneseq
    %v1395 = vshrl.u32 %v1394, 7
    %v1396 = vsub.s32 0, %v1395
    %v1397 = vrot.slane %v951, %v1396
    %v1398 = vlaneseq
    %v1399 = vshrl.u32 %v1398, 7
    %v1400 = vsub.s32 1, %v1399
    %v1401 = vrot.slane %v951, %v1400
    %v1402 = vlaneseq
    %v1403 = vshrl.u32 %v1402, 7
    %v1404 = vsub.s32 2, %v1403
    %v1405 = vrot.slane %v951, %v1404
    %v1406 = vlaneseq
    %v1407 = vshrl.u32 %v1406, 7
    %v1408 = vsub.s32 3, %v1407
    %v1409 = vrot.slane %v951, %v1408
    %v1410 = vlaneseq
    %v1411 = vshrl.u32 %v1410, 7
    %v1412 = vsub.s32 4, %v1411
    %v1413 = vrot.slane %v951, %v1412
    %v1414 = vlaneseq
    %v1415 = vshrl.u32 %v1414, 7
    %v1416 = vsub.s32 5, %v1415
    %v1417 = vrot.slane %v951, %v1416
    %v1418 = vlaneseq
    %v1419 = vshrl.u32 %v1418, 7
    %v1420 = vsub.s32 6, %v1419
    %v1421 = vrot.slane %v951, %v1420
    %v1422 = vlaneseq
    %v1423 = vshrl.u32 %v1422, 7
    %v1424 = vsub.s32 7, %v1423
    %v1425 = vrot.slane %v951, %v1424
    %v1426 = vlaneseq
    %v1427 = vshrl.u32 %v1426, 7
    %v1428 = vsub.s32 0, %v1427
    %v1429 = vrot.slane %v953, %v1428
    %v1430 = vlaneseq
    %v1431 = vshrl.u32 %v1430, 7
    %v1432 = vsub.s32 1, %v1431
    %v1433 = vrot.slane %v953, %v1432
    %v1434 = vlaneseq
    %v1435 = vshrl.u32 %v1434, 7
    %v1436 = vsub.s32 2, %v1435
    %v1437 = vrot.slane %v953, %v1436
    %v1438 = vlaneseq
    %v1439 = vshrl.u32 %v1438, 7
    %v1440 = vsub.s32 3, %v1439
    %v1441 = vrot.slane %v953, %v1440
    %v1442 = vlaneseq
    %v1443 = vshrl.u32 %v1442, 7
    %v1444 = vsub.s32 4, %v1443
    %v1445 = vrot.slane %v953, %v1444
    %v1446 = vlaneseq
    %v1447 = vshrl.u32 %v1446, 7
    %v1448 = vsub.s32 5, %v1447
    %v1449 = vrot.slane %v953, %v1448
    %v1450 = vlaneseq
    %v1451 = vshrl.u32 %v1450, 7
    %v1452 = vsub.s32 6, %v1451
    %v1453 = vrot.slane %v953, %v1452
    %v1454 = vlaneseq
    %v1455 = vshrl.u32 %v1454, 7
    %v1456 = vsub.s32 7, %v1455
    %v1457 = vrot.slane %v953, %v1456
    %v1458 = vlaneseq
    %v1459 = vshrl.u32 %v1458, 7
    %v1460 = vsub.s32 0, %v1459
    %v1461 = vrot.slane %v955, %v1460
    %v1462 = vlaneseq
    %v1463 = vshrl.u32 %v1462, 7
    %v1464 = vsub.s32 1, %v1463
    %v1465 = vrot.slane %v955, %v1464
    %v1466 = vlaneseq
    %v1467 = vshrl.u32 %v1466, 7
    %v1468 = vsub.s32 2, %v1467
    %v1469 = vrot.slane %v955, %v1468
    %v1470 = vlaneseq
    %v1471 = vshrl.u32 %v1470, 7
    %v1472 = vsub.s32 3, %v1471
    %v1473 = vrot.slane %v955, %v1472
    %v1474 = vlaneseq
    %v1475 = vshrl.u32 %v1474, 7
    %v1476 = vsub.s32 4, %v1475
    %v1477 = vrot.slane %v955, %v1476
    %v1478 = vlaneseq
    %v1479 = vshrl.u32 %v1478, 7
    %v1480 = vsub.s32 5, %v1479
    %v1481 = vrot.slane %v955, %v1480
    %v1482 = vlaneseq
    %v1483 = vshrl.u32 %v1482, 7
    %v1484 = vsub.s32 6, %v1483
    %v1485 = vrot.slane %v955, %v1484
    %v1486 = vlaneseq
    %v1487 = vshrl.u32 %v1486, 7
    %v1488 = vsub.s32 7, %v1487
    %v1489 = vrot.slane %v955, %v1488
    %v1490 = vlaneseq
    %v1491 = vshrl.u32 %v1490, 7
    %v1492 = vsub.s32 0, %v1491
    %v1493 = vrot.slane %v957, %v1492
    %v1494 = vlaneseq
    %v1495 = vshrl.u32 %v1494, 7
    %v1496 = vsub.s32 1, %v1495
    %v1497 = vrot.slane %v957, %v1496
    %v1498 = vlaneseq
    %v1499 = vshrl.u32 %v1498, 7
    %v1500 = vsub.s32 2, %v1499
    %v1501 = vrot.slane %v957, %v1500
    %v1502 = vlaneseq
    %v1503 = vshrl.u32 %v1502, 7
    %v1504 = vsub.s32 3, %v1503
    %v1505 = vrot.slane %v957, %v1504
    %v1506 = vlaneseq
    %v1507 = vshrl.u32 %v1506, 7
    %v1508 = vsub.s32 4, %v1507
    %v1509 = vrot.slane %v957, %v1508
    %v1510 = vlaneseq
    %v1511 = vshrl.u32 %v1510, 7
    %v1512 = vsub.s32 5, %v1511
    %v1513 = vrot.slane %v957, %v1512
    %v1514 = vlaneseq
    %v1515 = vshrl.u32 %v1514, 7
    %v1516 = vsub.s32 6, %v1515
    %v1517 = vrot.slane %v957, %v1516
    %v1518 = vlaneseq
    %v1519 = vshrl.u32 %v1518, 7
    %v1520 = vsub.s32 7, %v1519
    %v1521 = vrot.slane %v957, %v1520
    %v1522 = vlaneseq
    %v1523 = vshrl.u32 %v1522, 7
    %v1524 = vsub.s32 0, %v1523
    %v1525 = vrot.slane %v959, %v1524
    %v1526 = vlaneseq
    %v1527 = vshrl.u32 %v1526, 7
    %v1528 = vsub.s32 1, %v1527
    %v1529 = vrot.slane %v959, %v1528
    %v1530 = vlaneseq
    %v1531 = vshrl.u32 %v1530, 7
    %v1532 = vsub.s32 2, %v1531
    %v1533 = vrot.slane %v959, %v1532
    %v1534 = vlaneseq
    %v1535 = vshrl.u32 %v1534, 7
    %v1536 = vsub.s32 3, %v1535
    %v1537 = vrot.slane %v959, %v1536
    %v1538 = vlaneseq
    %v1539 = vshrl.u32 %v1538, 7
    %v1540 = vsub.s32 4, %v1539
    %v1541 = vrot.slane %v959, %v1540
    %v1542 = vlaneseq
    %v1543 = vshrl.u32 %v1542, 7
    %v1544 = vsub.s32 5, %v1543
    %v1545 = vrot.slane %v959, %v1544
    %v1546 = vlaneseq
    %v1547 = vshrl.u32 %v1546, 7
    %v1548 = vsub.s32 6, %v1547
    %v1549 = vrot.slane %v959, %v1548
    %v1550 = vlaneseq
    %v1551 = vshrl.u32 %v1550, 7
    %v1552 = vsub.s32 7, %v1551
    %v1553 = vrot.slane %v959, %v1552
    %v1554 = vlaneseq
    %v1555 = vshrl.u32 %v1554, 7
    %v1556 = vsub.s32 0, %v1555
    %v1557 = vrot.slane %v961, %v1556
    %v1558 = vlaneseq
    %v1559 = vshrl.u32 %v1558, 7
    %v1560 = vsub.s32 1, %v1559
    %v1561 = vrot.slane %v961, %v1560
    %v1562 = vlaneseq
    %v1563 = vshrl.u32 %v1562, 7
    %v1564 = vsub.s32 2, %v1563
    %v1565 = vrot.slane %v961, %v1564
    %v1566 = vlaneseq
    %v1567 = vshrl.u32 %v1566, 7
    %v1568 = vsub.s32 3, %v1567
    %v1569 = vrot.slane %v961, %v1568
    %v1570 = vlaneseq
    %v1571 = vshrl.u32 %v1570, 7
    %v1572 = vsub.s32 4, %v1571
    %v1573 = vrot.slane %v961, %v1572
    %v1574 = vlaneseq
    %v1575 = vshrl.u32 %v1574, 7
    %v1576 = vsub.s32 5, %v1575
    %v1577 = vrot.slane %v961, %v1576
    %v1578 = vlaneseq
    %v1579 = vshrl.u32 %v1578, 7
    %v1580 = vsub.s32 6, %v1579
    %v1581 = vrot.slane %v961, %v1580
    %v1582 = vlaneseq
    %v1583 = vshrl.u32 %v1582, 7
    %v1584 = vsub.s32 7, %v1583
    %v1585 = vrot.slane %v961, %v1584
    %v1586 = vlaneseq
    %v1587 = vshrl.u32 %v1586, 7
    %v1588 = vsub.s32 0, %v1587
    %v1589 = vrot.slane %v963, %v1588
    %v1590 = vlaneseq
    %v1591 = vshrl.u32 %v1590, 7
    %v1592 = vsub.s32 1, %v1591
    %v1593 = vrot.slane %v963, %v1592
    %v1594 = vlaneseq
    %v1595 = vshrl.u32 %v1594, 7
    %v1596 = vsub.s32 2, %v1595
    %v1597 = vrot.slane %v963, %v1596
    %v1598 = vlaneseq
    %v1599 = vshrl.u32 %v1598, 7
    %v1600 = vsub.s32 3, %v1599
    %v1601 = vrot.slane %v963, %v1600
    %v1602 = vlaneseq
    %v1603 = vshrl.u32 %v1602, 7
    %v1604 = vsub.s32 4, %v1603
    %v1605 = vrot.slane %v963, %v1604
    %v1606 = vlaneseq
    %v1607 = vshrl.u32 %v1606, 7
    %v1608 = vsub.s32 5, %v1607
    %v1609 = vrot.slane %v963, %v1608
    %v1610 = vlaneseq
    %v1611 = vshrl.u32 %v1610, 7
    %v1612 = vsub.s32 6, %v1611
    %v1613 = vrot.slane %v963, %v1612
    %v1614 = vlaneseq
    %v1615 = vshrl.u32 %v1614, 7
    %v1616 = vsub.s32 7, %v1615
    %v1617 = vrot.slane %v963, %v1616
    %v1618 = vlaneseq
    %v1619 = vshrl.u32 %v1618, 7
    %v1620 = vsub.s32 0, %v1619
    %v1621 = vrot.slane %v965, %v1620
    %v1622 = vlaneseq
    %v1623 = vshrl.u32 %v1622, 7
    %v1624 = vsub.s32 1, %v1623
    %v1625 = vrot.slane %v965, %v1624
    %v1626 = vlaneseq
    %v1627 = vshrl.u32 %v1626, 7
    %v1628 = vsub.s32 2, %v1627
    %v1629 = vrot.slane %v965, %v1628
    %v1630 = vlaneseq
    %v1631 = vshrl.u32 %v1630, 7
    %v1632 = vsub.s32 3, %v1631
    %v1633 = vrot.slane %v965, %v1632
    %v1634 = vlaneseq
    %v1635 = vshrl.u32 %v1634, 7
    %v1636 = vsub.s32 4, %v1635
    %v1637 = vrot.slane %v965, %v1636
    %v1638 = vlaneseq
    %v1639 = vshrl.u32 %v1638, 7
    %v1640 = vsub.s32 5, %v1639
    %v1641 = vrot.slane %v965, %v1640
    %v1642 = vlaneseq
    %v1643 = vshrl.u32 %v1642, 7
    %v1644 = vsub.s32 6, %v1643
    %v1645 = vrot.slane %v965, %v1644
    %v1646 = vlaneseq
    %v1647 = vshrl.u32 %v1646, 7
    %v1648 = vsub.s32 7, %v1647
    %v1649 = vrot.slane %v965, %v1648
    %v1650 = vlaneseq
    %v1651 = vshrl.u32 %v1650, 7
    %v1652 = vsub.s32 0, %v1651
    %v1653 = vrot.slane %v967, %v1652
    %v1654 = vlaneseq
    %v1655 = vshrl.u32 %v1654, 7
    %v1656 = vsub.s32 1, %v1655
    %v1657 = vrot.slane %v967, %v1656
    %v1658 = vlaneseq
    %v1659 = vshrl.u32 %v1658, 7
    %v1660 = vsub.s32 2, %v1659
    %v1661 = vrot.slane %v967, %v1660
    %v1662 = vlaneseq
    %v1663 = vshrl.u32 %v1662, 7
    %v1664 = vsub.s32 3, %v1663
    %v1665 = vrot.slane %v967, %v1664
    %v1666 = vlaneseq
    %v1667 = vshrl.u32 %v1666, 7
    %v1668 = vsub.s32 4, %v1667
    %v1669 = vrot.slane %v967, %v1668
    %v1670 = vlaneseq
    %v1671 = vshrl.u32 %v1670, 7
    %v1672 = vsub.s32 5, %v1671
    %v1673 = vrot.slane %v967, %v1672
    %v1674 = vlaneseq
    %v1675 = vshrl.u32 %v1674, 7
    %v1676 = vsub.s32 6, %v1675
    %v1677 = vrot.slane %v967, %v1676
    %v1678 = vlaneseq
    %v1679 = vshrl.u32 %v1678, 7
    %v1680 = vsub.s32 7, %v1679
    %v1681 = vrot.slane %v967, %v1680
    %v1682 = vlaneseq
    %v1683 = vshrl.u32 %v1682, 7
    %v1684 = vsub.s32 0, %v1683
    %v1685 = vrot.slane %v969, %v1684
    %v1686 = vlaneseq
    %v1687 = vshrl.u32 %v1686, 7
    %v1688 = vsub.s32 1, %v1687
    %v1689 = vrot.slane %v969, %v1688
    %v1690 = vlaneseq
    %v1691 = vshrl.u32 %v1690, 7
    %v1692 = vsub.s32 2, %v1691
    %v1693 = vrot.slane %v969, %v1692
    %v1694 = vlaneseq
    %v1695 = vshrl.u32 %v1694, 7
    %v1696 = vsub.s32 3, %v1695
    %v1697 = vrot.slane %v969, %v1696
    %v1698 = vlaneseq
    %v1699 = vshrl.u32 %v1698, 7
    %v1700 = vsub.s32 4, %v1699
    %v1701 = vrot.slane %v969, %v1700
    %v1702 = vlaneseq
    %v1703 = vshrl.u32 %v1702, 7
    %v1704 = vsub.s32 5, %v1703
    %v1705 = vrot.slane %v969, %v1704
    %v1706 = vlaneseq
    %v1707 = vshrl.u32 %v1706, 7
    %v1708 = vsub.s32 6, %v1707
    %v1709 = vrot.slane %v969, %v1708
    %v1710 = vlaneseq
    %v1711 = vshrl.u32 %v1710, 7
    %v1712 = vsub.s32 7, %v1711
    %v1713 = vrot.slane %v969, %v1712
    %v1714 = vlaneseq
    %v1715 = vshrl.u32 %v1714, 7
    %v1716 = vsub.s32 0, %v1715
    %v1717 = vrot.slane %v971, %v1716
    %v1718 = vlaneseq
    %v1719 = vshrl.u32 %v1718, 7
    %v1720 = vsub.s32 1, %v1719
    %v1721 = vrot.slane %v971, %v1720
    %v1722 = vlaneseq
    %v1723 = vshrl.u32 %v1722, 7
    %v1724 = vsub.s32 2, %v1723
    %v1725 = vrot.slane %v971, %v1724
    %v1726 = vlaneseq
    %v1727 = vshrl.u32 %v1726, 7
    %v1728 = vsub.s32 3, %v1727
    %v1729 = vrot.slane %v971, %v1728
    %v1730 = vlaneseq
    %v1731 = vshrl.u32 %v1730, 7
    %v1732 = vsub.s32 4, %v1731
    %v1733 = vrot.slane %v971, %v1732
    %v1734 = vlaneseq
    %v1735 = vshrl.u32 %v1734, 7
    %v1736 = vsub.s32 5, %v1735
    %v1737 = vrot.slane %v971, %v1736
    %v1738 = vlaneseq
    %v1739 = vshrl.u32 %v1738, 7
    %v1740 = vsub.s32 6, %v1739
    %v1741 = vrot.slane %v971, %v1740
    %v1742 = vlaneseq
    %v1743 = vshrl.u32 %v1742, 7
    %v1744 = vsub.s32 7, %v1743
    %v1745 = vrot.slane %v971, %v1744
    %v1746 = vlaneseq
    %v1747 = vshrl.u32 %v1746, 7
    %v1748 = vsub.s32 0, %v1747
    %v1749 = vrot.slane %v973, %v1748
    %v1750 = vlaneseq
    %v1751 = vshrl.u32 %v1750, 7
    %v1752 = vsub.s32 1, %v1751
    %v1753 = vrot.slane %v973, %v1752
    %v1754 = vlaneseq
    %v1755 = vshrl.u32 %v1754, 7
    %v1756 = vsub.s32 2, %v1755
    %v1757 = vrot.slane %v973, %v1756
    %v1758 = vlaneseq
    %v1759 = vshrl.u32 %v1758, 7
    %v1760 = vsub.s32 3, %v1759
    %v1761 = vrot.slane %v973, %v1760
    %v1762 = vlaneseq
    %v1763 = vshrl.u32 %v1762, 7
    %v1764 = vsub.s32 4, %v1763
    %v1765 = vrot.slane %v973, %v1764
    %v1766 = vlaneseq
    %v1767 = vshrl.u32 %v1766, 7
    %v1768 = vsub.s32 5, %v1767
    %v1769 = vrot.slane %v973, %v1768
    %v1770 = vlaneseq
    %v1771 = vshrl.u32 %v1770, 7
    %v1772 = vsub.s32 6, %v1771
    %v1773 = vrot.slane %v973, %v1772
    %v1774 = vlaneseq
    %v1775 = vshrl.u32 %v1774, 7
    %v1776 = vsub.s32 7, %v1775
    %v1777 = vrot.slane %v973, %v1776
    %v1778 = vlaneseq
    %v1779 = vshrl.u32 %v1778, 7
    %v1780 = vsub.s32 0, %v1779
    %v1781 = vrot.slane %v975, %v1780
    %v1782 = vlaneseq
    %v1783 = vshrl.u32 %v1782, 7
    %v1784 = vsub.s32 1, %v1783
    %v1785 = vrot.slane %v975, %v1784
    %v1786 = vlaneseq
    %v1787 = vshrl.u32 %v1786, 7
    %v1788 = vsub.s32 2, %v1787
    %v1789 = vrot.slane %v975, %v1788
    %v1790 = vlaneseq
    %v1791 = vshrl.u32 %v1790, 7
    %v1792 = vsub.s32 3, %v1791
    %v1793 = vrot.slane %v975, %v1792
    %v1794 = vlaneseq
    %v1795 = vshrl.u32 %v1794, 7
    %v1796 = vsub.s32 4, %v1795
    %v1797 = vrot.slane %v975, %v1796
    %v1798 = vlaneseq
    %v1799 = vshrl.u32 %v1798, 7
    %v1800 = vsub.s32 5, %v1799
    %v1801 = vrot.slane %v975, %v1800
    %v1802 = vlaneseq
    %v1803 = vshrl.u32 %v1802, 7
    %v1804 = vsub.s32 6, %v1803
    %v1805 = vrot.slane %v975, %v1804
    %v1806 = vlaneseq
    %v1807 = vshrl.u32 %v1806, 7
    %v1808 = vsub.s32 7, %v1807
    %v1809 = vrot.slane %v975, %v1808
    %v1810 = vlaneseq
    %v1811 = vshrl.u32 %v1810, 7
    %v1812 = vsub.s32 0, %v1811
    %v1813 = vrot.slane %v977, %v1812
    %v1814 = vlaneseq
    %v1815 = vshrl.u32 %v1814, 7
    %v1816 = vsub.s32 1, %v1815
    %v1817 = vrot.slane %v977, %v1816
    %v1818 = vlaneseq
    %v1819 = vshrl.u32 %v1818, 7
    %v1820 = vsub.s32 2, %v1819
    %v1821 = vrot.slane %v977, %v1820
    %v1822 = vlaneseq
    %v1823 = vshrl.u32 %v1822, 7
    %v1824 = vsub.s32 3, %v1823
    %v1825 = vrot.slane %v977, %v1824
    %v1826 = vlaneseq
    %v1827 = vshrl.u32 %v1826, 7
    %v1828 = vsub.s32 4, %v1827
    %v1829 = vrot.slane %v977, %v1828
    %v1830 = vlaneseq
    %v1831 = vshrl.u32 %v1830, 7
    %v1832 = vsub.s32 5, %v1831
    %v1833 = vrot.slane %v977, %v1832
    %v1834 = vlaneseq
    %v1835 = vshrl.u32 %v1834, 7
    %v1836 = vsub.s32 6, %v1835
    %v1837 = vrot.slane %v977, %v1836
    %v1838 = vlaneseq
    %v1839 = vshrl.u32 %v1838, 7
    %v1840 = vsub.s32 7, %v1839
    %v1841 = vrot.slane %v977, %v1840
    %v1842 = vlaneseq
    %v1843 = vshrl.u32 %v1842, 7
    %v1844 = vsub.s32 0, %v1843
    %v1845 = vrot.slane %v979, %v1844
    %v1846 = vlaneseq
    %v1847 = vshrl.u32 %v1846, 7
    %v1848 = vsub.s32 1, %v1847
    %v1849 = vrot.slane %v979, %v1848
    %v1850 = vlaneseq
    %v1851 = vshrl.u32 %v1850, 7
    %v1852 = vsub.s32 2, %v1851
    %v1853 = vrot.slane %v979, %v1852
    %v1854 = vlaneseq
    %v1855 = vshrl.u32 %v1854, 7
    %v1856 = vsub.s32 3, %v1855
    %v1857 = vrot.slane %v979, %v1856
    %v1858 = vlaneseq
    %v1859 = vshrl.u32 %v1858, 7
    %v1860 = vsub.s32 4, %v1859
    %v1861 = vrot.slane %v979, %v1860
    %v1862 = vlaneseq
    %v1863 = vshrl.u32 %v1862, 7
    %v1864 = vsub.s32 5, %v1863
    %v1865 = vrot.slane %v979, %v1864
    %v1866 = vlaneseq
    %v1867 = vshrl.u32 %v1866, 7
    %v1868 = vsub.s32 6, %v1867
    %v1869 = vrot.slane %v979, %v1868
    %v1870 = vlaneseq
    %v1871 = vshrl.u32 %v1870, 7
    %v1872 = vsub.s32 7, %v1871
    %v1873 = vrot.slane %v979, %v1872
    %v1874 = vlaneseq
    %v1875 = vshrl.u32 %v1874, 7
    %v1876 = vsub.s32 0, %v1875
    %v1877 = vrot.slane %v981, %v1876
    %v1878 = vlaneseq
    %v1879 = vshrl.u32 %v1878, 7
    %v1880 = vsub.s32 1, %v1879
    %v1881 = vrot.slane %v981, %v1880
    %v1882 = vlaneseq
    %v1883 = vshrl.u32 %v1882, 7
    %v1884 = vsub.s32 2, %v1883
    %v1885 = vrot.slane %v981, %v1884
    %v1886 = vlaneseq
    %v1887 = vshrl.u32 %v1886, 7
    %v1888 = vsub.s32 3, %v1887
    %v1889 = vrot.slane %v981, %v1888
    %v1890 = vlaneseq
    %v1891 = vshrl.u32 %v1890, 7
    %v1892 = vsub.s32 4, %v1891
    %v1893 = vrot.slane %v981, %v1892
    %v1894 = vlaneseq
    %v1895 = vshrl.u32 %v1894, 7
    %v1896 = vsub.s32 5, %v1895
    %v1897 = vrot.slane %v981, %v1896
    %v1898 = vlaneseq
    %v1899 = vshrl.u32 %v1898, 7
    %v1900 = vsub.s32 6, %v1899
    %v1901 = vrot.slane %v981, %v1900
    %v1902 = vlaneseq
    %v1903 = vshrl.u32 %v1902, 7
    %v1904 = vsub.s32 7, %v1903
    %v1905 = vrot.slane %v981, %v1904
    %v1906 = vlaneseq
    %v1907 = vshrl.u32 %v1906, 7
    %v1908 = vsub.s32 0, %v1907
    %v1909 = vrot.slane %v983, %v1908
    %v1910 = vlaneseq
    %v1911 = vshrl.u32 %v1910, 7
    %v1912 = vsub.s32 1, %v1911
    %v1913 = vrot.slane %v983, %v1912
    %v1914 = vlaneseq
    %v1915 = vshrl.u32 %v1914, 7
    %v1916 = vsub.s32 2, %v1915
    %v1917 = vrot.slane %v983, %v1916
    %v1918 = vlaneseq
    %v1919 = vshrl.u32 %v1918, 7
    %v1920 = vsub.s32 3, %v1919
    %v1921 = vrot.slane %v983, %v1920
    %v1922 = vlaneseq
    %v1923 = vshrl.u32 %v1922, 7
    %v1924 = vsub.s32 4, %v1923
    %v1925 = vrot.slane %v983, %v1924
    %v1926 = vlaneseq
    %v1927 = vshrl.u32 %v1926, 7
    %v1928 = vsub.s32 5, %v1927
    %v1929 = vrot.slane %v983, %v1928
    %v1930 = vlaneseq
    %v1931 = vshrl.u32 %v1930, 7
    %v1932 = vsub.s32 6, %v1931
    %v1933 = vrot.slane %v983, %v1932
    %v1934 = vlaneseq
    %v1935 = vshrl.u32 %v1934, 7
    %v1936 = vsub.s32 7, %v1935
    %v1937 = vrot.slane %v983, %v1936
    %v1938 = vlaneseq
    %v1939 = vshrl.u32 %v1938, 7
    %v1940 = vsub.s32 0, %v1939
    %v1941 = vrot.slane %v985, %v1940
    %v1942 = vlaneseq
    %v1943 = vshrl.u32 %v1942, 7
    %v1944 = vsub.s32 1, %v1943
    %v1945 = vrot.slane %v985, %v1944
    %v1946 = vlaneseq
    %v1947 = vshrl.u32 %v1946, 7
    %v1948 = vsub.s32 2, %v1947
    %v1949 = vrot.slane %v985, %v1948
    %v1950 = vlaneseq
    %v1951 = vshrl.u32 %v1950, 7
    %v1952 = vsub.s32 3, %v1951
    %v1953 = vrot.slane %v985, %v1952
    %v1954 = vlaneseq
    %v1955 = vshrl.u32 %v1954, 7
    %v1956 = vsub.s32 4, %v1955
    %v1957 = vrot.slane %v985, %v1956
    %v1958 = vlaneseq
    %v1959 = vshrl.u32 %v1958, 7
    %v1960 = vsub.s32 5, %v1959
    %v1961 = vrot.slane %v985, %v1960
    %v1962 = vlaneseq
    %v1963 = vshrl.u32 %v1962, 7
    %v1964 = vsub.s32 6, %v1963
    %v1965 = vrot.slane %v985, %v1964
    %v1966 = vlaneseq
    %v1967 = vshrl.u32 %v1966, 7
    %v1968 = vsub.s32 7, %v1967
    %v1969 = vrot.slane %v985, %v1968
    %v1970 = vlaneseq
    %v1971 = vshrl.u32 %v1970, 7
    %v1972 = vsub.s32 0, %v1971
    %v1973 = vrot.slane %v987, %v1972
    %v1974 = vlaneseq
    %v1975 = vshrl.u32 %v1974, 7
    %v1976 = vsub.s32 1, %v1975
    %v1977 = vrot.slane %v987, %v1976
    %v1978 = vlaneseq
    %v1979 = vshrl.u32 %v1978, 7
    %v1980 = vsub.s32 2, %v1979
    %v1981 = vrot.slane %v987, %v1980
    %v1982 = vlaneseq
    %v1983 = vshrl.u32 %v1982, 7
    %v1984 = vsub.s32 3, %v1983
    %v1985 = vrot.slane %v987, %v1984
    %v1986 = vlaneseq
    %v1987 = vshrl.u32 %v1986, 7
    %v1988 = vsub.s32 4, %v1987
    %v1989 = vrot.slane %v987, %v1988
    %v1990 = vlaneseq
    %v1991 = vshrl.u32 %v1990, 7
    %v1992 = vsub.s32 5, %v1991
    %v1993 = vrot.slane %v987, %v1992
    %v1994 = vlaneseq
    %v1995 = vshrl.u32 %v1994, 7
    %v1996 = vsub.s32 6, %v1995
    %v1997 = vrot.slane %v987, %v1996
    %v1998 = vlaneseq
    %v1999 = vshrl.u32 %v1998, 7
    %v2000 = vsub.s32 7, %v1999
    %v2001 = vrot.slane %v987, %v2000
    %v2002 = vlaneseq
    %v2003 = vshrl.u32 %v2002, 7
    %v2004 = vsub.s32 0, %v2003
    %v2005 = vrot.slane %v989, %v2004
    %v2006 = vlaneseq
    %v2007 = vshrl.u32 %v2006, 7
    %v2008 = vsub.s32 1, %v2007
    %v2009 = vrot.slane %v989, %v2008
    %v2010 = vlaneseq
    %v2011 = vshrl.u32 %v2010, 7
    %v2012 = vsub.s32 2, %v2011
    %v2013 = vrot.slane %v989, %v2012
    %v2014 = vlaneseq
    %v2015 = vshrl.u32 %v2014, 7
    %v2016 = vsub.s32 3, %v2015
    %v2017 = vrot.slane %v989, %v2016
    %v2018 = vlaneseq
    %v2019 = vshrl.u32 %v2018, 7
    %v2020 = vsub.s32 4, %v2019
    %v2021 = vrot.slane %v989, %v2020
    %v2022 = vlaneseq
    %v2023 = vshrl.u32 %v2022, 7
    %v2024 = vsub.s32 5, %v2023
    %v2025 = vrot.slane %v989, %v2024
    %v2026 = vlaneseq
    %v2027 = vshrl.u32 %v2026, 7
    %v2028 = vsub.s32 6, %v2027
    %v2029 = vrot.slane %v989, %v2028
    %v2030 = vlaneseq
    %v2031 = vshrl.u32 %v2030, 7
    %v2032 = vsub.s32 7, %v2031
    %v2033 = vrot.slane %v989, %v2032
    %v2034 = vlaneseq
    %v2035 = vshrl.u32 %v2034, 7
    %v2036 = vsub.s32 0, %v2035
    %v2037 = vrot.slane %v991, %v2036
    %v2038 = vlaneseq
    %v2039 = vshrl.u32 %v2038, 7
    %v2040 = vsub.s32 1, %v2039
    %v2041 = vrot.slane %v991, %v2040
    %v2042 = vlaneseq
    %v2043 = vshrl.u32 %v2042, 7
    %v2044 = vsub.s32 2, %v2043
    %v2045 = vrot.slane %v991, %v2044
    %v2046 = vlaneseq
    %v2047 = vshrl.u32 %v2046, 7
    %v2048 = vsub.s32 3, %v2047
    %v2049 = vrot.slane %v991, %v2048
    %v2050 = vlaneseq
    %v2051 = vshrl.u32 %v2050, 7
    %v2052 = vsub.s32 4, %v2051
    %v2053 = vrot.slane %v991, %v2052
    %v2054 = vlaneseq
    %v2055 = vshrl.u32 %v2054, 7
    %v2056 = vsub.s32 5, %v2055
    %v2057 = vrot.slane %v991, %v2056
    %v2058 = vlaneseq
    %v2059 = vshrl.u32 %v2058, 7
    %v2060 = vsub.s32 6, %v2059
    %v2061 = vrot.slane %v991, %v2060
    %v2062 = vlaneseq
    %v2063 = vshrl.u32 %v2062, 7
    %v2064 = vsub.s32 7, %v2063
    %v2065 = vrot.slane %v991, %v2064
    %v2066 = vlaneseq
    %v2067 = vshrl.u32 %v2066, 7
    %v2068 = vsub.s32 0, %v2067
    %v2069 = vrot.slane %v993, %v2068
    %v2070 = vlaneseq
    %v2071 = vshrl.u32 %v2070, 7
    %v2072 = vsub.s32 1, %v2071
    %v2073 = vrot.slane %v993, %v2072
    %v2074 = vlaneseq
    %v2075 = vshrl.u32 %v2074, 7
    %v2076 = vsub.s32 2, %v2075
    %v2077 = vrot.slane %v993, %v2076
    %v2078 = vlaneseq
    %v2079 = vshrl.u32 %v2078, 7
    %v2080 = vsub.s32 3, %v2079
    %v2081 = vrot.slane %v993, %v2080
    %v2082 = vlaneseq
    %v2083 = vshrl.u32 %v2082, 7
    %v2084 = vsub.s32 4, %v2083
    %v2085 = vrot.slane %v993, %v2084
    %v2086 = vlaneseq
    %v2087 = vshrl.u32 %v2086, 7
    %v2088 = vsub.s32 5, %v2087
    %v2089 = vrot.slane %v993, %v2088
    %v2090 = vlaneseq
    %v2091 = vshrl.u32 %v2090, 7
    %v2092 = vsub.s32 6, %v2091
    %v2093 = vrot.slane %v993, %v2092
    %v2094 = vlaneseq
    %v2095 = vshrl.u32 %v2094, 7
    %v2096 = vsub.s32 7, %v2095
    %v2097 = vrot.slane %v993, %v2096
    %v2098 = vlaneseq
    %v2099 = vshrl.u32 %v2098, 7
    %v2100 = vsub.s32 0, %v2099
    %v2101 = vrot.slane %v995, %v2100
    %v2102 = vlaneseq
    %v2103 = vshrl.u32 %v2102, 7
    %v2104 = vsub.s32 1, %v2103
    %v2105 = vrot.slane %v995, %v2104
    %v2106 = vlaneseq
    %v2107 = vshrl.u32 %v2106, 7
    %v2108 = vsub.s32 2, %v2107
    %v2109 = vrot.slane %v995, %v2108
    %v2110 = vlaneseq
    %v2111 = vshrl.u32 %v2110, 7
    %v2112 = vsub.s32 3, %v2111
    %v2113 = vrot.slane %v995, %v2112
    %v2114 = vlaneseq
    %v2115 = vshrl.u32 %v2114, 7
    %v2116 = vsub.s32 4, %v2115
    %v2117 = vrot.slane %v995, %v2116
    %v2118 = vlaneseq
    %v2119 = vshrl.u32 %v2118, 7
    %v2120 = vsub.s32 5, %v2119
    %v2121 = vrot.slane %v995, %v2120
    %v2122 = vlaneseq
    %v2123 = vshrl.u32 %v2122, 7
    %v2124 = vsub.s32 6, %v2123
    %v2125 = vrot.slane %v995, %v2124
    %v2126 = vlaneseq
    %v2127 = vshrl.u32 %v2126, 7
    %v2128 = vsub.s32 7, %v2127
    %v2129 = vrot.slane %v995, %v2128
    %v2130 = vlaneseq
    %v2131 = vshrl.u32 %v2130, 7
    %v2132 = vsub.s32 0, %v2131
    %v2133 = vrot.slane %v997, %v2132
    %v2134 = vlaneseq
    %v2135 = vshrl.u32 %v2134, 7
    %v2136 = vsub.s32 1, %v2135
    %v2137 = vrot.slane %v997, %v2136
    %v2138 = vlaneseq
    %v2139 = vshrl.u32 %v2138, 7
    %v2140 = vsub.s32 2, %v2139
    %v2141 = vrot.slane %v997, %v2140
    %v2142 = vlaneseq
    %v2143 = vshrl.u32 %v2142, 7
    %v2144 = vsub.s32 3, %v2143
    %v2145 = vrot.slane %v997, %v2144
    %v2146 = vlaneseq
    %v2147 = vshrl.u32 %v2146, 7
    %v2148 = vsub.s32 4, %v2147
    %v2149 = vrot.slane %v997, %v2148
    %v2150 = vlaneseq
    %v2151 = vshrl.u32 %v2150, 7
    %v2152 = vsub.s32 5, %v2151
    %v2153 = vrot.slane %v997, %v2152
    %v2154 = vlaneseq
    %v2155 = vshrl.u32 %v2154, 7
    %v2156 = vsub.s32 6, %v2155
    %v2157 = vrot.slane %v997, %v2156
    %v2158 = vlaneseq
    %v2159 = vshrl.u32 %v2158, 7
    %v2160 = vsub.s32 7, %v2159
    %v2161 = vrot.slane %v997, %v2160
    %v2162 = vlaneseq
    %v2163 = vshrl.u32 %v2162, 7
    %v2164 = vsub.s32 0, %v2163
    %v2165 = vrot.slane %v999, %v2164
    %v2166 = vlaneseq
    %v2167 = vshrl.u32 %v2166, 7
    %v2168 = vsub.s32 1, %v2167
    %v2169 = vrot.slane %v999, %v2168
    %v2170 = vlaneseq
    %v2171 = vshrl.u32 %v2170, 7
    %v2172 = vsub.s32 2, %v2171
    %v2173 = vrot.slane %v999, %v2172
    %v2174 = vlaneseq
    %v2175 = vshrl.u32 %v2174, 7
    %v2176 = vsub.s32 3, %v2175
    %v2177 = vrot.slane %v999, %v2176
    %v2178 = vlaneseq
    %v2179 = vshrl.u32 %v2178, 7
    %v2180 = vsub.s32 4, %v2179
    %v2181 = vrot.slane %v999, %v2180
    %v2182 = vlaneseq
    %v2183 = vshrl.u32 %v2182, 7
    %v2184 = vsub.s32 5, %v2183
    %v2185 = vrot.slane %v999, %v2184
    %v2186 = vlaneseq
    %v2187 = vshrl.u32 %v2186, 7
    %v2188 = vsub.s32 6, %v2187
    %v2189 = vrot.slane %v999, %v2188
    %v2190 = vlaneseq
    %v2191 = vshrl.u32 %v2190, 7
    %v2192 = vsub.s32 7, %v2191
    %v2193 = vrot.slane %v999, %v2192
    %v2194 = vlaneseq
    %v2195 = vshrl.u32 %v2194, 7
    %v2196 = vsub.s32 0, %v2195
    %v2197 = vrot.slane %v1001, %v2196
    %v2198 = vlaneseq
    %v2199 = vshrl.u32 %v2198, 7
    %v2200 = vsub.s32 1, %v2199
    %v2201 = vrot.slane %v1001, %v2200
    %v2202 = vlaneseq
    %v2203 = vshrl.u32 %v2202, 7
    %v2204 = vsub.s32 2, %v2203
    %v2205 = vrot.slane %v1001, %v2204
    %v2206 = vlaneseq
    %v2207 = vshrl.u32 %v2206, 7
    %v2208 = vsub.s32 3, %v2207
    %v2209 = vrot.slane %v1001, %v2208
    %v2210 = vlaneseq
    %v2211 = vshrl.u32 %v2210, 7
    %v2212 = vsub.s32 4, %v2211
    %v2213 = vrot.slane %v1001, %v2212
    %v2214 = vlaneseq
    %v2215 = vshrl.u32 %v2214, 7
    %v2216 = vsub.s32 5, %v2215
    %v2217 = vrot.slane %v1001, %v2216
    %v2218 = vlaneseq
    %v2219 = vshrl.u32 %v2218, 7
    %v2220 = vsub.s32 6, %v2219
    %v2221 = vrot.slane %v1001, %v2220
    %v2222 = vlaneseq
    %v2223 = vshrl.u32 %v2222, 7
    %v2224 = vsub.s32 7, %v2223
    %v2225 = vrot.slane %v1001, %v2224
    %v2226 = vlaneseq
    %v2227 = vshrl.u32 %v2226, 7
    %v2228 = vsub.s32 0, %v2227
    %v2229 = vrot.slane %v1003, %v2228
    %v2230 = vlaneseq
    %v2231 = vshrl.u32 %v2230, 7
    %v2232 = vsub.s32 1, %v2231
    %v2233 = vrot.slane %v1003, %v2232
    %v2234 = vlaneseq
    %v2235 = vshrl.u32 %v2234, 7
    %v2236 = vsub.s32 2, %v2235
    %v2237 = vrot.slane %v1003, %v2236
    %v2238 = vlaneseq
    %v2239 = vshrl.u32 %v2238, 7
    %v2240 = vsub.s32 3, %v2239
    %v2241 = vrot.slane %v1003, %v2240
    %v2242 = vlaneseq
    %v2243 = vshrl.u32 %v2242, 7
    %v2244 = vsub.s32 4, %v2243
    %v2245 = vrot.slane %v1003, %v2244
    %v2246 = vlaneseq
    %v2247 = vshrl.u32 %v2246, 7
    %v2248 = vsub.s32 5, %v2247
    %v2249 = vrot.slane %v1003, %v2248
    %v2250 = vlaneseq
    %v2251 = vshrl.u32 %v2250, 7
    %v2252 = vsub.s32 6, %v2251
    %v2253 = vrot.slane %v1003, %v2252
    %v2254 = vlaneseq
    %v2255 = vshrl.u32 %v2254, 7
    %v2256 = vsub.s32 7, %v2255
    %v2257 = vrot.slane %v1003, %v2256
    %v2258 = vlaneseq
    %v2259 = vshrl.u32 %v2258, 7
    %v2260 = vsub.s32 0, %v2259
    %v2261 = vrot.slane %v1005, %v2260
    %v2262 = vlaneseq
    %v2263 = vshrl.u32 %v2262, 7
    %v2264 = vsub.s32 1, %v2263
    %v2265 = vrot.slane %v1005, %v2264
    %v2266 = vlaneseq
    %v2267 = vshrl.u32 %v2266, 7
    %v2268 = vsub.s32 2, %v2267
    %v2269 = vrot.slane %v1005, %v2268
    %v2270 = vlaneseq
    %v2271 = vshrl.u32 %v2270, 7
    %v2272 = vsub.s32 3, %v2271
    %v2273 = vrot.slane %v1005, %v2272
    %v2274 = vlaneseq
    %v2275 = vshrl.u32 %v2274, 7
    %v2276 = vsub.s32 4, %v2275
    %v2277 = vrot.slane %v1005, %v2276
    %v2278 = vlaneseq
    %v2279 = vshrl.u32 %v2278, 7
    %v2280 = vsub.s32 5, %v2279
    %v2281 = vrot.slane %v1005, %v2280
    %v2282 = vlaneseq
    %v2283 = vshrl.u32 %v2282, 7
    %v2284 = vsub.s32 6, %v2283
    %v2285 = vrot.slane %v1005, %v2284
    %v2286 = vlaneseq
    %v2287 = vshrl.u32 %v2286, 7
    %v2288 = vsub.s32 7, %v2287
    %v2289 = vrot.slane %v1005, %v2288
    %v2290 = vlaneseq
    %v2291 = vshrl.u32 %v2290, 7
    %v2292 = vsub.s32 0, %v2291
    %v2293 = vrot.slane %v1007, %v2292
    %v2294 = vlaneseq
    %v2295 = vshrl.u32 %v2294, 7
    %v2296 = vsub.s32 1, %v2295
    %v2297 = vrot.slane %v1007, %v2296
    %v2298 = vlaneseq
    %v2299 = vshrl.u32 %v2298, 7
    %v2300 = vsub.s32 2, %v2299
    %v2301 = vrot.slane %v1007, %v2300
    %v2302 = vlaneseq
    %v2303 = vshrl.u32 %v2302, 7
    %v2304 = vsub.s32 3, %v2303
    %v2305 = vrot.slane %v1007, %v2304
    %v2306 = vlaneseq
    %v2307 = vshrl.u32 %v2306, 7
    %v2308 = vsub.s32 4, %v2307
    %v2309 = vrot.slane %v1007, %v2308
    %v2310 = vlaneseq
    %v2311 = vshrl.u32 %v2310, 7
    %v2312 = vsub.s32 5, %v2311
    %v2313 = vrot.slane %v1007, %v2312
    %v2314 = vlaneseq
    %v2315 = vshrl.u32 %v2314, 7
    %v2316 = vsub.s32 6, %v2315
    %v2317 = vrot.slane %v1007, %v2316
    %v2318 = vlaneseq
    %v2319 = vshrl.u32 %v2318, 7
    %v2320 = vsub.s32 7, %v2319
    %v2321 = vrot.slane %v1007, %v2320
    %v2322 = vlaneseq
    %v2323 = vshrl.u32 %v2322, 7
    %v2324 = vsub.s32 0, %v2323
    %v2325 = vrot.slane %v1009, %v2324
    %v2326 = vlaneseq
    %v2327 = vshrl.u32 %v2326, 7
    %v2328 = vsub.s32 1, %v2327
    %v2329 = vrot.slane %v1009, %v2328
    %v2330 = vlaneseq
    %v2331 = vshrl.u32 %v2330, 7
    %v2332 = vsub.s32 2, %v2331
    %v2333 = vrot.slane %v1009, %v2332
    %v2334 = vlaneseq
    %v2335 = vshrl.u32 %v2334, 7
    %v2336 = vsub.s32 3, %v2335
    %v2337 = vrot.slane %v1009, %v2336
    %v2338 = vlaneseq
    %v2339 = vshrl.u32 %v2338, 7
    %v2340 = vsub.s32 4, %v2339
    %v2341 = vrot.slane %v1009, %v2340
    %v2342 = vlaneseq
    %v2343 = vshrl.u32 %v2342, 7
    %v2344 = vsub.s32 5, %v2343
    %v2345 = vrot.slane %v1009, %v2344
    %v2346 = vlaneseq
    %v2347 = vshrl.u32 %v2346, 7
    %v2348 = vsub.s32 6, %v2347
    %v2349 = vrot.slane %v1009, %v2348
    %v2350 = vlaneseq
    %v2351 = vshrl.u32 %v2350, 7
    %v2352 = vsub.s32 7, %v2351
    %v2353 = vrot.slane %v1009, %v2352
    %v2354 = vlaneseq
    %v2355 = vshrl.u32 %v2354, 7
    %v2356 = vsub.s32 0, %v2355
    %v2357 = vrot.slane %v1011, %v2356
    %v2358 = vlaneseq
    %v2359 = vshrl.u32 %v2358, 7
    %v2360 = vsub.s32 1, %v2359
    %v2361 = vrot.slane %v1011, %v2360
    %v2362 = vlaneseq
    %v2363 = vshrl.u32 %v2362, 7
    %v2364 = vsub.s32 2, %v2363
    %v2365 = vrot.slane %v1011, %v2364
    %v2366 = vlaneseq
    %v2367 = vshrl.u32 %v2366, 7
    %v2368 = vsub.s32 3, %v2367
    %v2369 = vrot.slane %v1011, %v2368
    %v2370 = vlaneseq
    %v2371 = vshrl.u32 %v2370, 7
    %v2372 = vsub.s32 4, %v2371
    %v2373 = vrot.slane %v1011, %v2372
    %v2374 = vlaneseq
    %v2375 = vshrl.u32 %v2374, 7
    %v2376 = vsub.s32 5, %v2375
    %v2377 = vrot.slane %v1011, %v2376
    %v2378 = vlaneseq
    %v2379 = vshrl.u32 %v2378, 7
    %v2380 = vsub.s32 6, %v2379
    %v2381 = vrot.slane %v1011, %v2380
    %v2382 = vlaneseq
    %v2383 = vshrl.u32 %v2382, 7
    %v2384 = vsub.s32 7, %v2383
    %v2385 = vrot.slane %v1011, %v2384
    %v2386 = vlaneseq
    %v2387 = vshrl.u32 %v2386, 7
    %v2388 = vsub.s32 0, %v2387
    %v2389 = vrot.slane %v1013, %v2388
    %v2390 = vlaneseq
    %v2391 = vshrl.u32 %v2390, 7
    %v2392 = vsub.s32 1, %v2391
    %v2393 = vrot.slane %v1013, %v2392
    %v2394 = vlaneseq
    %v2395 = vshrl.u32 %v2394, 7
    %v2396 = vsub.s32 2, %v2395
    %v2397 = vrot.slane %v1013, %v2396
    %v2398 = vlaneseq
    %v2399 = vshrl.u32 %v2398, 7
    %v2400 = vsub.s32 3, %v2399
    %v2401 = vrot.slane %v1013, %v2400
    %v2402 = vlaneseq
    %v2403 = vshrl.u32 %v2402, 7
    %v2404 = vsub.s32 4, %v2403
    %v2405 = vrot.slane %v1013, %v2404
    %v2406 = vlaneseq
    %v2407 = vshrl.u32 %v2406, 7
    %v2408 = vsub.s32 5, %v2407
    %v2409 = vrot.slane %v1013, %v2408
    %v2410 = vlaneseq
    %v2411 = vshrl.u32 %v2410, 7
    %v2412 = vsub.s32 6, %v2411
    %v2413 = vrot.slane %v1013, %v2412
    %v2414 = vlaneseq
    %v2415 = vshrl.u32 %v2414, 7
    %v2416 = vsub.s32 7, %v2415
    %v2417 = vrot.slane %v1013, %v2416
    %v2418 = vlaneseq
    %v2419 = vshrl.u32 %v2418, 7
    %v2420 = vsub.s32 0, %v2419
    %v2421 = vrot.slane %v1015, %v2420
    %v2422 = vlaneseq
    %v2423 = vshrl.u32 %v2422, 7
    %v2424 = vsub.s32 1, %v2423
    %v2425 = vrot.slane %v1015, %v2424
    %v2426 = vlaneseq
    %v2427 = vshrl.u32 %v2426, 7
    %v2428 = vsub.s32 2, %v2427
    %v2429 = vrot.slane %v1015, %v2428
    %v2430 = vlaneseq
    %v2431 = vshrl.u32 %v2430, 7
    %v2432 = vsub.s32 3, %v2431
    %v2433 = vrot.slane %v1015, %v2432
    %v2434 = vlaneseq
    %v2435 = vshrl.u32 %v2434, 7
    %v2436 = vsub.s32 4, %v2435
    %v2437 = vrot.slane %v1015, %v2436
    %v2438 = vlaneseq
    %v2439 = vshrl.u32 %v2438, 7
    %v2440 = vsub.s32 5, %v2439
    %v2441 = vrot.slane %v1015, %v2440
    %v2442 = vlaneseq
    %v2443 = vshrl.u32 %v2442, 7
    %v2444 = vsub.s32 6, %v2443
    %v2445 = vrot.slane %v1015, %v2444
    %v2446 = vlaneseq
    %v2447 = vshrl.u32 %v2446, 7
    %v2448 = vsub.s32 7, %v2447
    %v2449 = vrot.slane %v1015, %v2448
    %v2450 = vlaneseq
    %v2451 = vshrl.u32 %v2450, 7
    %v2452 = vsub.s32 0, %v2451
    %v2453 = vrot.slane %v1017, %v2452
    %v2454 = vlaneseq
    %v2455 = vshrl.u32 %v2454, 7
    %v2456 = vsub.s32 1, %v2455
    %v2457 = vrot.slane %v1017, %v2456
    %v2458 = vlaneseq
    %v2459 = vshrl.u32 %v2458, 7
    %v2460 = vsub.s32 2, %v2459
    %v2461 = vrot.slane %v1017, %v2460
    %v2462 = vlaneseq
    %v2463 = vshrl.u32 %v2462, 7
    %v2464 = vsub.s32 3, %v2463
    %v2465 = vrot.slane %v1017, %v2464
    %v2466 = vlaneseq
    %v2467 = vshrl.u32 %v2466, 7
    %v2468 = vsub.s32 4, %v2467
    %v2469 = vrot.slane %v1017, %v2468
    %v2470 = vlaneseq
    %v2471 = vshrl.u32 %v2470, 7
    %v2472 = vsub.s32 5, %v2471
    %v2473 = vrot.slane %v1017, %v2472
    %v2474 = vlaneseq
    %v2475 = vshrl.u32 %v2474, 7
    %v2476 = vsub.s32 6, %v2475
    %v2477 = vrot.slane %v1017, %v2476
    %v2478 = vlaneseq
    %v2479 = vshrl.u32 %v2478, 7
    %v2480 = vsub.s32 7, %v2479
    %v2481 = vrot.slane %v1017, %v2480
    %v2482 = vlaneseq
    %v2483 = vshrl.u32 %v2482, 7
    %v2484 = vsub.s32 0, %v2483
    %v2485 = vrot.slane %v1019, %v2484
    %v2486 = vlaneseq
    %v2487 = vshrl.u32 %v2486, 7
    %v2488 = vsub.s32 1, %v2487
    %v2489 = vrot.slane %v1019, %v2488
    %v2490 = vlaneseq
    %v2491 = vshrl.u32 %v2490, 7
    %v2492 = vsub.s32 2, %v2491
    %v2493 = vrot.slane %v1019, %v2492
    %v2494 = vlaneseq
    %v2495 = vshrl.u32 %v2494, 7
    %v2496 = vsub.s32 3, %v2495
    %v2497 = vrot.slane %v1019, %v2496
    %v2498 = vlaneseq
    %v2499 = vshrl.u32 %v2498, 7
    %v2500 = vsub.s32 4, %v2499
    %v2501 = vrot.slane %v1019, %v2500
    %v2502 = vlaneseq
    %v2503 = vshrl.u32 %v2502, 7
    %v2504 = vsub.s32 5, %v2503
    %v2505 = vrot.slane %v1019, %v2504
    %v2506 = vlaneseq
    %v2507 = vshrl.u32 %v2506, 7
    %v2508 = vsub.s32 6, %v2507
    %v2509 = vrot.slane %v1019, %v2508
    %v2510 = vlaneseq
    %v2511 = vshrl.u32 %v2510, 7
    %v2512 = vsub.s32 7, %v2511
    %v2513 = vrot.slane %v1019, %v2512
    %v2514 = vlaneseq
    %v2515 = vshrl.u32 %v2514, 7
    %v2516 = vsub.s32 0, %v2515
    %v2517 = vrot.slane %v1021, %v2516
    %v2518 = vlaneseq
    %v2519 = vshrl.u32 %v2518, 7
    %v2520 = vsub.s32 1, %v2519
    %v2521 = vrot.slane %v1021, %v2520
    %v2522 = vlaneseq
    %v2523 = vshrl.u32 %v2522, 7
    %v2524 = vsub.s32 2, %v2523
    %v2525 = vrot.slane %v1021, %v2524
    %v2526 = vlaneseq
    %v2527 = vshrl.u32 %v2526, 7
    %v2528 = vsub.s32 3, %v2527
    %v2529 = vrot.slane %v1021, %v2528
    %v2530 = vlaneseq
    %v2531 = vshrl.u32 %v2530, 7
    %v2532 = vsub.s32 4, %v2531
    %v2533 = vrot.slane %v1021, %v2532
    %v2534 = vlaneseq
    %v2535 = vshrl.u32 %v2534, 7
    %v2536 = vsub.s32 5, %v2535
    %v2537 = vrot.slane %v1021, %v2536
    %v2538 = vlaneseq
    %v2539 = vshrl.u32 %v2538, 7
    %v2540 = vsub.s32 6, %v2539
    %v2541 = vrot.slane %v1021, %v2540
    %v2542 = vlaneseq
    %v2543 = vshrl.u32 %v2542, 7
    %v2544 = vsub.s32 7, %v2543
    %v2545 = vrot.slane %v1021, %v2544
    %v2546 = vlaneseq
    %v2547 = vshrl.u32 %v2546, 7
    %v2548 = vsub.s32 0, %v2547
    %v2549 = vrot.slane %v1023, %v2548
    %v2550 = vlaneseq
    %v2551 = vshrl.u32 %v2550, 7
    %v2552 = vsub.s32 1, %v2551
    %v2553 = vrot.slane %v1023, %v2552
    %v2554 = vlaneseq
    %v2555 = vshrl.u32 %v2554, 7
    %v2556 = vsub.s32 2, %v2555
    %v2557 = vrot.slane %v1023, %v2556
    %v2558 = vlaneseq
    %v2559 = vshrl.u32 %v2558, 7
    %v2560 = vsub.s32 3, %v2559
    %v2561 = vrot.slane %v1023, %v2560
    %v2562 = vlaneseq
    %v2563 = vshrl.u32 %v2562, 7
    %v2564 = vsub.s32 4, %v2563
    %v2565 = vrot.slane %v1023, %v2564
    %v2566 = vlaneseq
    %v2567 = vshrl.u32 %v2566, 7
    %v2568 = vsub.s32 5, %v2567
    %v2569 = vrot.slane %v1023, %v2568
    %v2570 = vlaneseq
    %v2571 = vshrl.u32 %v2570, 7
    %v2572 = vsub.s32 6, %v2571
    %v2573 = vrot.slane %v1023, %v2572
    %v2574 = vlaneseq
    %v2575 = vshrl.u32 %v2574, 7
    %v2576 = vsub.s32 7, %v2575
    %v2577 = vrot.slane %v1023, %v2576
    %v2578 = vlaneseq
    %v2579 = vshrl.u32 %v2578, 7
    %v2580 = vsub.s32 0, %v2579
    %v2581 = vrot.slane %v1025, %v2580
    %v2582 = vlaneseq
    %v2583 = vshrl.u32 %v2582, 7
    %v2584 = vsub.s32 1, %v2583
    %v2585 = vrot.slane %v1025, %v2584
    %v2586 = vlaneseq
    %v2587 = vshrl.u32 %v2586, 7
    %v2588 = vsub.s32 2, %v2587
    %v2589 = vrot.slane %v1025, %v2588
    %v2590 = vlaneseq
    %v2591 = vshrl.u32 %v2590, 7
    %v2592 = vsub.s32 3, %v2591
    %v2593 = vrot.slane %v1025, %v2592
    %v2594 = vlaneseq
    %v2595 = vshrl.u32 %v2594, 7
    %v2596 = vsub.s32 4, %v2595
    %v2597 = vrot.slane %v1025, %v2596
    %v2598 = vlaneseq
    %v2599 = vshrl.u32 %v2598, 7
    %v2600 = vsub.s32 5, %v2599
    %v2601 = vrot.slane %v1025, %v2600
    %v2602 = vlaneseq
    %v2603 = vshrl.u32 %v2602, 7
    %v2604 = vsub.s32 6, %v2603
    %v2605 = vrot.slane %v1025, %v2604
    %v2606 = vlaneseq
    %v2607 = vshrl.u32 %v2606, 7
    %v2608 = vsub.s32 7, %v2607
    %v2609 = vrot.slane %v1025, %v2608
    %v2610 = vcombine.low %v1077, %v1081
    %v2611 = vcombine.low %v1085, %v1089
    %v2612 = vcombine.low %v1093, %v1097
    %v2613 = vcombine.low %v1101, %v1105
    %v2615 = vunpack.c.l.s4 1966171168
    %v2616 = vunpack.c.0.s8 %v2615
    %v2617 = vlaneseq
    %v2618 = vshrl.u32 %v2617, 7
    %v2619 = vsub.s32 %v2616, %v2618
    %v2620 = vrot.slane %v2610, %v2619
    %v2622 = vunpack.c.l.s4 1966171168
    %v2623 = vunpack.c.0.s8 %v2622
    %v2624 = vlaneseq
    %v2625 = vshrl.u32 %v2624, 7
    %v2626 = vsub.s32 %v2623, %v2625
    %v2627 = vrot.slane %v2611, %v2626
    %v2629 = vunpack.c.l.s4 1966171168
    %v2630 = vunpack.c.0.s8 %v2629
    %v2631 = vlaneseq
    %v2632 = vshrl.u32 %v2631, 7
    %v2633 = vsub.s32 %v2630, %v2632
    %v2634 = vrot.slane %v2612, %v2633
    %v2636 = vunpack.c.l.s4 1966171168
    %v2637 = vunpack.c.0.s8 %v2636
    %v2638 = vlaneseq
    %v2639 = vshrl.u32 %v2638, 7
    %v2640 = vsub.s32 %v2637, %v2639
    %v2641 = vrot.slane %v2613, %v2640
    %v2642 = vcombine.low %v2620, %v2627
    %v2643 = vcombine.low %v2634, %v2641
    %v2645 = vunpack.c.l.s4 1966171168
    %v2646 = vunpack.c.0.s8 %v2645
    %v2647 = vlaneseq
    %v2648 = vshrl.u32 %v2647, 7
    %v2649 = vsub.s32 %v2646, %v2648
    %v2650 = vrot.slane %v2642, %v2649
    %v2652 = vunpack.c.l.s4 1966171168
    %v2653 = vunpack.c.0.s8 %v2652
    %v2654 = vlaneseq
    %v2655 = vshrl.u32 %v2654, 7
    %v2656 = vsub.s32 %v2653, %v2655
    %v2657 = vrot.slane %v2643, %v2656
    %v2658 = vcombine.low %v2650, %v2657
    %v2659 = vcombine.low %v1109, %v1113
    %v2660 = vcombine.low %v1117, %v1121
    %v2661 = vcombine.low %v1125, %v1129
    %v2662 = vcombine.low %v1133, %v1137
    %v2664 = vunpack.c.l.s4 1966171168
    %v2665 = vunpack.c.0.s8 %v2664
    %v2666 = vlaneseq
    %v2667 = vshrl.u32 %v2666, 7
    %v2668 = vsub.s32 %v2665, %v2667
    %v2669 = vrot.slane %v2659, %v2668
    %v2671 = vunpack.c.l.s4 1966171168
    %v2672 = vunpack.c.0.s8 %v2671
    %v2673 = vlaneseq
    %v2674 = vshrl.u32 %v2673, 7
    %v2675 = vsub.s32 %v2672, %v2674
    %v2676 = vrot.slane %v2660, %v2675
    %v2678 = vunpack.c.l.s4 1966171168
    %v2679 = vunpack.c.0.s8 %v2678
    %v2680 = vlaneseq
    %v2681 = vshrl.u32 %v2680, 7
    %v2682 = vsub.s32 %v2679, %v2681
    %v2683 = vrot.slane %v2661, %v2682
    %v2685 = vunpack.c.l.s4 1966171168
    %v2686 = vunpack.c.0.s8 %v2685
    %v2687 = vlaneseq
    %v2688 = vshrl.u32 %v2687, 7
    %v2689 = vsub.s32 %v2686, %v2688
    %v2690 = vrot.slane %v2662, %v2689
    %v2691 = vcombine.low %v2669, %v2676
    %v2692 = vcombine.low %v2683, %v2690
    %v2694 = vunpack.c.l.s4 1966171168
    %v2695 = vunpack.c.0.s8 %v2694
    %v2696 = vlaneseq
    %v2697 = vshrl.u32 %v2696, 7
    %v2698 = vsub.s32 %v2695, %v2697
    %v2699 = vrot.slane %v2691, %v2698
    %v2701 = vunpack.c.l.s4 1966171168
    %v2702 = vunpack.c.0.s8 %v2701
    %v2703 = vlaneseq
    %v2704 = vshrl.u32 %v2703, 7
    %v2705 = vsub.s32 %v2702, %v2704
    %v2706 = vrot.slane %v2692, %v2705
    %v2707 = vcombine.low %v2699, %v2706
    %v2708 = vcombine.low %v1141, %v1145
    %v2709 = vcombine.low %v1149, %v1153
    %v2710 = vcombine.low %v1157, %v1161
    %v2711 = vcombine.low %v1165, %v1169
    %v2713 = vunpack.c.l.s4 1966171168
    %v2714 = vunpack.c.0.s8 %v2713
    %v2715 = vlaneseq
    %v2716 = vshrl.u32 %v2715, 7
    %v2717 = vsub.s32 %v2714, %v2716
    %v2718 = vrot.slane %v2708, %v2717
    %v2720 = vunpack.c.l.s4 1966171168
    %v2721 = vunpack.c.0.s8 %v2720
    %v2722 = vlaneseq
    %v2723 = vshrl.u32 %v2722, 7
    %v2724 = vsub.s32 %v2721, %v2723
    %v2725 = vrot.slane %v2709, %v2724
    %v2727 = vunpack.c.l.s4 1966171168
    %v2728 = vunpack.c.0.s8 %v2727
    %v2729 = vlaneseq
    %v2730 = vshrl.u32 %v2729, 7
    %v2731 = vsub.s32 %v2728, %v2730
    %v2732 = vrot.slane %v2710, %v2731
    %v2734 = vunpack.c.l.s4 1966171168
    %v2735 = vunpack.c.0.s8 %v2734
    %v2736 = vlaneseq
    %v2737 = vshrl.u32 %v2736, 7
    %v2738 = vsub.s32 %v2735, %v2737
    %v2739 = vrot.slane %v2711, %v2738
    %v2740 = vcombine.low %v2718, %v2725
    %v2741 = vcombine.low %v2732, %v2739
    %v2743 = vunpack.c.l.s4 1966171168
    %v2744 = vunpack.c.0.s8 %v2743
    %v2745 = vlaneseq
    %v2746 = vshrl.u32 %v2745, 7
    %v2747 = vsub.s32 %v2744, %v2746
    %v2748 = vrot.slane %v2740, %v2747
    %v2750 = vunpack.c.l.s4 1966171168
    %v2751 = vunpack.c.0.s8 %v2750
    %v2752 = vlaneseq
    %v2753 = vshrl.u32 %v2752, 7
    %v2754 = vsub.s32 %v2751, %v2753
    %v2755 = vrot.slane %v2741, %v2754
    %v2756 = vcombine.low %v2748, %v2755
    %v2757 = vcombine.low %v1173, %v1177
    %v2758 = vcombine.low %v1181, %v1185
    %v2759 = vcombine.low %v1189, %v1193
    %v2760 = vcombine.low %v1197, %v1201
    %v2762 = vunpack.c.l.s4 1966171168
    %v2763 = vunpack.c.0.s8 %v2762
    %v2764 = vlaneseq
    %v2765 = vshrl.u32 %v2764, 7
    %v2766 = vsub.s32 %v2763, %v2765
    %v2767 = vrot.slane %v2757, %v2766
    %v2769 = vunpack.c.l.s4 1966171168
    %v2770 = vunpack.c.0.s8 %v2769
    %v2771 = vlaneseq
    %v2772 = vshrl.u32 %v2771, 7
    %v2773 = vsub.s32 %v2770, %v2772
    %v2774 = vrot.slane %v2758, %v2773
    %v2776 = vunpack.c.l.s4 1966171168
    %v2777 = vunpack.c.0.s8 %v2776
    %v2778 = vlaneseq
    %v2779 = vshrl.u32 %v2778, 7
    %v2780 = vsub.s32 %v2777, %v2779
    %v2781 = vrot.slane %v2759, %v2780
    %v2783 = vunpack.c.l.s4 1966171168
    %v2784 = vunpack.c.0.s8 %v2783
    %v2785 = vlaneseq
    %v2786 = vshrl.u32 %v2785, 7
    %v2787 = vsub.s32 %v2784, %v2786
    %v2788 = vrot.slane %v2760, %v2787
    %v2789 = vcombine.low %v2767, %v2774
    %v2790 = vcombine.low %v2781, %v2788
    %v2792 = vunpack.c.l.s4 1966171168
    %v2793 = vunpack.c.0.s8 %v2792
    %v2794 = vlaneseq
    %v2795 = vshrl.u32 %v2794, 7
    %v2796 = vsub.s32 %v2793, %v2795
    %v2797 = vrot.slane %v2789, %v2796
    %v2799 = vunpack.c.l.s4 1966171168
    %v2800 = vunpack.c.0.s8 %v2799
    %v2801 = vlaneseq
    %v2802 = vshrl.u32 %v2801, 7
    %v2803 = vsub.s32 %v2800, %v2802
    %v2804 = vrot.slane %v2790, %v2803
    %v2805 = vcombine.low %v2797, %v2804
    %v2806 = vcombine.low %v1205, %v1209
    %v2807 = vcombine.low %v1213, %v1217
    %v2808 = vcombine.low %v1221, %v1225
    %v2809 = vcombine.low %v1229, %v1233
    %v2811 = vunpack.c.l.s4 1966171168
    %v2812 = vunpack.c.0.s8 %v2811
    %v2813 = vlaneseq
    %v2814 = vshrl.u32 %v2813, 7
    %v2815 = vsub.s32 %v2812, %v2814
    %v2816 = vrot.slane %v2806, %v2815
    %v2818 = vunpack.c.l.s4 1966171168
    %v2819 = vunpack.c.0.s8 %v2818
    %v2820 = vlaneseq
    %v2821 = vshrl.u32 %v2820, 7
    %v2822 = vsub.s32 %v2819, %v2821
    %v2823 = vrot.slane %v2807, %v2822
    %v2825 = vunpack.c.l.s4 1966171168
    %v2826 = vunpack.c.0.s8 %v2825
    %v2827 = vlaneseq
    %v2828 = vshrl.u32 %v2827, 7
    %v2829 = vsub.s32 %v2826, %v2828
    %v2830 = vrot.slane %v2808, %v2829
    %v2832 = vunpack.c.l.s4 1966171168
    %v2833 = vunpack.c.0.s8 %v2832
    %v2834 = vlaneseq
    %v2835 = vshrl.u32 %v2834, 7
    %v2836 = vsub.s32 %v2833, %v2835
    %v2837 = vrot.slane %v2809, %v2836
    %v2838 = vcombine.low %v2816, %v2823
    %v2839 = vcombine.low %v2830, %v2837
    %v2841 = vunpack.c.l.s4 1966171168
    %v2842 = vunpack.c.0.s8 %v2841
    %v2843 = vlaneseq
    %v2844 = vshrl.u32 %v2843, 7
    %v2845 = vsub.s32 %v2842, %v2844
    %v2846 = vrot.slane %v2838, %v2845
    %v2848 = vunpack.c.l.s4 1966171168
    %v2849 = vunpack.c.0.s8 %v2848
    %v2850 = vlaneseq
    %v2851 = vshrl.u32 %v2850, 7
    %v2852 = vsub.s32 %v2849, %v2851
    %v2853 = vrot.slane %v2839, %v2852
    %v2854 = vcombine.low %v2846, %v2853
    %v2855 = vcombine.low %v1237, %v1241
    %v2856 = vcombine.low %v1245, %v1249
    %v2857 = vcombine.low %v1253, %v1257
    %v2858 = vcombine.low %v1261, %v1265
    %v2860 = vunpack.c.l.s4 1966171168
    %v2861 = vunpack.c.0.s8 %v2860
    %v2862 = vlaneseq
    %v2863 = vshrl.u32 %v2862, 7
    %v2864 = vsub.s32 %v2861, %v2863
    %v2865 = vrot.slane %v2855, %v2864
    %v2867 = vunpack.c.l.s4 1966171168
    %v2868 = vunpack.c.0.s8 %v2867
    %v2869 = vlaneseq
    %v2870 = vshrl.u32 %v2869, 7
    %v2871 = vsub.s32 %v2868, %v2870
    %v2872 = vrot.slane %v2856, %v2871
    %v2874 = vunpack.c.l.s4 1966171168
    %v2875 = vunpack.c.0.s8 %v2874
    %v2876 = vlaneseq
    %v2877 = vshrl.u32 %v2876, 7
    %v2878 = vsub.s32 %v2875, %v2877
    %v2879 = vrot.slane %v2857, %v2878
    %v2881 = vunpack.c.l.s4 1966171168
    %v2882 = vunpack.c.0.s8 %v2881
    %v2883 = vlaneseq
    %v2884 = vshrl.u32 %v2883, 7
    %v2885 = vsub.s32 %v2882, %v2884
    %v2886 = vrot.slane %v2858, %v2885
    %v2887 = vcombine.low %v2865, %v2872
    %v2888 = vcombine.low %v2879, %v2886
    %v2890 = vunpack.c.l.s4 1966171168
    %v2891 = vunpack.c.0.s8 %v2890
    %v2892 = vlaneseq
    %v2893 = vshrl.u32 %v2892, 7
    %v2894 = vsub.s32 %v2891, %v2893
    %v2895 = vrot.slane %v2887, %v2894
    %v2897 = vunpack.c.l.s4 1966171168
    %v2898 = vunpack.c.0.s8 %v2897
    %v2899 = vlaneseq
    %v2900 = vshrl.u32 %v2899, 7
    %v2901 = vsub.s32 %v2898, %v2900
    %v2902 = vrot.slane %v2888, %v2901
    %v2903 = vcombine.low %v2895, %v2902
    %v2904 = vcombine.low %v1269, %v1273
    %v2905 = vcombine.low %v1277, %v1281
    %v2906 = vcombine.low %v1285, %v1289
    %v2907 = vcombine.low %v1293, %v1297
    %v2909 = vunpack.c.l.s4 1966171168
    %v2910 = vunpack.c.0.s8 %v2909
    %v2911 = vlaneseq
    %v2912 = vshrl.u32 %v2911, 7
    %v2913 = vsub.s32 %v2910, %v2912
    %v2914 = vrot.slane %v2904, %v2913
    %v2916 = vunpack.c.l.s4 1966171168
    %v2917 = vunpack.c.0.s8 %v2916
    %v2918 = vlaneseq
    %v2919 = vshrl.u32 %v2918, 7
    %v2920 = vsub.s32 %v2917, %v2919
    %v2921 = vrot.slane %v2905, %v2920
    %v2923 = vunpack.c.l.s4 1966171168
    %v2924 = vunpack.c.0.s8 %v2923
    %v2925 = vlaneseq
    %v2926 = vshrl.u32 %v2925, 7
    %v2927 = vsub.s32 %v2924, %v2926
    %v2928 = vrot.slane %v2906, %v2927
    %v2930 = vunpack.c.l.s4 1966171168
    %v2931 = vunpack.c.0.s8 %v2930
    %v2932 = vlaneseq
    %v2933 = vshrl.u32 %v2932, 7
    %v2934 = vsub.s32 %v2931, %v2933
    %v2935 = vrot.slane %v2907, %v2934
    %v2936 = vcombine.low %v2914, %v2921
    %v2937 = vcombine.low %v2928, %v2935
    %v2939 = vunpack.c.l.s4 1966171168
    %v2940 = vunpack.c.0.s8 %v2939
    %v2941 = vlaneseq
    %v2942 = vshrl.u32 %v2941, 7
    %v2943 = vsub.s32 %v2940, %v2942
    %v2944 = vrot.slane %v2936, %v2943
    %v2946 = vunpack.c.l.s4 1966171168
    %v2947 = vunpack.c.0.s8 %v2946
    %v2948 = vlaneseq
    %v2949 = vshrl.u32 %v2948, 7
    %v2950 = vsub.s32 %v2947, %v2949
    %v2951 = vrot.slane %v2937, %v2950
    %v2952 = vcombine.low %v2944, %v2951
    %v2953 = vcombine.low %v1301, %v1305
    %v2954 = vcombine.low %v1309, %v1313
    %v2955 = vcombine.low %v1317, %v1321
    %v2956 = vcombine.low %v1325, %v1329
    %v2958 = vunpack.c.l.s4 1966171168
    %v2959 = vunpack.c.0.s8 %v2958
    %v2960 = vlaneseq
    %v2961 = vshrl.u32 %v2960, 7
    %v2962 = vsub.s32 %v2959, %v2961
    %v2963 = vrot.slane %v2953, %v2962
    %v2965 = vunpack.c.l.s4 1966171168
    %v2966 = vunpack.c.0.s8 %v2965
    %v2967 = vlaneseq
    %v2968 = vshrl.u32 %v2967, 7
    %v2969 = vsub.s32 %v2966, %v2968
    %v2970 = vrot.slane %v2954, %v2969
    %v2972 = vunpack.c.l.s4 1966171168
    %v2973 = vunpack.c.0.s8 %v2972
    %v2974 = vlaneseq
    %v2975 = vshrl.u32 %v2974, 7
    %v2976 = vsub.s32 %v2973, %v2975
    %v2977 = vrot.slane %v2955, %v2976
    %v2979 = vunpack.c.l.s4 1966171168
    %v2980 = vunpack.c.0.s8 %v2979
    %v2981 = vlaneseq
    %v2982 = vshrl.u32 %v2981, 7
    %v2983 = vsub.s32 %v2980, %v2982
    %v2984 = vrot.slane %v2956, %v2983
    %v2985 = vcombine.low %v2963, %v2970
    %v2986 = vcombine.low %v2977, %v2984
    %v2988 = vunpack.c.l.s4 1966171168
    %v2989 = vunpack.c.0.s8 %v2988
    %v2990 = vlaneseq
    %v2991 = vshrl.u32 %v2990, 7
    %v2992 = vsub.s32 %v2989, %v2991
    %v2993 = vrot.slane %v2985, %v2992
    %v2995 = vunpack.c.l.s4 1966171168
    %v2996 = vunpack.c.0.s8 %v2995
    %v2997 = vlaneseq
    %v2998 = vshrl.u32 %v2997, 7
    %v2999 = vsub.s32 %v2996, %v2998
    %v3000 = vrot.slane %v2986, %v2999
    %v3001 = vcombine.low %v2993, %v3000
    %v3002 = vcombine.low %v1333, %v1337
    %v3003 = vcombine.low %v1341, %v1345
    %v3004 = vcombine.low %v1349, %v1353
    %v3005 = vcombine.low %v1357, %v1361
    %v3007 = vunpack.c.l.s4 1966171168
    %v3008 = vunpack.c.0.s8 %v3007
    %v3009 = vlaneseq
    %v3010 = vshrl.u32 %v3009, 7
    %v3011 = vsub.s32 %v3008, %v3010
    %v3012 = vrot.slane %v3002, %v3011
    %v3014 = vunpack.c.l.s4 1966171168
    %v3015 = vunpack.c.0.s8 %v3014
    %v3016 = vlaneseq
    %v3017 = vshrl.u32 %v3016, 7
    %v3018 = vsub.s32 %v3015, %v3017
    %v3019 = vrot.slane %v3003, %v3018
    %v3021 = vunpack.c.l.s4 1966171168
    %v3022 = vunpack.c.0.s8 %v3021
    %v3023 = vlaneseq
    %v3024 = vshrl.u32 %v3023, 7
    %v3025 = vsub.s32 %v3022, %v3024
    %v3026 = vrot.slane %v3004, %v3025
    %v3028 = vunpack.c.l.s4 1966171168
    %v3029 = vunpack.c.0.s8 %v3028
    %v3030 = vlaneseq
    %v3031 = vshrl.u32 %v3030, 7
    %v3032 = vsub.s32 %v3029, %v3031
    %v3033 = vrot.slane %v3005, %v3032
    %v3034 = vcombine.low %v3012, %v3019
    %v3035 = vcombine.low %v3026, %v3033
    %v3037 = vunpack.c.l.s4 1966171168
    %v3038 = vunpack.c.0.s8 %v3037
    %v3039 = vlaneseq
    %v3040 = vshrl.u32 %v3039, 7
    %v3041 = vsub.s32 %v3038, %v3040
    %v3042 = vrot.slane %v3034, %v3041
    %v3044 = vunpack.c.l.s4 1966171168
    %v3045 = vunpack.c.0.s8 %v3044
    %v3046 = vlaneseq
    %v3047 = vshrl.u32 %v3046, 7
    %v3048 = vsub.s32 %v3045, %v3047
    %v3049 = vrot.slane %v3035, %v3048
    %v3050 = vcombine.low %v3042, %v3049
    %v3051 = vcombine.low %v1365, %v1369
    %v3052 = vcombine.low %v1373, %v1377
    %v3053 = vcombine.low %v1381, %v1385
    %v3054 = vcombine.low %v1389, %v1393
    %v3056 = vunpack.c.l.s4 1966171168
    %v3057 = vunpack.c.0.s8 %v3056
    %v3058 = vlaneseq
    %v3059 = vshrl.u32 %v3058, 7
    %v3060 = vsub.s32 %v3057, %v3059
    %v3061 = vrot.slane %v3051, %v3060
    %v3063 = vunpack.c.l.s4 1966171168
    %v3064 = vunpack.c.0.s8 %v3063
    %v3065 = vlaneseq
    %v3066 = vshrl.u32 %v3065, 7
    %v3067 = vsub.s32 %v3064, %v3066
    %v3068 = vrot.slane %v3052, %v3067
    %v3070 = vunpack.c.l.s4 1966171168
    %v3071 = vunpack.c.0.s8 %v3070
    %v3072 = vlaneseq
    %v3073 = vshrl.u32 %v3072, 7
    %v3074 = vsub.s32 %v3071, %v3073
    %v3075 = vrot.slane %v3053, %v3074
    %v3077 = vunpack.c.l.s4 1966171168
    %v3078 = vunpack.c.0.s8 %v3077
    %v3079 = vlaneseq
    %v3080 = vshrl.u32 %v3079, 7
    %v3081 = vsub.s32 %v3078, %v3080
    %v3082 = vrot.slane %v3054, %v3081
    %v3083 = vcombine.low %v3061, %v3068
    %v3084 = vcombine.low %v3075, %v3082
    %v3086 = vunpack.c.l.s4 1966171168
    %v3087 = vunpack.c.0.s8 %v3086
    %v3088 = vlaneseq
    %v3089 = vshrl.u32 %v3088, 7
    %v3090 = vsub.s32 %v3087, %v3089
    %v3091 = vrot.slane %v3083, %v3090
    %v3093 = vunpack.c.l.s4 1966171168
    %v3094 = vunpack.c.0.s8 %v3093
    %v3095 = vlaneseq
    %v3096 = vshrl.u32 %v3095, 7
    %v3097 = vsub.s32 %v3094, %v3096
    %v3098 = vrot.slane %v3084, %v3097
    %v3099 = vcombine.low %v3091, %v3098
    %v3100 = vcombine.low %v1397, %v1401
    %v3101 = vcombine.low %v1405, %v1409
    %v3102 = vcombine.low %v1413, %v1417
    %v3103 = vcombine.low %v1421, %v1425
    %v3105 = vunpack.c.l.s4 1966171168
    %v3106 = vunpack.c.0.s8 %v3105
    %v3107 = vlaneseq
    %v3108 = vshrl.u32 %v3107, 7
    %v3109 = vsub.s32 %v3106, %v3108
    %v3110 = vrot.slane %v3100, %v3109
    %v3112 = vunpack.c.l.s4 1966171168
    %v3113 = vunpack.c.0.s8 %v3112
    %v3114 = vlaneseq
    %v3115 = vshrl.u32 %v3114, 7
    %v3116 = vsub.s32 %v3113, %v3115
    %v3117 = vrot.slane %v3101, %v3116
    %v3119 = vunpack.c.l.s4 1966171168
    %v3120 = vunpack.c.0.s8 %v3119
    %v3121 = vlaneseq
    %v3122 = vshrl.u32 %v3121, 7
    %v3123 = vsub.s32 %v3120, %v3122
    %v3124 = vrot.slane %v3102, %v3123
    %v3126 = vunpack.c.l.s4 1966171168
    %v3127 = vunpack.c.0.s8 %v3126
    %v3128 = vlaneseq
    %v3129 = vshrl.u32 %v3128, 7
    %v3130 = vsub.s32 %v3127, %v3129
    %v3131 = vrot.slane %v3103, %v3130
    %v3132 = vcombine.low %v3110, %v3117
    %v3133 = vcombine.low %v3124, %v3131
    %v3135 = vunpack.c.l.s4 1966171168
    %v3136 = vunpack.c.0.s8 %v3135
    %v3137 = vlaneseq
    %v3138 = vshrl.u32 %v3137, 7
    %v3139 = vsub.s32 %v3136, %v3138
    %v3140 = vrot.slane %v3132, %v3139
    %v3142 = vunpack.c.l.s4 1966171168
    %v3143 = vunpack.c.0.s8 %v3142
    %v3144 = vlaneseq
    %v3145 = vshrl.u32 %v3144, 7
    %v3146 = vsub.s32 %v3143, %v3145
    %v3147 = vrot.slane %v3133, %v3146
    %v3148 = vcombine.low %v3140, %v3147
    %v3149 = vcombine.low %v1429, %v1433
    %v3150 = vcombine.low %v1437, %v1441
    %v3151 = vcombine.low %v1445, %v1449
    %v3152 = vcombine.low %v1453, %v1457
    %v3154 = vunpack.c.l.s4 1966171168
    %v3155 = vunpack.c.0.s8 %v3154
    %v3156 = vlaneseq
    %v3157 = vshrl.u32 %v3156, 7
    %v3158 = vsub.s32 %v3155, %v3157
    %v3159 = vrot.slane %v3149, %v3158
    %v3161 = vunpack.c.l.s4 1966171168
    %v3162 = vunpack.c.0.s8 %v3161
    %v3163 = vlaneseq
    %v3164 = vshrl.u32 %v3163, 7
    %v3165 = vsub.s32 %v3162, %v3164
    %v3166 = vrot.slane %v3150, %v3165
    %v3168 = vunpack.c.l.s4 1966171168
    %v3169 = vunpack.c.0.s8 %v3168
    %v3170 = vlaneseq
    %v3171 = vshrl.u32 %v3170, 7
    %v3172 = vsub.s32 %v3169, %v3171
    %v3173 = vrot.slane %v3151, %v3172
    %v3175 = vunpack.c.l.s4 1966171168
    %v3176 = vunpack.c.0.s8 %v3175
    %v3177 = vlaneseq
    %v3178 = vshrl.u32 %v3177, 7
    %v3179 = vsub.s32 %v3176, %v3178
    %v3180 = vrot.slane %v3152, %v3179
    %v3181 = vcombine.low %v3159, %v3166
    %v3182 = vcombine.low %v3173, %v3180
    %v3184 = vunpack.c.l.s4 1966171168
    %v3185 = vunpack.c.0.s8 %v3184
    %v3186 = vlaneseq
    %v3187 = vshrl.u32 %v3186, 7
    %v3188 = vsub.s32 %v3185, %v3187
    %v3189 = vrot.slane %v3181, %v3188
    %v3191 = vunpack.c.l.s4 1966171168
    %v3192 = vunpack.c.0.s8 %v3191
    %v3193 = vlaneseq
    %v3194 = vshrl.u32 %v3193, 7
    %v3195 = vsub.s32 %v3192, %v3194
    %v3196 = vrot.slane %v3182, %v3195
    %v3197 = vcombine.low %v3189, %v3196
    %v3198 = vcombine.low %v1461, %v1465
    %v3199 = vcombine.low %v1469, %v1473
    %v3200 = vcombine.low %v1477, %v1481
    %v3201 = vcombine.low %v1485, %v1489
    %v3203 = vunpack.c.l.s4 1966171168
    %v3204 = vunpack.c.0.s8 %v3203
    %v3205 = vlaneseq
    %v3206 = vshrl.u32 %v3205, 7
    %v3207 = vsub.s32 %v3204, %v3206
    %v3208 = vrot.slane %v3198, %v3207
    %v3210 = vunpack.c.l.s4 1966171168
    %v3211 = vunpack.c.0.s8 %v3210
    %v3212 = vlaneseq
    %v3213 = vshrl.u32 %v3212, 7
    %v3214 = vsub.s32 %v3211, %v3213
    %v3215 = vrot.slane %v3199, %v3214
    %v3217 = vunpack.c.l.s4 1966171168
    %v3218 = vunpack.c.0.s8 %v3217
    %v3219 = vlaneseq
    %v3220 = vshrl.u32 %v3219, 7
    %v3221 = vsub.s32 %v3218, %v3220
    %v3222 = vrot.slane %v3200, %v3221
    %v3224 = vunpack.c.l.s4 1966171168
    %v3225 = vunpack.c.0.s8 %v3224
    %v3226 = vlaneseq
    %v3227 = vshrl.u32 %v3226, 7
    %v3228 = vsub.s32 %v3225, %v3227
    %v3229 = vrot.slane %v3201, %v3228
    %v3230 = vcombine.low %v3208, %v3215
    %v3231 = vcombine.low %v3222, %v3229
    %v3233 = vunpack.c.l.s4 1966171168
    %v3234 = vunpack.c.0.s8 %v3233
    %v3235 = vlaneseq
    %v3236 = vshrl.u32 %v3235, 7
    %v3237 = vsub.s32 %v3234, %v3236
    %v3238 = vrot.slane %v3230, %v3237
    %v3240 = vunpack.c.l.s4 1966171168
    %v3241 = vunpack.c.0.s8 %v3240
    %v3242 = vlaneseq
    %v3243 = vshrl.u32 %v3242, 7
    %v3244 = vsub.s32 %v3241, %v3243
    %v3245 = vrot.slane %v3231, %v3244
    %v3246 = vcombine.low %v3238, %v3245
    %v3247 = vcombine.low %v1493, %v1497
    %v3248 = vcombine.low %v1501, %v1505
    %v3249 = vcombine.low %v1509, %v1513
    %v3250 = vcombine.low %v1517, %v1521
    %v3252 = vunpack.c.l.s4 1966171168
    %v3253 = vunpack.c.0.s8 %v3252
    %v3254 = vlaneseq
    %v3255 = vshrl.u32 %v3254, 7
    %v3256 = vsub.s32 %v3253, %v3255
    %v3257 = vrot.slane %v3247, %v3256
    %v3259 = vunpack.c.l.s4 1966171168
    %v3260 = vunpack.c.0.s8 %v3259
    %v3261 = vlaneseq
    %v3262 = vshrl.u32 %v3261, 7
    %v3263 = vsub.s32 %v3260, %v3262
    %v3264 = vrot.slane %v3248, %v3263
    %v3266 = vunpack.c.l.s4 1966171168
    %v3267 = vunpack.c.0.s8 %v3266
    %v3268 = vlaneseq
    %v3269 = vshrl.u32 %v3268, 7
    %v3270 = vsub.s32 %v3267, %v3269
    %v3271 = vrot.slane %v3249, %v3270
    %v3273 = vunpack.c.l.s4 1966171168
    %v3274 = vunpack.c.0.s8 %v3273
    %v3275 = vlaneseq
    %v3276 = vshrl.u32 %v3275, 7
    %v3277 = vsub.s32 %v3274, %v3276
    %v3278 = vrot.slane %v3250, %v3277
    %v3279 = vcombine.low %v3257, %v3264
    %v3280 = vcombine.low %v3271, %v3278
    %v3282 = vunpack.c.l.s4 1966171168
    %v3283 = vunpack.c.0.s8 %v3282
    %v3284 = vlaneseq
    %v3285 = vshrl.u32 %v3284, 7
    %v3286 = vsub.s32 %v3283, %v3285
    %v3287 = vrot.slane %v3279, %v3286
    %v3289 = vunpack.c.l.s4 1966171168
    %v3290 = vunpack.c.0.s8 %v3289
    %v3291 = vlaneseq
    %v3292 = vshrl.u32 %v3291, 7
    %v3293 = vsub.s32 %v3290, %v3292
    %v3294 = vrot.slane %v3280, %v3293
    %v3295 = vcombine.low %v3287, %v3294
    %v3296 = vcombine.low %v1525, %v1529
    %v3297 = vcombine.low %v1533, %v1537
    %v3298 = vcombine.low %v1541, %v1545
    %v3299 = vcombine.low %v1549, %v1553
    %v3301 = vunpack.c.l.s4 1966171168
    %v3302 = vunpack.c.0.s8 %v3301
    %v3303 = vlaneseq
    %v3304 = vshrl.u32 %v3303, 7
    %v3305 = vsub.s32 %v3302, %v3304
    %v3306 = vrot.slane %v3296, %v3305
    %v3308 = vunpack.c.l.s4 1966171168
    %v3309 = vunpack.c.0.s8 %v3308
    %v3310 = vlaneseq
    %v3311 = vshrl.u32 %v3310, 7
    %v3312 = vsub.s32 %v3309, %v3311
    %v3313 = vrot.slane %v3297, %v3312
    %v3315 = vunpack.c.l.s4 1966171168
    %v3316 = vunpack.c.0.s8 %v3315
    %v3317 = vlaneseq
    %v3318 = vshrl.u32 %v3317, 7
    %v3319 = vsub.s32 %v3316, %v3318
    %v3320 = vrot.slane %v3298, %v3319
    %v3322 = vunpack.c.l.s4 1966171168
    %v3323 = vunpack.c.0.s8 %v3322
    %v3324 = vlaneseq
    %v3325 = vshrl.u32 %v3324, 7
    %v3326 = vsub.s32 %v3323, %v3325
    %v3327 = vrot.slane %v3299, %v3326
    %v3328 = vcombine.low %v3306, %v3313
    %v3329 = vcombine.low %v3320, %v3327
    %v3331 = vunpack.c.l.s4 1966171168
    %v3332 = vunpack.c.0.s8 %v3331
    %v3333 = vlaneseq
    %v3334 = vshrl.u32 %v3333, 7
    %v3335 = vsub.s32 %v3332, %v3334
    %v3336 = vrot.slane %v3328, %v3335
    %v3338 = vunpack.c.l.s4 1966171168
    %v3339 = vunpack.c.0.s8 %v3338
    %v3340 = vlaneseq
    %v3341 = vshrl.u32 %v3340, 7
    %v3342 = vsub.s32 %v3339, %v3341
    %v3343 = vrot.slane %v3329, %v3342
    %v3344 = vcombine.low %v3336, %v3343
    %v3345 = vcombine.low %v1557, %v1561
    %v3346 = vcombine.low %v1565, %v1569
    %v3347 = vcombine.low %v1573, %v1577
    %v3348 = vcombine.low %v1581, %v1585
    %v3350 = vunpack.c.l.s4 1966171168
    %v3351 = vunpack.c.0.s8 %v3350
    %v3352 = vlaneseq
    %v3353 = vshrl.u32 %v3352, 7
    %v3354 = vsub.s32 %v3351, %v3353
    %v3355 = vrot.slane %v3345, %v3354
    %v3357 = vunpack.c.l.s4 1966171168
    %v3358 = vunpack.c.0.s8 %v3357
    %v3359 = vlaneseq
    %v3360 = vshrl.u32 %v3359, 7
    %v3361 = vsub.s32 %v3358, %v3360
    %v3362 = vrot.slane %v3346, %v3361
    %v3364 = vunpack.c.l.s4 1966171168
    %v3365 = vunpack.c.0.s8 %v3364
    %v3366 = vlaneseq
    %v3367 = vshrl.u32 %v3366, 7
    %v3368 = vsub.s32 %v3365, %v3367
    %v3369 = vrot.slane %v3347, %v3368
    %v3371 = vunpack.c.l.s4 1966171168
    %v3372 = vunpack.c.0.s8 %v3371
    %v3373 = vlaneseq
    %v3374 = vshrl.u32 %v3373, 7
    %v3375 = vsub.s32 %v3372, %v3374
    %v3376 = vrot.slane %v3348, %v3375
    %v3377 = vcombine.low %v3355, %v3362
    %v3378 = vcombine.low %v3369, %v3376
    %v3380 = vunpack.c.l.s4 1966171168
    %v3381 = vunpack.c.0.s8 %v3380
    %v3382 = vlaneseq
    %v3383 = vshrl.u32 %v3382, 7
    %v3384 = vsub.s32 %v3381, %v3383
    %v3385 = vrot.slane %v3377, %v3384
    %v3387 = vunpack.c.l.s4 1966171168
    %v3388 = vunpack.c.0.s8 %v3387
    %v3389 = vlaneseq
    %v3390 = vshrl.u32 %v3389, 7
    %v3391 = vsub.s32 %v3388, %v3390
    %v3392 = vrot.slane %v3378, %v3391
    %v3393 = vcombine.low %v3385, %v3392
    %v3394 = vcombine.low %v1589, %v1593
    %v3395 = vcombine.low %v1597, %v1601
    %v3396 = vcombine.low %v1605, %v1609
    %v3397 = vcombine.low %v1613, %v1617
    %v3399 = vunpack.c.l.s4 1966171168
    %v3400 = vunpack.c.0.s8 %v3399
    %v3401 = vlaneseq
    %v3402 = vshrl.u32 %v3401, 7
    %v3403 = vsub.s32 %v3400, %v3402
    %v3404 = vrot.slane %v3394, %v3403
    %v3406 = vunpack.c.l.s4 1966171168
    %v3407 = vunpack.c.0.s8 %v3406
    %v3408 = vlaneseq
    %v3409 = vshrl.u32 %v3408, 7
    %v3410 = vsub.s32 %v3407, %v3409
    %v3411 = vrot.slane %v3395, %v3410
    %v3413 = vunpack.c.l.s4 1966171168
    %v3414 = vunpack.c.0.s8 %v3413
    %v3415 = vlaneseq
    %v3416 = vshrl.u32 %v3415, 7
    %v3417 = vsub.s32 %v3414, %v3416
    %v3418 = vrot.slane %v3396, %v3417
    %v3420 = vunpack.c.l.s4 1966171168
    %v3421 = vunpack.c.0.s8 %v3420
    %v3422 = vlaneseq
    %v3423 = vshrl.u32 %v3422, 7
    %v3424 = vsub.s32 %v3421, %v3423
    %v3425 = vrot.slane %v3397, %v3424
    %v3426 = vcombine.low %v3404, %v3411
    %v3427 = vcombine.low %v3418, %v3425
    %v3429 = vunpack.c.l.s4 1966171168
    %v3430 = vunpack.c.0.s8 %v3429
    %v3431 = vlaneseq
    %v3432 = vshrl.u32 %v3431, 7
    %v3433 = vsub.s32 %v3430, %v3432
    %v3434 = vrot.slane %v3426, %v3433
    %v3436 = vunpack.c.l.s4 1966171168
    %v3437 = vunpack.c.0.s8 %v3436
    %v3438 = vlaneseq
    %v3439 = vshrl.u32 %v3438, 7
    %v3440 = vsub.s32 %v3437, %v3439
    %v3441 = vrot.slane %v3427, %v3440
    %v3442 = vcombine.low %v3434, %v3441
    %v3443 = vcombine.low %v1621, %v1625
    %v3444 = vcombine.low %v1629, %v1633
    %v3445 = vcombine.low %v1637, %v1641
    %v3446 = vcombine.low %v1645, %v1649
    %v3448 = vunpack.c.l.s4 1966171168
    %v3449 = vunpack.c.0.s8 %v3448
    %v3450 = vlaneseq
    %v3451 = vshrl.u32 %v3450, 7
    %v3452 = vsub.s32 %v3449, %v3451
    %v3453 = vrot.slane %v3443, %v3452
    %v3455 = vunpack.c.l.s4 1966171168
    %v3456 = vunpack.c.0.s8 %v3455
    %v3457 = vlaneseq
    %v3458 = vshrl.u32 %v3457, 7
    %v3459 = vsub.s32 %v3456, %v3458
    %v3460 = vrot.slane %v3444, %v3459
    %v3462 = vunpack.c.l.s4 1966171168
    %v3463 = vunpack.c.0.s8 %v3462
    %v3464 = vlaneseq
    %v3465 = vshrl.u32 %v3464, 7
    %v3466 = vsub.s32 %v3463, %v3465
    %v3467 = vrot.slane %v3445, %v3466
    %v3469 = vunpack.c.l.s4 1966171168
    %v3470 = vunpack.c.0.s8 %v3469
    %v3471 = vlaneseq
    %v3472 = vshrl.u32 %v3471, 7
    %v3473 = vsub.s32 %v3470, %v3472
    %v3474 = vrot.slane %v3446, %v3473
    %v3475 = vcombine.low %v3453, %v3460
    %v3476 = vcombine.low %v3467, %v3474
    %v3478 = vunpack.c.l.s4 1966171168
    %v3479 = vunpack.c.0.s8 %v3478
    %v3480 = vlaneseq
    %v3481 = vshrl.u32 %v3480, 7
    %v3482 = vsub.s32 %v3479, %v3481
    %v3483 = vrot.slane %v3475, %v3482
    %v3485 = vunpack.c.l.s4 1966171168
    %v3486 = vunpack.c.0.s8 %v3485
    %v3487 = vlaneseq
    %v3488 = vshrl.u32 %v3487, 7
    %v3489 = vsub.s32 %v3486, %v3488
    %v3490 = vrot.slane %v3476, %v3489
    %v3491 = vcombine.low %v3483, %v3490
    %v3492 = vcombine.low %v1653, %v1657
    %v3493 = vcombine.low %v1661, %v1665
    %v3494 = vcombine.low %v1669, %v1673
    %v3495 = vcombine.low %v1677, %v1681
    %v3497 = vunpack.c.l.s4 1966171168
    %v3498 = vunpack.c.0.s8 %v3497
    %v3499 = vlaneseq
    %v3500 = vshrl.u32 %v3499, 7
    %v3501 = vsub.s32 %v3498, %v3500
    %v3502 = vrot.slane %v3492, %v3501
    %v3504 = vunpack.c.l.s4 1966171168
    %v3505 = vunpack.c.0.s8 %v3504
    %v3506 = vlaneseq
    %v3507 = vshrl.u32 %v3506, 7
    %v3508 = vsub.s32 %v3505, %v3507
    %v3509 = vrot.slane %v3493, %v3508
    %v3511 = vunpack.c.l.s4 1966171168
    %v3512 = vunpack.c.0.s8 %v3511
    %v3513 = vlaneseq
    %v3514 = vshrl.u32 %v3513, 7
    %v3515 = vsub.s32 %v3512, %v3514
    %v3516 = vrot.slane %v3494, %v3515
    %v3518 = vunpack.c.l.s4 1966171168
    %v3519 = vunpack.c.0.s8 %v3518
    %v3520 = vlaneseq
    %v3521 = vshrl.u32 %v3520, 7
    %v3522 = vsub.s32 %v3519, %v3521
    %v3523 = vrot.slane %v3495, %v3522
    %v3524 = vcombine.low %v3502, %v3509
    %v3525 = vcombine.low %v3516, %v3523
    %v3527 = vunpack.c.l.s4 1966171168
    %v3528 = vunpack.c.0.s8 %v3527
    %v3529 = vlaneseq
    %v3530 = vshrl.u32 %v3529, 7
    %v3531 = vsub.s32 %v3528, %v3530
    %v3532 = vrot.slane %v3524, %v3531
    %v3534 = vunpack.c.l.s4 1966171168
    %v3535 = vunpack.c.0.s8 %v3534
    %v3536 = vlaneseq
    %v3537 = vshrl.u32 %v3536, 7
    %v3538 = vsub.s32 %v3535, %v3537
    %v3539 = vrot.slane %v3525, %v3538
    %v3540 = vcombine.low %v3532, %v3539
    %v3541 = vcombine.low %v1685, %v1689
    %v3542 = vcombine.low %v1693, %v1697
    %v3543 = vcombine.low %v1701, %v1705
    %v3544 = vcombine.low %v1709, %v1713
    %v3546 = vunpack.c.l.s4 1966171168
    %v3547 = vunpack.c.0.s8 %v3546
    %v3548 = vlaneseq
    %v3549 = vshrl.u32 %v3548, 7
    %v3550 = vsub.s32 %v3547, %v3549
    %v3551 = vrot.slane %v3541, %v3550
    %v3553 = vunpack.c.l.s4 1966171168
    %v3554 = vunpack.c.0.s8 %v3553
    %v3555 = vlaneseq
    %v3556 = vshrl.u32 %v3555, 7
    %v3557 = vsub.s32 %v3554, %v3556
    %v3558 = vrot.slane %v3542, %v3557
    %v3560 = vunpack.c.l.s4 1966171168
    %v3561 = vunpack.c.0.s8 %v3560
    %v3562 = vlaneseq
    %v3563 = vshrl.u32 %v3562, 7
    %v3564 = vsub.s32 %v3561, %v3563
    %v3565 = vrot.slane %v3543, %v3564
    %v3567 = vunpack.c.l.s4 1966171168
    %v3568 = vunpack.c.0.s8 %v3567
    %v3569 = vlaneseq
    %v3570 = vshrl.u32 %v3569, 7
    %v3571 = vsub.s32 %v3568, %v3570
    %v3572 = vrot.slane %v3544, %v3571
    %v3573 = vcombine.low %v3551, %v3558
    %v3574 = vcombine.low %v3565, %v3572
    %v3576 = vunpack.c.l.s4 1966171168
    %v3577 = vunpack.c.0.s8 %v3576
    %v3578 = vlaneseq
    %v3579 = vshrl.u32 %v3578, 7
    %v3580 = vsub.s32 %v3577, %v3579
    %v3581 = vrot.slane %v3573, %v3580
    %v3583 = vunpack.c.l.s4 1966171168
    %v3584 = vunpack.c.0.s8 %v3583
    %v3585 = vlaneseq
    %v3586 = vshrl.u32 %v3585, 7
    %v3587 = vsub.s32 %v3584, %v3586
    %v3588 = vrot.slane %v3574, %v3587
    %v3589 = vcombine.low %v3581, %v3588
    %v3590 = vcombine.low %v1717, %v1721
    %v3591 = vcombine.low %v1725, %v1729
    %v3592 = vcombine.low %v1733, %v1737
    %v3593 = vcombine.low %v1741, %v1745
    %v3595 = vunpack.c.l.s4 1966171168
    %v3596 = vunpack.c.0.s8 %v3595
    %v3597 = vlaneseq
    %v3598 = vshrl.u32 %v3597, 7
    %v3599 = vsub.s32 %v3596, %v3598
    %v3600 = vrot.slane %v3590, %v3599
    %v3602 = vunpack.c.l.s4 1966171168
    %v3603 = vunpack.c.0.s8 %v3602
    %v3604 = vlaneseq
    %v3605 = vshrl.u32 %v3604, 7
    %v3606 = vsub.s32 %v3603, %v3605
    %v3607 = vrot.slane %v3591, %v3606
    %v3609 = vunpack.c.l.s4 1966171168
    %v3610 = vunpack.c.0.s8 %v3609
    %v3611 = vlaneseq
    %v3612 = vshrl.u32 %v3611, 7
    %v3613 = vsub.s32 %v3610, %v3612
    %v3614 = vrot.slane %v3592, %v3613
    %v3616 = vunpack.c.l.s4 1966171168
    %v3617 = vunpack.c.0.s8 %v3616
    %v3618 = vlaneseq
    %v3619 = vshrl.u32 %v3618, 7
    %v3620 = vsub.s32 %v3617, %v3619
    %v3621 = vrot.slane %v3593, %v3620
    %v3622 = vcombine.low %v3600, %v3607
    %v3623 = vcombine.low %v3614, %v3621
    %v3625 = vunpack.c.l.s4 1966171168
    %v3626 = vunpack.c.0.s8 %v3625
    %v3627 = vlaneseq
    %v3628 = vshrl.u32 %v3627, 7
    %v3629 = vsub.s32 %v3626, %v3628
    %v3630 = vrot.slane %v3622, %v3629
    %v3632 = vunpack.c.l.s4 1966171168
    %v3633 = vunpack.c.0.s8 %v3632
    %v3634 = vlaneseq
    %v3635 = vshrl.u32 %v3634, 7
    %v3636 = vsub.s32 %v3633, %v3635
    %v3637 = vrot.slane %v3623, %v3636
    %v3638 = vcombine.low %v3630, %v3637
    %v3639 = vcombine.low %v1749, %v1753
    %v3640 = vcombine.low %v1757, %v1761
    %v3641 = vcombine.low %v1765, %v1769
    %v3642 = vcombine.low %v1773, %v1777
    %v3644 = vunpack.c.l.s4 1966171168
    %v3645 = vunpack.c.0.s8 %v3644
    %v3646 = vlaneseq
    %v3647 = vshrl.u32 %v3646, 7
    %v3648 = vsub.s32 %v3645, %v3647
    %v3649 = vrot.slane %v3639, %v3648
    %v3651 = vunpack.c.l.s4 1966171168
    %v3652 = vunpack.c.0.s8 %v3651
    %v3653 = vlaneseq
    %v3654 = vshrl.u32 %v3653, 7
    %v3655 = vsub.s32 %v3652, %v3654
    %v3656 = vrot.slane %v3640, %v3655
    %v3658 = vunpack.c.l.s4 1966171168
    %v3659 = vunpack.c.0.s8 %v3658
    %v3660 = vlaneseq
    %v3661 = vshrl.u32 %v3660, 7
    %v3662 = vsub.s32 %v3659, %v3661
    %v3663 = vrot.slane %v3641, %v3662
    %v3665 = vunpack.c.l.s4 1966171168
    %v3666 = vunpack.c.0.s8 %v3665
    %v3667 = vlaneseq
    %v3668 = vshrl.u32 %v3667, 7
    %v3669 = vsub.s32 %v3666, %v3668
    %v3670 = vrot.slane %v3642, %v3669
    %v3671 = vcombine.low %v3649, %v3656
    %v3672 = vcombine.low %v3663, %v3670
    %v3674 = vunpack.c.l.s4 1966171168
    %v3675 = vunpack.c.0.s8 %v3674
    %v3676 = vlaneseq
    %v3677 = vshrl.u32 %v3676, 7
    %v3678 = vsub.s32 %v3675, %v3677
    %v3679 = vrot.slane %v3671, %v3678
    %v3681 = vunpack.c.l.s4 1966171168
    %v3682 = vunpack.c.0.s8 %v3681
    %v3683 = vlaneseq
    %v3684 = vshrl.u32 %v3683, 7
    %v3685 = vsub.s32 %v3682, %v3684
    %v3686 = vrot.slane %v3672, %v3685
    %v3687 = vcombine.low %v3679, %v3686
    %v3688 = vcombine.low %v1781, %v1785
    %v3689 = vcombine.low %v1789, %v1793
    %v3690 = vcombine.low %v1797, %v1801
    %v3691 = vcombine.low %v1805, %v1809
    %v3693 = vunpack.c.l.s4 1966171168
    %v3694 = vunpack.c.0.s8 %v3693
    %v3695 = vlaneseq
    %v3696 = vshrl.u32 %v3695, 7
    %v3697 = vsub.s32 %v3694, %v3696
    %v3698 = vrot.slane %v3688, %v3697
    %v3700 = vunpack.c.l.s4 1966171168
    %v3701 = vunpack.c.0.s8 %v3700
    %v3702 = vlaneseq
    %v3703 = vshrl.u32 %v3702, 7
    %v3704 = vsub.s32 %v3701, %v3703
    %v3705 = vrot.slane %v3689, %v3704
    %v3707 = vunpack.c.l.s4 1966171168
    %v3708 = vunpack.c.0.s8 %v3707
    %v3709 = vlaneseq
    %v3710 = vshrl.u32 %v3709, 7
    %v3711 = vsub.s32 %v3708, %v3710
    %v3712 = vrot.slane %v3690, %v3711
    %v3714 = vunpack.c.l.s4 1966171168
    %v3715 = vunpack.c.0.s8 %v3714
    %v3716 = vlaneseq
    %v3717 = vshrl.u32 %v3716, 7
    %v3718 = vsub.s32 %v3715, %v3717
    %v3719 = vrot.slane %v3691, %v3718
    %v3720 = vcombine.low %v3698, %v3705
    %v3721 = vcombine.low %v3712, %v3719
    %v3723 = vunpack.c.l.s4 1966171168
    %v3724 = vunpack.c.0.s8 %v3723
    %v3725 = vlaneseq
    %v3726 = vshrl.u32 %v3725, 7
    %v3727 = vsub.s32 %v3724, %v3726
    %v3728 = vrot.slane %v3720, %v3727
    %v3730 = vunpack.c.l.s4 1966171168
    %v3731 = vunpack.c.0.s8 %v3730
    %v3732 = vlaneseq
    %v3733 = vshrl.u32 %v3732, 7
    %v3734 = vsub.s32 %v3731, %v3733
    %v3735 = vrot.slane %v3721, %v3734
    %v3736 = vcombine.low %v3728, %v3735
    %v3737 = vcombine.low %v1813, %v1817
    %v3738 = vcombine.low %v1821, %v1825
    %v3739 = vcombine.low %v1829, %v1833
    %v3740 = vcombine.low %v1837, %v1841
    %v3742 = vunpack.c.l.s4 1966171168
    %v3743 = vunpack.c.0.s8 %v3742
    %v3744 = vlaneseq
    %v3745 = vshrl.u32 %v3744, 7
    %v3746 = vsub.s32 %v3743, %v3745
    %v3747 = vrot.slane %v3737, %v3746
    %v3749 = vunpack.c.l.s4 1966171168
    %v3750 = vunpack.c.0.s8 %v3749
    %v3751 = vlaneseq
    %v3752 = vshrl.u32 %v3751, 7
    %v3753 = vsub.s32 %v3750, %v3752
    %v3754 = vrot.slane %v3738, %v3753
    %v3756 = vunpack.c.l.s4 1966171168
    %v3757 = vunpack.c.0.s8 %v3756
    %v3758 = vlaneseq
    %v3759 = vshrl.u32 %v3758, 7
    %v3760 = vsub.s32 %v3757, %v3759
    %v3761 = vrot.slane %v3739, %v3760
    %v3763 = vunpack.c.l.s4 1966171168
    %v3764 = vunpack.c.0.s8 %v3763
    %v3765 = vlaneseq
    %v3766 = vshrl.u32 %v3765, 7
    %v3767 = vsub.s32 %v3764, %v3766
    %v3768 = vrot.slane %v3740, %v3767
    %v3769 = vcombine.low %v3747, %v3754
    %v3770 = vcombine.low %v3761, %v3768
    %v3772 = vunpack.c.l.s4 1966171168
    %v3773 = vunpack.c.0.s8 %v3772
    %v3774 = vlaneseq
    %v3775 = vshrl.u32 %v3774, 7
    %v3776 = vsub.s32 %v3773, %v3775
    %v3777 = vrot.slane %v3769, %v3776
    %v3779 = vunpack.c.l.s4 1966171168
    %v3780 = vunpack.c.0.s8 %v3779
    %v3781 = vlaneseq
    %v3782 = vshrl.u32 %v3781, 7
    %v3783 = vsub.s32 %v3780, %v3782
    %v3784 = vrot.slane %v3770, %v3783
    %v3785 = vcombine.low %v3777, %v3784
    %v3786 = vcombine.low %v1845, %v1849
    %v3787 = vcombine.low %v1853, %v1857
    %v3788 = vcombine.low %v1861, %v1865
    %v3789 = vcombine.low %v1869, %v1873
    %v3791 = vunpack.c.l.s4 1966171168
    %v3792 = vunpack.c.0.s8 %v3791
    %v3793 = vlaneseq
    %v3794 = vshrl.u32 %v3793, 7
    %v3795 = vsub.s32 %v3792, %v3794
    %v3796 = vrot.slane %v3786, %v3795
    %v3798 = vunpack.c.l.s4 1966171168
    %v3799 = vunpack.c.0.s8 %v3798
    %v3800 = vlaneseq
    %v3801 = vshrl.u32 %v3800, 7
    %v3802 = vsub.s32 %v3799, %v3801
    %v3803 = vrot.slane %v3787, %v3802
    %v3805 = vunpack.c.l.s4 1966171168
    %v3806 = vunpack.c.0.s8 %v3805
    %v3807 = vlaneseq
    %v3808 = vshrl.u32 %v3807, 7
    %v3809 = vsub.s32 %v3806, %v3808
    %v3810 = vrot.slane %v3788, %v3809
    %v3812 = vunpack.c.l.s4 1966171168
    %v3813 = vunpack.c.0.s8 %v3812
    %v3814 = vlaneseq
    %v3815 = vshrl.u32 %v3814, 7
    %v3816 = vsub.s32 %v3813, %v3815
    %v3817 = vrot.slane %v3789, %v3816
    %v3818 = vcombine.low %v3796, %v3803
    %v3819 = vcombine.low %v3810, %v3817
    %v3821 = vunpack.c.l.s4 1966171168
    %v3822 = vunpack.c.0.s8 %v3821
    %v3823 = vlaneseq
    %v3824 = vshrl.u32 %v3823, 7
    %v3825 = vsub.s32 %v3822, %v3824
    %v3826 = vrot.slane %v3818, %v3825
    %v3828 = vunpack.c.l.s4 1966171168
    %v3829 = vunpack.c.0.s8 %v3828
    %v3830 = vlaneseq
    %v3831 = vshrl.u32 %v3830, 7
    %v3832 = vsub.s32 %v3829, %v3831
    %v3833 = vrot.slane %v3819, %v3832
    %v3834 = vcombine.low %v3826, %v3833
    %v3835 = vcombine.low %v1877, %v1881
    %v3836 = vcombine.low %v1885, %v1889
    %v3837 = vcombine.low %v1893, %v1897
    %v3838 = vcombine.low %v1901, %v1905
    %v3840 = vunpack.c.l.s4 1966171168
    %v3841 = vunpack.c.0.s8 %v3840
    %v3842 = vlaneseq
    %v3843 = vshrl.u32 %v3842, 7
    %v3844 = vsub.s32 %v3841, %v3843
    %v3845 = vrot.slane %v3835, %v3844
    %v3847 = vunpack.c.l.s4 1966171168
    %v3848 = vunpack.c.0.s8 %v3847
    %v3849 = vlaneseq
    %v3850 = vshrl.u32 %v3849, 7
    %v3851 = vsub.s32 %v3848, %v3850
    %v3852 = vrot.slane %v3836, %v3851
    %v3854 = vunpack.c.l.s4 1966171168
    %v3855 = vunpack.c.0.s8 %v3854
    %v3856 = vlaneseq
    %v3857 = vshrl.u32 %v3856, 7
    %v3858 = vsub.s32 %v3855, %v3857
    %v3859 = vrot.slane %v3837, %v3858
    %v3861 = vunpack.c.l.s4 1966171168
    %v3862 = vunpack.c.0.s8 %v3861
    %v3863 = vlaneseq
    %v3864 = vshrl.u32 %v3863, 7
    %v3865 = vsub.s32 %v3862, %v3864
    %v3866 = vrot.slane %v3838, %v3865
    %v3867 = vcombine.low %v3845, %v3852
    %v3868 = vcombine.low %v3859, %v3866
    %v3870 = vunpack.c.l.s4 1966171168
    %v3871 = vunpack.c.0.s8 %v3870
    %v3872 = vlaneseq
    %v3873 = vshrl.u32 %v3872, 7
    %v3874 = vsub.s32 %v3871, %v3873
    %v3875 = vrot.slane %v3867, %v3874
    %v3877 = vunpack.c.l.s4 1966171168
    %v3878 = vunpack.c.0.s8 %v3877
    %v3879 = vlaneseq
    %v3880 = vshrl.u32 %v3879, 7
    %v3881 = vsub.s32 %v3878, %v3880
    %v3882 = vrot.slane %v3868, %v3881
    %v3883 = vcombine.low %v3875, %v3882
    %v3884 = vcombine.low %v1909, %v1913
    %v3885 = vcombine.low %v1917, %v1921
    %v3886 = vcombine.low %v1925, %v1929
    %v3887 = vcombine.low %v1933, %v1937
    %v3889 = vunpack.c.l.s4 1966171168
    %v3890 = vunpack.c.0.s8 %v3889
    %v3891 = vlaneseq
    %v3892 = vshrl.u32 %v3891, 7
    %v3893 = vsub.s32 %v3890, %v3892
    %v3894 = vrot.slane %v3884, %v3893
    %v3896 = vunpack.c.l.s4 1966171168
    %v3897 = vunpack.c.0.s8 %v3896
    %v3898 = vlaneseq
    %v3899 = vshrl.u32 %v3898, 7
    %v3900 = vsub.s32 %v3897, %v3899
    %v3901 = vrot.slane %v3885, %v3900
    %v3903 = vunpack.c.l.s4 1966171168
    %v3904 = vunpack.c.0.s8 %v3903
    %v3905 = vlaneseq
    %v3906 = vshrl.u32 %v3905, 7
    %v3907 = vsub.s32 %v3904, %v3906
    %v3908 = vrot.slane %v3886, %v3907
    %v3910 = vunpack.c.l.s4 1966171168
    %v3911 = vunpack.c.0.s8 %v3910
    %v3912 = vlaneseq
    %v3913 = vshrl.u32 %v3912, 7
    %v3914 = vsub.s32 %v3911, %v3913
    %v3915 = vrot.slane %v3887, %v3914
    %v3916 = vcombine.low %v3894, %v3901
    %v3917 = vcombine.low %v3908, %v3915
    %v3919 = vunpack.c.l.s4 1966171168
    %v3920 = vunpack.c.0.s8 %v3919
    %v3921 = vlaneseq
    %v3922 = vshrl.u32 %v3921, 7
    %v3923 = vsub.s32 %v3920, %v3922
    %v3924 = vrot.slane %v3916, %v3923
    %v3926 = vunpack.c.l.s4 1966171168
    %v3927 = vunpack.c.0.s8 %v3926
    %v3928 = vlaneseq
    %v3929 = vshrl.u32 %v3928, 7
    %v3930 = vsub.s32 %v3927, %v3929
    %v3931 = vrot.slane %v3917, %v3930
    %v3932 = vcombine.low %v3924, %v3931
    %v3933 = vcombine.low %v1941, %v1945
    %v3934 = vcombine.low %v1949, %v1953
    %v3935 = vcombine.low %v1957, %v1961
    %v3936 = vcombine.low %v1965, %v1969
    %v3938 = vunpack.c.l.s4 1966171168
    %v3939 = vunpack.c.0.s8 %v3938
    %v3940 = vlaneseq
    %v3941 = vshrl.u32 %v3940, 7
    %v3942 = vsub.s32 %v3939, %v3941
    %v3943 = vrot.slane %v3933, %v3942
    %v3945 = vunpack.c.l.s4 1966171168
    %v3946 = vunpack.c.0.s8 %v3945
    %v3947 = vlaneseq
    %v3948 = vshrl.u32 %v3947, 7
    %v3949 = vsub.s32 %v3946, %v3948
    %v3950 = vrot.slane %v3934, %v3949
    %v3952 = vunpack.c.l.s4 1966171168
    %v3953 = vunpack.c.0.s8 %v3952
    %v3954 = vlaneseq
    %v3955 = vshrl.u32 %v3954, 7
    %v3956 = vsub.s32 %v3953, %v3955
    %v3957 = vrot.slane %v3935, %v3956
    %v3959 = vunpack.c.l.s4 1966171168
    %v3960 = vunpack.c.0.s8 %v3959
    %v3961 = vlaneseq
    %v3962 = vshrl.u32 %v3961, 7
    %v3963 = vsub.s32 %v3960, %v3962
    %v3964 = vrot.slane %v3936, %v3963
    %v3965 = vcombine.low %v3943, %v3950
    %v3966 = vcombine.low %v3957, %v3964
    %v3968 = vunpack.c.l.s4 1966171168
    %v3969 = vunpack.c.0.s8 %v3968
    %v3970 = vlaneseq
    %v3971 = vshrl.u32 %v3970, 7
    %v3972 = vsub.s32 %v3969, %v3971
    %v3973 = vrot.slane %v3965, %v3972
    %v3975 = vunpack.c.l.s4 1966171168
    %v3976 = vunpack.c.0.s8 %v3975
    %v3977 = vlaneseq
    %v3978 = vshrl.u32 %v3977, 7
    %v3979 = vsub.s32 %v3976, %v3978
    %v3980 = vrot.slane %v3966, %v3979
    %v3981 = vcombine.low %v3973, %v3980
    %v3982 = vcombine.low %v1973, %v1977
    %v3983 = vcombine.low %v1981, %v1985
    %v3984 = vcombine.low %v1989, %v1993
    %v3985 = vcombine.low %v1997, %v2001
    %v3987 = vunpack.c.l.s4 1966171168
    %v3988 = vunpack.c.0.s8 %v3987
    %v3989 = vlaneseq
    %v3990 = vshrl.u32 %v3989, 7
    %v3991 = vsub.s32 %v3988, %v3990
    %v3992 = vrot.slane %v3982, %v3991
    %v3994 = vunpack.c.l.s4 1966171168
    %v3995 = vunpack.c.0.s8 %v3994
    %v3996 = vlaneseq
    %v3997 = vshrl.u32 %v3996, 7
    %v3998 = vsub.s32 %v3995, %v3997
    %v3999 = vrot.slane %v3983, %v3998
    %v4001 = vunpack.c.l.s4 1966171168
    %v4002 = vunpack.c.0.s8 %v4001
    %v4003 = vlaneseq
    %v4004 = vshrl.u32 %v4003, 7
    %v4005 = vsub.s32 %v4002, %v4004
    %v4006 = vrot.slane %v3984, %v4005
    %v4008 = vunpack.c.l.s4 1966171168
    %v4009 = vunpack.c.0.s8 %v4008
    %v4010 = vlaneseq
    %v4011 = vshrl.u32 %v4010, 7
    %v4012 = vsub.s32 %v4009, %v4011
    %v4013 = vrot.slane %v3985, %v4012
    %v4014 = vcombine.low %v3992, %v3999
    %v4015 = vcombine.low %v4006, %v4013
    %v4017 = vunpack.c.l.s4 1966171168
    %v4018 = vunpack.c.0.s8 %v4017
    %v4019 = vlaneseq
    %v4020 = vshrl.u32 %v4019, 7
    %v4021 = vsub.s32 %v4018, %v4020
    %v4022 = vrot.slane %v4014, %v4021
    %v4024 = vunpack.c.l.s4 1966171168
    %v4025 = vunpack.c.0.s8 %v4024
    %v4026 = vlaneseq
    %v4027 = vshrl.u32 %v4026, 7
    %v4028 = vsub.s32 %v4025, %v4027
    %v4029 = vrot.slane %v4015, %v4028
    %v4030 = vcombine.low %v4022, %v4029
    %v4031 = vcombine.low %v2005, %v2009
    %v4032 = vcombine.low %v2013, %v2017
    %v4033 = vcombine.low %v2021, %v2025
    %v4034 = vcombine.low %v2029, %v2033
    %v4036 = vunpack.c.l.s4 1966171168
    %v4037 = vunpack.c.0.s8 %v4036
    %v4038 = vlaneseq
    %v4039 = vshrl.u32 %v4038, 7
    %v4040 = vsub.s32 %v4037, %v4039
    %v4041 = vrot.slane %v4031, %v4040
    %v4043 = vunpack.c.l.s4 1966171168
    %v4044 = vunpack.c.0.s8 %v4043
    %v4045 = vlaneseq
    %v4046 = vshrl.u32 %v4045, 7
    %v4047 = vsub.s32 %v4044, %v4046
    %v4048 = vrot.slane %v4032, %v4047
    %v4050 = vunpack.c.l.s4 1966171168
    %v4051 = vunpack.c.0.s8 %v4050
    %v4052 = vlaneseq
    %v4053 = vshrl.u32 %v4052, 7
    %v4054 = vsub.s32 %v4051, %v4053
    %v4055 = vrot.slane %v4033, %v4054
    %v4057 = vunpack.c.l.s4 1966171168
    %v4058 = vunpack.c.0.s8 %v4057
    %v4059 = vlaneseq
    %v4060 = vshrl.u32 %v4059, 7
    %v4061 = vsub.s32 %v4058, %v4060
    %v4062 = vrot.slane %v4034, %v4061
    %v4063 = vcombine.low %v4041, %v4048
    %v4064 = vcombine.low %v4055, %v4062
    %v4066 = vunpack.c.l.s4 1966171168
    %v4067 = vunpack.c.0.s8 %v4066
    %v4068 = vlaneseq
    %v4069 = vshrl.u32 %v4068, 7
    %v4070 = vsub.s32 %v4067, %v4069
    %v4071 = vrot.slane %v4063, %v4070
    %v4073 = vunpack.c.l.s4 1966171168
    %v4074 = vunpack.c.0.s8 %v4073
    %v4075 = vlaneseq
    %v4076 = vshrl.u32 %v4075, 7
    %v4077 = vsub.s32 %v4074, %v4076
    %v4078 = vrot.slane %v4064, %v4077
    %v4079 = vcombine.low %v4071, %v4078
    %v4080 = vcombine.low %v2037, %v2041
    %v4081 = vcombine.low %v2045, %v2049
    %v4082 = vcombine.low %v2053, %v2057
    %v4083 = vcombine.low %v2061, %v2065
    %v4085 = vunpack.c.l.s4 1966171168
    %v4086 = vunpack.c.0.s8 %v4085
    %v4087 = vlaneseq
    %v4088 = vshrl.u32 %v4087, 7
    %v4089 = vsub.s32 %v4086, %v4088
    %v4090 = vrot.slane %v4080, %v4089
    %v4092 = vunpack.c.l.s4 1966171168
    %v4093 = vunpack.c.0.s8 %v4092
    %v4094 = vlaneseq
    %v4095 = vshrl.u32 %v4094, 7
    %v4096 = vsub.s32 %v4093, %v4095
    %v4097 = vrot.slane %v4081, %v4096
    %v4099 = vunpack.c.l.s4 1966171168
    %v4100 = vunpack.c.0.s8 %v4099
    %v4101 = vlaneseq
    %v4102 = vshrl.u32 %v4101, 7
    %v4103 = vsub.s32 %v4100, %v4102
    %v4104 = vrot.slane %v4082, %v4103
    %v4106 = vunpack.c.l.s4 1966171168
    %v4107 = vunpack.c.0.s8 %v4106
    %v4108 = vlaneseq
    %v4109 = vshrl.u32 %v4108, 7
    %v4110 = vsub.s32 %v4107, %v4109
    %v4111 = vrot.slane %v4083, %v4110
    %v4112 = vcombine.low %v4090, %v4097
    %v4113 = vcombine.low %v4104, %v4111
    %v4115 = vunpack.c.l.s4 1966171168
    %v4116 = vunpack.c.0.s8 %v4115
    %v4117 = vlaneseq
    %v4118 = vshrl.u32 %v4117, 7
    %v4119 = vsub.s32 %v4116, %v4118
    %v4120 = vrot.slane %v4112, %v4119
    %v4122 = vunpack.c.l.s4 1966171168
    %v4123 = vunpack.c.0.s8 %v4122
    %v4124 = vlaneseq
    %v4125 = vshrl.u32 %v4124, 7
    %v4126 = vsub.s32 %v4123, %v4125
    %v4127 = vrot.slane %v4113, %v4126
    %v4128 = vcombine.low %v4120, %v4127
    %v4129 = vcombine.low %v2069, %v2073
    %v4130 = vcombine.low %v2077, %v2081
    %v4131 = vcombine.low %v2085, %v2089
    %v4132 = vcombine.low %v2093, %v2097
    %v4134 = vunpack.c.l.s4 1966171168
    %v4135 = vunpack.c.0.s8 %v4134
    %v4136 = vlaneseq
    %v4137 = vshrl.u32 %v4136, 7
    %v4138 = vsub.s32 %v4135, %v4137
    %v4139 = vrot.slane %v4129, %v4138
    %v4141 = vunpack.c.l.s4 1966171168
    %v4142 = vunpack.c.0.s8 %v4141
    %v4143 = vlaneseq
    %v4144 = vshrl.u32 %v4143, 7
    %v4145 = vsub.s32 %v4142, %v4144
    %v4146 = vrot.slane %v4130, %v4145
    %v4148 = vunpack.c.l.s4 1966171168
    %v4149 = vunpack.c.0.s8 %v4148
    %v4150 = vlaneseq
    %v4151 = vshrl.u32 %v4150, 7
    %v4152 = vsub.s32 %v4149, %v4151
    %v4153 = vrot.slane %v4131, %v4152
    %v4155 = vunpack.c.l.s4 1966171168
    %v4156 = vunpack.c.0.s8 %v4155
    %v4157 = vlaneseq
    %v4158 = vshrl.u32 %v4157, 7
    %v4159 = vsub.s32 %v4156, %v4158
    %v4160 = vrot.slane %v4132, %v4159
    %v4161 = vcombine.low %v4139, %v4146
    %v4162 = vcombine.low %v4153, %v4160
    %v4164 = vunpack.c.l.s4 1966171168
    %v4165 = vunpack.c.0.s8 %v4164
    %v4166 = vlaneseq
    %v4167 = vshrl.u32 %v4166, 7
    %v4168 = vsub.s32 %v4165, %v4167
    %v4169 = vrot.slane %v4161, %v4168
    %v4171 = vunpack.c.l.s4 1966171168
    %v4172 = vunpack.c.0.s8 %v4171
    %v4173 = vlaneseq
    %v4174 = vshrl.u32 %v4173, 7
    %v4175 = vsub.s32 %v4172, %v4174
    %v4176 = vrot.slane %v4162, %v4175
    %v4177 = vcombine.low %v4169, %v4176
    %v4178 = vcombine.low %v2101, %v2105
    %v4179 = vcombine.low %v2109, %v2113
    %v4180 = vcombine.low %v2117, %v2121
    %v4181 = vcombine.low %v2125, %v2129
    %v4183 = vunpack.c.l.s4 1966171168
    %v4184 = vunpack.c.0.s8 %v4183
    %v4185 = vlaneseq
    %v4186 = vshrl.u32 %v4185, 7
    %v4187 = vsub.s32 %v4184, %v4186
    %v4188 = vrot.slane %v4178, %v4187
    %v4190 = vunpack.c.l.s4 1966171168
    %v4191 = vunpack.c.0.s8 %v4190
    %v4192 = vlaneseq
    %v4193 = vshrl.u32 %v4192, 7
    %v4194 = vsub.s32 %v4191, %v4193
    %v4195 = vrot.slane %v4179, %v4194
    %v4197 = vunpack.c.l.s4 1966171168
    %v4198 = vunpack.c.0.s8 %v4197
    %v4199 = vlaneseq
    %v4200 = vshrl.u32 %v4199, 7
    %v4201 = vsub.s32 %v4198, %v4200
    %v4202 = vrot.slane %v4180, %v4201
    %v4204 = vunpack.c.l.s4 1966171168
    %v4205 = vunpack.c.0.s8 %v4204
    %v4206 = vlaneseq
    %v4207 = vshrl.u32 %v4206, 7
    %v4208 = vsub.s32 %v4205, %v4207
    %v4209 = vrot.slane %v4181, %v4208
    %v4210 = vcombine.low %v4188, %v4195
    %v4211 = vcombine.low %v4202, %v4209
    %v4213 = vunpack.c.l.s4 1966171168
    %v4214 = vunpack.c.0.s8 %v4213
    %v4215 = vlaneseq
    %v4216 = vshrl.u32 %v4215, 7
    %v4217 = vsub.s32 %v4214, %v4216
    %v4218 = vrot.slane %v4210, %v4217
    %v4220 = vunpack.c.l.s4 1966171168
    %v4221 = vunpack.c.0.s8 %v4220
    %v4222 = vlaneseq
    %v4223 = vshrl.u32 %v4222, 7
    %v4224 = vsub.s32 %v4221, %v4223
    %v4225 = vrot.slane %v4211, %v4224
    %v4226 = vcombine.low %v4218, %v4225
    %v4227 = vcombine.low %v2133, %v2137
    %v4228 = vcombine.low %v2141, %v2145
    %v4229 = vcombine.low %v2149, %v2153
    %v4230 = vcombine.low %v2157, %v2161
    %v4232 = vunpack.c.l.s4 1966171168
    %v4233 = vunpack.c.0.s8 %v4232
    %v4234 = vlaneseq
    %v4235 = vshrl.u32 %v4234, 7
    %v4236 = vsub.s32 %v4233, %v4235
    %v4237 = vrot.slane %v4227, %v4236
    %v4239 = vunpack.c.l.s4 1966171168
    %v4240 = vunpack.c.0.s8 %v4239
    %v4241 = vlaneseq
    %v4242 = vshrl.u32 %v4241, 7
    %v4243 = vsub.s32 %v4240, %v4242
    %v4244 = vrot.slane %v4228, %v4243
    %v4246 = vunpack.c.l.s4 1966171168
    %v4247 = vunpack.c.0.s8 %v4246
    %v4248 = vlaneseq
    %v4249 = vshrl.u32 %v4248, 7
    %v4250 = vsub.s32 %v4247, %v4249
    %v4251 = vrot.slane %v4229, %v4250
    %v4253 = vunpack.c.l.s4 1966171168
    %v4254 = vunpack.c.0.s8 %v4253
    %v4255 = vlaneseq
    %v4256 = vshrl.u32 %v4255, 7
    %v4257 = vsub.s32 %v4254, %v4256
    %v4258 = vrot.slane %v4230, %v4257
    %v4259 = vcombine.low %v4237, %v4244
    %v4260 = vcombine.low %v4251, %v4258
    %v4262 = vunpack.c.l.s4 1966171168
    %v4263 = vunpack.c.0.s8 %v4262
    %v4264 = vlaneseq
    %v4265 = vshrl.u32 %v4264, 7
    %v4266 = vsub.s32 %v4263, %v4265
    %v4267 = vrot.slane %v4259, %v4266
    %v4269 = vunpack.c.l.s4 1966171168
    %v4270 = vunpack.c.0.s8 %v4269
    %v4271 = vlaneseq
    %v4272 = vshrl.u32 %v4271, 7
    %v4273 = vsub.s32 %v4270, %v4272
    %v4274 = vrot.slane %v4260, %v4273
    %v4275 = vcombine.low %v4267, %v4274
    %v4276 = vcombine.low %v2165, %v2169
    %v4277 = vcombine.low %v2173, %v2177
    %v4278 = vcombine.low %v2181, %v2185
    %v4279 = vcombine.low %v2189, %v2193
    %v4281 = vunpack.c.l.s4 1966171168
    %v4282 = vunpack.c.0.s8 %v4281
    %v4283 = vlaneseq
    %v4284 = vshrl.u32 %v4283, 7
    %v4285 = vsub.s32 %v4282, %v4284
    %v4286 = vrot.slane %v4276, %v4285
    %v4288 = vunpack.c.l.s4 1966171168
    %v4289 = vunpack.c.0.s8 %v4288
    %v4290 = vlaneseq
    %v4291 = vshrl.u32 %v4290, 7
    %v4292 = vsub.s32 %v4289, %v4291
    %v4293 = vrot.slane %v4277, %v4292
    %v4295 = vunpack.c.l.s4 1966171168
    %v4296 = vunpack.c.0.s8 %v4295
    %v4297 = vlaneseq
    %v4298 = vshrl.u32 %v4297, 7
    %v4299 = vsub.s32 %v4296, %v4298
    %v4300 = vrot.slane %v4278, %v4299
    %v4302 = vunpack.c.l.s4 1966171168
    %v4303 = vunpack.c.0.s8 %v4302
    %v4304 = vlaneseq
    %v4305 = vshrl.u32 %v4304, 7
    %v4306 = vsub.s32 %v4303, %v4305
    %v4307 = vrot.slane %v4279, %v4306
    %v4308 = vcombine.low %v4286, %v4293
    %v4309 = vcombine.low %v4300, %v4307
    %v4311 = vunpack.c.l.s4 1966171168
    %v4312 = vunpack.c.0.s8 %v4311
    %v4313 = vlaneseq
    %v4314 = vshrl.u32 %v4313, 7
    %v4315 = vsub.s32 %v4312, %v4314
    %v4316 = vrot.slane %v4308, %v4315
    %v4318 = vunpack.c.l.s4 1966171168
    %v4319 = vunpack.c.0.s8 %v4318
    %v4320 = vlaneseq
    %v4321 = vshrl.u32 %v4320, 7
    %v4322 = vsub.s32 %v4319, %v4321
    %v4323 = vrot.slane %v4309, %v4322
    %v4324 = vcombine.low %v4316, %v4323
    %v4325 = vcombine.low %v2197, %v2201
    %v4326 = vcombine.low %v2205, %v2209
    %v4327 = vcombine.low %v2213, %v2217
    %v4328 = vcombine.low %v2221, %v2225
    %v4330 = vunpack.c.l.s4 1966171168
    %v4331 = vunpack.c.0.s8 %v4330
    %v4332 = vlaneseq
    %v4333 = vshrl.u32 %v4332, 7
    %v4334 = vsub.s32 %v4331, %v4333
    %v4335 = vrot.slane %v4325, %v4334
    %v4337 = vunpack.c.l.s4 1966171168
    %v4338 = vunpack.c.0.s8 %v4337
    %v4339 = vlaneseq
    %v4340 = vshrl.u32 %v4339, 7
    %v4341 = vsub.s32 %v4338, %v4340
    %v4342 = vrot.slane %v4326, %v4341
    %v4344 = vunpack.c.l.s4 1966171168
    %v4345 = vunpack.c.0.s8 %v4344
    %v4346 = vlaneseq
    %v4347 = vshrl.u32 %v4346, 7
    %v4348 = vsub.s32 %v4345, %v4347
    %v4349 = vrot.slane %v4327, %v4348
    %v4351 = vunpack.c.l.s4 1966171168
    %v4352 = vunpack.c.0.s8 %v4351
    %v4353 = vlaneseq
    %v4354 = vshrl.u32 %v4353, 7
    %v4355 = vsub.s32 %v4352, %v4354
    %v4356 = vrot.slane %v4328, %v4355
    %v4357 = vcombine.low %v4335, %v4342
    %v4358 = vcombine.low %v4349, %v4356
    %v4360 = vunpack.c.l.s4 1966171168
    %v4361 = vunpack.c.0.s8 %v4360
    %v4362 = vlaneseq
    %v4363 = vshrl.u32 %v4362, 7
    %v4364 = vsub.s32 %v4361, %v4363
    %v4365 = vrot.slane %v4357, %v4364
    %v4367 = vunpack.c.l.s4 1966171168
    %v4368 = vunpack.c.0.s8 %v4367
    %v4369 = vlaneseq
    %v4370 = vshrl.u32 %v4369, 7
    %v4371 = vsub.s32 %v4368, %v4370
    %v4372 = vrot.slane %v4358, %v4371
    %v4373 = vcombine.low %v4365, %v4372
    %v4374 = vcombine.low %v2229, %v2233
    %v4375 = vcombine.low %v2237, %v2241
    %v4376 = vcombine.low %v2245, %v2249
    %v4377 = vcombine.low %v2253, %v2257
    %v4379 = vunpack.c.l.s4 1966171168
    %v4380 = vunpack.c.0.s8 %v4379
    %v4381 = vlaneseq
    %v4382 = vshrl.u32 %v4381, 7
    %v4383 = vsub.s32 %v4380, %v4382
    %v4384 = vrot.slane %v4374, %v4383
    %v4386 = vunpack.c.l.s4 1966171168
    %v4387 = vunpack.c.0.s8 %v4386
    %v4388 = vlaneseq
    %v4389 = vshrl.u32 %v4388, 7
    %v4390 = vsub.s32 %v4387, %v4389
    %v4391 = vrot.slane %v4375, %v4390
    %v4393 = vunpack.c.l.s4 1966171168
    %v4394 = vunpack.c.0.s8 %v4393
    %v4395 = vlaneseq
    %v4396 = vshrl.u32 %v4395, 7
    %v4397 = vsub.s32 %v4394, %v4396
    %v4398 = vrot.slane %v4376, %v4397
    %v4400 = vunpack.c.l.s4 1966171168
    %v4401 = vunpack.c.0.s8 %v4400
    %v4402 = vlaneseq
    %v4403 = vshrl.u32 %v4402, 7
    %v4404 = vsub.s32 %v4401, %v4403
    %v4405 = vrot.slane %v4377, %v4404
    %v4406 = vcombine.low %v4384, %v4391
    %v4407 = vcombine.low %v4398, %v4405
    %v4409 = vunpack.c.l.s4 1966171168
    %v4410 = vunpack.c.0.s8 %v4409
    %v4411 = vlaneseq
    %v4412 = vshrl.u32 %v4411, 7
    %v4413 = vsub.s32 %v4410, %v4412
    %v4414 = vrot.slane %v4406, %v4413
    %v4416 = vunpack.c.l.s4 1966171168
    %v4417 = vunpack.c.0.s8 %v4416
    %v4418 = vlaneseq
    %v4419 = vshrl.u32 %v4418, 7
    %v4420 = vsub.s32 %v4417, %v4419
    %v4421 = vrot.slane %v4407, %v4420
    %v4422 = vcombine.low %v4414, %v4421
    %v4423 = vcombine.low %v2261, %v2265
    %v4424 = vcombine.low %v2269, %v2273
    %v4425 = vcombine.low %v2277, %v2281
    %v4426 = vcombine.low %v2285, %v2289
    %v4428 = vunpack.c.l.s4 1966171168
    %v4429 = vunpack.c.0.s8 %v4428
    %v4430 = vlaneseq
    %v4431 = vshrl.u32 %v4430, 7
    %v4432 = vsub.s32 %v4429, %v4431
    %v4433 = vrot.slane %v4423, %v4432
    %v4435 = vunpack.c.l.s4 1966171168
    %v4436 = vunpack.c.0.s8 %v4435
    %v4437 = vlaneseq
    %v4438 = vshrl.u32 %v4437, 7
    %v4439 = vsub.s32 %v4436, %v4438
    %v4440 = vrot.slane %v4424, %v4439
    %v4442 = vunpack.c.l.s4 1966171168
    %v4443 = vunpack.c.0.s8 %v4442
    %v4444 = vlaneseq
    %v4445 = vshrl.u32 %v4444, 7
    %v4446 = vsub.s32 %v4443, %v4445
    %v4447 = vrot.slane %v4425, %v4446
    %v4449 = vunpack.c.l.s4 1966171168
    %v4450 = vunpack.c.0.s8 %v4449
    %v4451 = vlaneseq
    %v4452 = vshrl.u32 %v4451, 7
    %v4453 = vsub.s32 %v4450, %v4452
    %v4454 = vrot.slane %v4426, %v4453
    %v4455 = vcombine.low %v4433, %v4440
    %v4456 = vcombine.low %v4447, %v4454
    %v4458 = vunpack.c.l.s4 1966171168
    %v4459 = vunpack.c.0.s8 %v4458
    %v4460 = vlaneseq
    %v4461 = vshrl.u32 %v4460, 7
    %v4462 = vsub.s32 %v4459, %v4461
    %v4463 = vrot.slane %v4455, %v4462
    %v4465 = vunpack.c.l.s4 1966171168
    %v4466 = vunpack.c.0.s8 %v4465
    %v4467 = vlaneseq
    %v4468 = vshrl.u32 %v4467, 7
    %v4469 = vsub.s32 %v4466, %v4468
    %v4470 = vrot.slane %v4456, %v4469
    %v4471 = vcombine.low %v4463, %v4470
    %v4472 = vcombine.low %v2293, %v2297
    %v4473 = vcombine.low %v2301, %v2305
    %v4474 = vcombine.low %v2309, %v2313
    %v4475 = vcombine.low %v2317, %v2321
    %v4477 = vunpack.c.l.s4 1966171168
    %v4478 = vunpack.c.0.s8 %v4477
    %v4479 = vlaneseq
    %v4480 = vshrl.u32 %v4479, 7
    %v4481 = vsub.s32 %v4478, %v4480
    %v4482 = vrot.slane %v4472, %v4481
    %v4484 = vunpack.c.l.s4 1966171168
    %v4485 = vunpack.c.0.s8 %v4484
    %v4486 = vlaneseq
    %v4487 = vshrl.u32 %v4486, 7
    %v4488 = vsub.s32 %v4485, %v4487
    %v4489 = vrot.slane %v4473, %v4488
    %v4491 = vunpack.c.l.s4 1966171168
    %v4492 = vunpack.c.0.s8 %v4491
    %v4493 = vlaneseq
    %v4494 = vshrl.u32 %v4493, 7
    %v4495 = vsub.s32 %v4492, %v4494
    %v4496 = vrot.slane %v4474, %v4495
    %v4498 = vunpack.c.l.s4 1966171168
    %v4499 = vunpack.c.0.s8 %v4498
    %v4500 = vlaneseq
    %v4501 = vshrl.u32 %v4500, 7
    %v4502 = vsub.s32 %v4499, %v4501
    %v4503 = vrot.slane %v4475, %v4502
    %v4504 = vcombine.low %v4482, %v4489
    %v4505 = vcombine.low %v4496, %v4503
    %v4507 = vunpack.c.l.s4 1966171168
    %v4508 = vunpack.c.0.s8 %v4507
    %v4509 = vlaneseq
    %v4510 = vshrl.u32 %v4509, 7
    %v4511 = vsub.s32 %v4508, %v4510
    %v4512 = vrot.slane %v4504, %v4511
    %v4514 = vunpack.c.l.s4 1966171168
    %v4515 = vunpack.c.0.s8 %v4514
    %v4516 = vlaneseq
    %v4517 = vshrl.u32 %v4516, 7
    %v4518 = vsub.s32 %v4515, %v4517
    %v4519 = vrot.slane %v4505, %v4518
    %v4520 = vcombine.low %v4512, %v4519
    %v4521 = vcombine.low %v2325, %v2329
    %v4522 = vcombine.low %v2333, %v2337
    %v4523 = vcombine.low %v2341, %v2345
    %v4524 = vcombine.low %v2349, %v2353
    %v4526 = vunpack.c.l.s4 1966171168
    %v4527 = vunpack.c.0.s8 %v4526
    %v4528 = vlaneseq
    %v4529 = vshrl.u32 %v4528, 7
    %v4530 = vsub.s32 %v4527, %v4529
    %v4531 = vrot.slane %v4521, %v4530
    %v4533 = vunpack.c.l.s4 1966171168
    %v4534 = vunpack.c.0.s8 %v4533
    %v4535 = vlaneseq
    %v4536 = vshrl.u32 %v4535, 7
    %v4537 = vsub.s32 %v4534, %v4536
    %v4538 = vrot.slane %v4522, %v4537
    %v4540 = vunpack.c.l.s4 1966171168
    %v4541 = vunpack.c.0.s8 %v4540
    %v4542 = vlaneseq
    %v4543 = vshrl.u32 %v4542, 7
    %v4544 = vsub.s32 %v4541, %v4543
    %v4545 = vrot.slane %v4523, %v4544
    %v4547 = vunpack.c.l.s4 1966171168
    %v4548 = vunpack.c.0.s8 %v4547
    %v4549 = vlaneseq
    %v4550 = vshrl.u32 %v4549, 7
    %v4551 = vsub.s32 %v4548, %v4550
    %v4552 = vrot.slane %v4524, %v4551
    %v4553 = vcombine.low %v4531, %v4538
    %v4554 = vcombine.low %v4545, %v4552
    %v4556 = vunpack.c.l.s4 1966171168
    %v4557 = vunpack.c.0.s8 %v4556
    %v4558 = vlaneseq
    %v4559 = vshrl.u32 %v4558, 7
    %v4560 = vsub.s32 %v4557, %v4559
    %v4561 = vrot.slane %v4553, %v4560
    %v4563 = vunpack.c.l.s4 1966171168
    %v4564 = vunpack.c.0.s8 %v4563
    %v4565 = vlaneseq
    %v4566 = vshrl.u32 %v4565, 7
    %v4567 = vsub.s32 %v4564, %v4566
    %v4568 = vrot.slane %v4554, %v4567
    %v4569 = vcombine.low %v4561, %v4568
    %v4570 = vcombine.low %v2357, %v2361
    %v4571 = vcombine.low %v2365, %v2369
    %v4572 = vcombine.low %v2373, %v2377
    %v4573 = vcombine.low %v2381, %v2385
    %v4575 = vunpack.c.l.s4 1966171168
    %v4576 = vunpack.c.0.s8 %v4575
    %v4577 = vlaneseq
    %v4578 = vshrl.u32 %v4577, 7
    %v4579 = vsub.s32 %v4576, %v4578
    %v4580 = vrot.slane %v4570, %v4579
    %v4582 = vunpack.c.l.s4 1966171168
    %v4583 = vunpack.c.0.s8 %v4582
    %v4584 = vlaneseq
    %v4585 = vshrl.u32 %v4584, 7
    %v4586 = vsub.s32 %v4583, %v4585
    %v4587 = vrot.slane %v4571, %v4586
    %v4589 = vunpack.c.l.s4 1966171168
    %v4590 = vunpack.c.0.s8 %v4589
    %v4591 = vlaneseq
    %v4592 = vshrl.u32 %v4591, 7
    %v4593 = vsub.s32 %v4590, %v4592
    %v4594 = vrot.slane %v4572, %v4593
    %v4596 = vunpack.c.l.s4 1966171168
    %v4597 = vunpack.c.0.s8 %v4596
    %v4598 = vlaneseq
    %v4599 = vshrl.u32 %v4598, 7
    %v4600 = vsub.s32 %v4597, %v4599
    %v4601 = vrot.slane %v4573, %v4600
    %v4602 = vcombine.low %v4580, %v4587
    %v4603 = vcombine.low %v4594, %v4601
    %v4605 = vunpack.c.l.s4 1966171168
    %v4606 = vunpack.c.0.s8 %v4605
    %v4607 = vlaneseq
    %v4608 = vshrl.u32 %v4607, 7
    %v4609 = vsub.s32 %v4606, %v4608
    %v4610 = vrot.slane %v4602, %v4609
    %v4612 = vunpack.c.l.s4 1966171168
    %v4613 = vunpack.c.0.s8 %v4612
    %v4614 = vlaneseq
    %v4615 = vshrl.u32 %v4614, 7
    %v4616 = vsub.s32 %v4613, %v4615
    %v4617 = vrot.slane %v4603, %v4616
    %v4618 = vcombine.low %v4610, %v4617
    %v4619 = vcombine.low %v2389, %v2393
    %v4620 = vcombine.low %v2397, %v2401
    %v4621 = vcombine.low %v2405, %v2409
    %v4622 = vcombine.low %v2413, %v2417
    %v4624 = vunpack.c.l.s4 1966171168
    %v4625 = vunpack.c.0.s8 %v4624
    %v4626 = vlaneseq
    %v4627 = vshrl.u32 %v4626, 7
    %v4628 = vsub.s32 %v4625, %v4627
    %v4629 = vrot.slane %v4619, %v4628
    %v4631 = vunpack.c.l.s4 1966171168
    %v4632 = vunpack.c.0.s8 %v4631
    %v4633 = vlaneseq
    %v4634 = vshrl.u32 %v4633, 7
    %v4635 = vsub.s32 %v4632, %v4634
    %v4636 = vrot.slane %v4620, %v4635
    %v4638 = vunpack.c.l.s4 1966171168
    %v4639 = vunpack.c.0.s8 %v4638
    %v4640 = vlaneseq
    %v4641 = vshrl.u32 %v4640, 7
    %v4642 = vsub.s32 %v4639, %v4641
    %v4643 = vrot.slane %v4621, %v4642
    %v4645 = vunpack.c.l.s4 1966171168
    %v4646 = vunpack.c.0.s8 %v4645
    %v4647 = vlaneseq
    %v4648 = vshrl.u32 %v4647, 7
    %v4649 = vsub.s32 %v4646, %v4648
    %v4650 = vrot.slane %v4622, %v4649
    %v4651 = vcombine.low %v4629, %v4636
    %v4652 = vcombine.low %v4643, %v4650
    %v4654 = vunpack.c.l.s4 1966171168
    %v4655 = vunpack.c.0.s8 %v4654
    %v4656 = vlaneseq
    %v4657 = vshrl.u32 %v4656, 7
    %v4658 = vsub.s32 %v4655, %v4657
    %v4659 = vrot.slane %v4651, %v4658
    %v4661 = vunpack.c.l.s4 1966171168
    %v4662 = vunpack.c.0.s8 %v4661
    %v4663 = vlaneseq
    %v4664 = vshrl.u32 %v4663, 7
    %v4665 = vsub.s32 %v4662, %v4664
    %v4666 = vrot.slane %v4652, %v4665
    %v4667 = vcombine.low %v4659, %v4666
    %v4668 = vcombine.low %v2421, %v2425
    %v4669 = vcombine.low %v2429, %v2433
    %v4670 = vcombine.low %v2437, %v2441
    %v4671 = vcombine.low %v2445, %v2449
    %v4673 = vunpack.c.l.s4 1966171168
    %v4674 = vunpack.c.0.s8 %v4673
    %v4675 = vlaneseq
    %v4676 = vshrl.u32 %v4675, 7
    %v4677 = vsub.s32 %v4674, %v4676
    %v4678 = vrot.slane %v4668, %v4677
    %v4680 = vunpack.c.l.s4 1966171168
    %v4681 = vunpack.c.0.s8 %v4680
    %v4682 = vlaneseq
    %v4683 = vshrl.u32 %v4682, 7
    %v4684 = vsub.s32 %v4681, %v4683
    %v4685 = vrot.slane %v4669, %v4684
    %v4687 = vunpack.c.l.s4 1966171168
    %v4688 = vunpack.c.0.s8 %v4687
    %v4689 = vlaneseq
    %v4690 = vshrl.u32 %v4689, 7
    %v4691 = vsub.s32 %v4688, %v4690
    %v4692 = vrot.slane %v4670, %v4691
    %v4694 = vunpack.c.l.s4 1966171168
    %v4695 = vunpack.c.0.s8 %v4694
    %v4696 = vlaneseq
    %v4697 = vshrl.u32 %v4696, 7
    %v4698 = vsub.s32 %v4695, %v4697
    %v4699 = vrot.slane %v4671, %v4698
    %v4700 = vcombine.low %v4678, %v4685
    %v4701 = vcombine.low %v4692, %v4699
    %v4703 = vunpack.c.l.s4 1966171168
    %v4704 = vunpack.c.0.s8 %v4703
    %v4705 = vlaneseq
    %v4706 = vshrl.u32 %v4705, 7
    %v4707 = vsub.s32 %v4704, %v4706
    %v4708 = vrot.slane %v4700, %v4707
    %v4710 = vunpack.c.l.s4 1966171168
    %v4711 = vunpack.c.0.s8 %v4710
    %v4712 = vlaneseq
    %v4713 = vshrl.u32 %v4712, 7
    %v4714 = vsub.s32 %v4711, %v4713
    %v4715 = vrot.slane %v4701, %v4714
    %v4716 = vcombine.low %v4708, %v4715
    %v4717 = vcombine.low %v2453, %v2457
    %v4718 = vcombine.low %v2461, %v2465
    %v4719 = vcombine.low %v2469, %v2473
    %v4720 = vcombine.low %v2477, %v2481
    %v4722 = vunpack.c.l.s4 1966171168
    %v4723 = vunpack.c.0.s8 %v4722
    %v4724 = vlaneseq
    %v4725 = vshrl.u32 %v4724, 7
    %v4726 = vsub.s32 %v4723, %v4725
    %v4727 = vrot.slane %v4717, %v4726
    %v4729 = vunpack.c.l.s4 1966171168
    %v4730 = vunpack.c.0.s8 %v4729
    %v4731 = vlaneseq
    %v4732 = vshrl.u32 %v4731, 7
    %v4733 = vsub.s32 %v4730, %v4732
    %v4734 = vrot.slane %v4718, %v4733
    %v4736 = vunpack.c.l.s4 1966171168
    %v4737 = vunpack.c.0.s8 %v4736
    %v4738 = vlaneseq
    %v4739 = vshrl.u32 %v4738, 7
    %v4740 = vsub.s32 %v4737, %v4739
    %v4741 = vrot.slane %v4719, %v4740
    %v4743 = vunpack.c.l.s4 1966171168
    %v4744 = vunpack.c.0.s8 %v4743
    %v4745 = vlaneseq
    %v4746 = vshrl.u32 %v4745, 7
    %v4747 = vsub.s32 %v4744, %v4746
    %v4748 = vrot.slane %v4720, %v4747
    %v4749 = vcombine.low %v4727, %v4734
    %v4750 = vcombine.low %v4741, %v4748
    %v4752 = vunpack.c.l.s4 1966171168
    %v4753 = vunpack.c.0.s8 %v4752
    %v4754 = vlaneseq
    %v4755 = vshrl.u32 %v4754, 7
    %v4756 = vsub.s32 %v4753, %v4755
    %v4757 = vrot.slane %v4749, %v4756
    %v4759 = vunpack.c.l.s4 1966171168
    %v4760 = vunpack.c.0.s8 %v4759
    %v4761 = vlaneseq
    %v4762 = vshrl.u32 %v4761, 7
    %v4763 = vsub.s32 %v4760, %v4762
    %v4764 = vrot.slane %v4750, %v4763
    %v4765 = vcombine.low %v4757, %v4764
    %v4766 = vcombine.low %v2485, %v2489
    %v4767 = vcombine.low %v2493, %v2497
    %v4768 = vcombine.low %v2501, %v2505
    %v4769 = vcombine.low %v2509, %v2513
    %v4771 = vunpack.c.l.s4 1966171168
    %v4772 = vunpack.c.0.s8 %v4771
    %v4773 = vlaneseq
    %v4774 = vshrl.u32 %v4773, 7
    %v4775 = vsub.s32 %v4772, %v4774
    %v4776 = vrot.slane %v4766, %v4775
    %v4778 = vunpack.c.l.s4 1966171168
    %v4779 = vunpack.c.0.s8 %v4778
    %v4780 = vlaneseq
    %v4781 = vshrl.u32 %v4780, 7
    %v4782 = vsub.s32 %v4779, %v4781
    %v4783 = vrot.slane %v4767, %v4782
    %v4785 = vunpack.c.l.s4 1966171168
    %v4786 = vunpack.c.0.s8 %v4785
    %v4787 = vlaneseq
    %v4788 = vshrl.u32 %v4787, 7
    %v4789 = vsub.s32 %v4786, %v4788
    %v4790 = vrot.slane %v4768, %v4789
    %v4792 = vunpack.c.l.s4 1966171168
    %v4793 = vunpack.c.0.s8 %v4792
    %v4794 = vlaneseq
    %v4795 = vshrl.u32 %v4794, 7
    %v4796 = vsub.s32 %v4793, %v4795
    %v4797 = vrot.slane %v4769, %v4796
    %v4798 = vcombine.low %v4776, %v4783
    %v4799 = vcombine.low %v4790, %v4797
    %v4801 = vunpack.c.l.s4 1966171168
    %v4802 = vunpack.c.0.s8 %v4801
    %v4803 = vlaneseq
    %v4804 = vshrl.u32 %v4803, 7
    %v4805 = vsub.s32 %v4802, %v4804
    %v4806 = vrot.slane %v4798, %v4805
    %v4808 = vunpack.c.l.s4 1966171168
    %v4809 = vunpack.c.0.s8 %v4808
    %v4810 = vlaneseq
    %v4811 = vshrl.u32 %v4810, 7
    %v4812 = vsub.s32 %v4809, %v4811
    %v4813 = vrot.slane %v4799, %v4812
    %v4814 = vcombine.low %v4806, %v4813
    %v4815 = vcombine.low %v2517, %v2521
    %v4816 = vcombine.low %v2525, %v2529
    %v4817 = vcombine.low %v2533, %v2537
    %v4818 = vcombine.low %v2541, %v2545
    %v4820 = vunpack.c.l.s4 1966171168
    %v4821 = vunpack.c.0.s8 %v4820
    %v4822 = vlaneseq
    %v4823 = vshrl.u32 %v4822, 7
    %v4824 = vsub.s32 %v4821, %v4823
    %v4825 = vrot.slane %v4815, %v4824
    %v4827 = vunpack.c.l.s4 1966171168
    %v4828 = vunpack.c.0.s8 %v4827
    %v4829 = vlaneseq
    %v4830 = vshrl.u32 %v4829, 7
    %v4831 = vsub.s32 %v4828, %v4830
    %v4832 = vrot.slane %v4816, %v4831
    %v4834 = vunpack.c.l.s4 1966171168
    %v4835 = vunpack.c.0.s8 %v4834
    %v4836 = vlaneseq
    %v4837 = vshrl.u32 %v4836, 7
    %v4838 = vsub.s32 %v4835, %v4837
    %v4839 = vrot.slane %v4817, %v4838
    %v4841 = vunpack.c.l.s4 1966171168
    %v4842 = vunpack.c.0.s8 %v4841
    %v4843 = vlaneseq
    %v4844 = vshrl.u32 %v4843, 7
    %v4845 = vsub.s32 %v4842, %v4844
    %v4846 = vrot.slane %v4818, %v4845
    %v4847 = vcombine.low %v4825, %v4832
    %v4848 = vcombine.low %v4839, %v4846
    %v4850 = vunpack.c.l.s4 1966171168
    %v4851 = vunpack.c.0.s8 %v4850
    %v4852 = vlaneseq
    %v4853 = vshrl.u32 %v4852, 7
    %v4854 = vsub.s32 %v4851, %v4853
    %v4855 = vrot.slane %v4847, %v4854
    %v4857 = vunpack.c.l.s4 1966171168
    %v4858 = vunpack.c.0.s8 %v4857
    %v4859 = vlaneseq
    %v4860 = vshrl.u32 %v4859, 7
    %v4861 = vsub.s32 %v4858, %v4860
    %v4862 = vrot.slane %v4848, %v4861
    %v4863 = vcombine.low %v4855, %v4862
    %v4864 = vcombine.low %v2549, %v2553
    %v4865 = vcombine.low %v2557, %v2561
    %v4866 = vcombine.low %v2565, %v2569
    %v4867 = vcombine.low %v2573, %v2577
    %v4869 = vunpack.c.l.s4 1966171168
    %v4870 = vunpack.c.0.s8 %v4869
    %v4871 = vlaneseq
    %v4872 = vshrl.u32 %v4871, 7
    %v4873 = vsub.s32 %v4870, %v4872
    %v4874 = vrot.slane %v4864, %v4873
    %v4876 = vunpack.c.l.s4 1966171168
    %v4877 = vunpack.c.0.s8 %v4876
    %v4878 = vlaneseq
    %v4879 = vshrl.u32 %v4878, 7
    %v4880 = vsub.s32 %v4877, %v4879
    %v4881 = vrot.slane %v4865, %v4880
    %v4883 = vunpack.c.l.s4 1966171168
    %v4884 = vunpack.c.0.s8 %v4883
    %v4885 = vlaneseq
    %v4886 = vshrl.u32 %v4885, 7
    %v4887 = vsub.s32 %v4884, %v4886
    %v4888 = vrot.slane %v4866, %v4887
    %v4890 = vunpack.c.l.s4 1966171168
    %v4891 = vunpack.c.0.s8 %v4890
    %v4892 = vlaneseq
    %v4893 = vshrl.u32 %v4892, 7
    %v4894 = vsub.s32 %v4891, %v4893
    %v4895 = vrot.slane %v4867, %v4894
    %v4896 = vcombine.low %v4874, %v4881
    %v4897 = vcombine.low %v4888, %v4895
    %v4899 = vunpack.c.l.s4 1966171168
    %v4900 = vunpack.c.0.s8 %v4899
    %v4901 = vlaneseq
    %v4902 = vshrl.u32 %v4901, 7
    %v4903 = vsub.s32 %v4900, %v4902
    %v4904 = vrot.slane %v4896, %v4903
    %v4906 = vunpack.c.l.s4 1966171168
    %v4907 = vunpack.c.0.s8 %v4906
    %v4908 = vlaneseq
    %v4909 = vshrl.u32 %v4908, 7
    %v4910 = vsub.s32 %v4907, %v4909
    %v4911 = vrot.slane %v4897, %v4910
    %v4912 = vcombine.low %v4904, %v4911
    %v4913 = vcombine.low %v2581, %v2585
    %v4914 = vcombine.low %v2589, %v2593
    %v4915 = vcombine.low %v2597, %v2601
    %v4916 = vcombine.low %v2605, %v2609
    %v4918 = vunpack.c.l.s4 1966171168
    %v4919 = vunpack.c.0.s8 %v4918
    %v4920 = vlaneseq
    %v4921 = vshrl.u32 %v4920, 7
    %v4922 = vsub.s32 %v4919, %v4921
    %v4923 = vrot.slane %v4913, %v4922
    %v4925 = vunpack.c.l.s4 1966171168
    %v4926 = vunpack.c.0.s8 %v4925
    %v4927 = vlaneseq
    %v4928 = vshrl.u32 %v4927, 7
    %v4929 = vsub.s32 %v4926, %v4928
    %v4930 = vrot.slane %v4914, %v4929
    %v4932 = vunpack.c.l.s4 1966171168
    %v4933 = vunpack.c.0.s8 %v4932
    %v4934 = vlaneseq
    %v4935 = vshrl.u32 %v4934, 7
    %v4936 = vsub.s32 %v4933, %v4935
    %v4937 = vrot.slane %v4915, %v4936
    %v4939 = vunpack.c.l.s4 1966171168
    %v4940 = vunpack.c.0.s8 %v4939
    %v4941 = vlaneseq
    %v4942 = vshrl.u32 %v4941, 7
    %v4943 = vsub.s32 %v4940, %v4942
    %v4944 = vrot.slane %v4916, %v4943
    %v4945 = vcombine.low %v4923, %v4930
    %v4946 = vcombine.low %v4937, %v4944
    %v4948 = vunpack.c.l.s4 1966171168
    %v4949 = vunpack.c.0.s8 %v4948
    %v4950 = vlaneseq
    %v4951 = vshrl.u32 %v4950, 7
    %v4952 = vsub.s32 %v4949, %v4951
    %v4953 = vrot.slane %v4945, %v4952
    %v4955 = vunpack.c.l.s4 1966171168
    %v4956 = vunpack.c.0.s8 %v4955
    %v4957 = vlaneseq
    %v4958 = vshrl.u32 %v4957, 7
    %v4959 = vsub.s32 %v4956, %v4958
    %v4960 = vrot.slane %v4946, %v4959
    %v4961 = vcombine.low %v4953, %v4960
    %4962 = vset.pattern.permute.xlu0 0
    %4963 = vperm.xlu0 %4962, %v2658
    %v4964 = vpop.permute.xlu0 %4963
    %4965 = vset.pattern.permute.xlu0 0
    %4966 = vperm.xlu0 %4965, %v2707
    %v4967 = vpop.permute.xlu0 %4966
    %4968 = vset.pattern.permute.xlu0 0
    %4969 = vperm.xlu0 %4968, %v2756
    %v4970 = vpop.permute.xlu0 %4969
    %4971 = vset.pattern.permute.xlu0 0
    %4972 = vperm.xlu0 %4971, %v2805
    %v4973 = vpop.permute.xlu0 %4972
    %4974 = vset.pattern.permute.xlu0 0
    %4975 = vperm.xlu0 %4974, %v2854
    %v4976 = vpop.permute.xlu0 %4975
    %4977 = vset.pattern.permute.xlu0 0
    %4978 = vperm.xlu0 %4977, %v2903
    %v4979 = vpop.permute.xlu0 %4978
    %4980 = vset.pattern.permute.xlu0 0
    %4981 = vperm.xlu0 %4980, %v2952
    %v4982 = vpop.permute.xlu0 %4981
    %4983 = vset.pattern.permute.xlu0 0
    %4984 = vperm.xlu0 %4983, %v3001
    %v4985 = vpop.permute.xlu0 %4984
    %4986 = vset.pattern.permute.xlu0 0
    %4987 = vperm.xlu0 %4986, %v3050
    %v4988 = vpop.permute.xlu0 %4987
    %4989 = vset.pattern.permute.xlu0 0
    %4990 = vperm.xlu0 %4989, %v3099
    %v4991 = vpop.permute.xlu0 %4990
    %4992 = vset.pattern.permute.xlu0 0
    %4993 = vperm.xlu0 %4992, %v3148
    %v4994 = vpop.permute.xlu0 %4993
    %4995 = vset.pattern.permute.xlu0 0
    %4996 = vperm.xlu0 %4995, %v3197
    %v4997 = vpop.permute.xlu0 %4996
    %4998 = vset.pattern.permute.xlu0 0
    %4999 = vperm.xlu0 %4998, %v3246
    %v5000 = vpop.permute.xlu0 %4999
    %5001 = vset.pattern.permute.xlu0 0
    %5002 = vperm.xlu0 %5001, %v3295
    %v5003 = vpop.permute.xlu0 %5002
    %5004 = vset.pattern.permute.xlu0 0
    %5005 = vperm.xlu0 %5004, %v3344
    %v5006 = vpop.permute.xlu0 %5005
    %5007 = vset.pattern.permute.xlu0 0
    %5008 = vperm.xlu0 %5007, %v3393
    %v5009 = vpop.permute.xlu0 %5008
    %5010 = vset.pattern.permute.xlu0 0
    %5011 = vperm.xlu0 %5010, %v3442
    %v5012 = vpop.permute.xlu0 %5011
    %5013 = vset.pattern.permute.xlu0 0
    %5014 = vperm.xlu0 %5013, %v3491
    %v5015 = vpop.permute.xlu0 %5014
    %5016 = vset.pattern.permute.xlu0 0
    %5017 = vperm.xlu0 %5016, %v3540
    %v5018 = vpop.permute.xlu0 %5017
    %5019 = vset.pattern.permute.xlu0 0
    %5020 = vperm.xlu0 %5019, %v3589
    %v5021 = vpop.permute.xlu0 %5020
    %5022 = vset.pattern.permute.xlu0 0
    %5023 = vperm.xlu0 %5022, %v3638
    %v5024 = vpop.permute.xlu0 %5023
    %5025 = vset.pattern.permute.xlu0 0
    %5026 = vperm.xlu0 %5025, %v3687
    %v5027 = vpop.permute.xlu0 %5026
    %5028 = vset.pattern.permute.xlu0 0
    %5029 = vperm.xlu0 %5028, %v3736
    %v5030 = vpop.permute.xlu0 %5029
    %5031 = vset.pattern.permute.xlu0 0
    %5032 = vperm.xlu0 %5031, %v3785
    %v5033 = vpop.permute.xlu0 %5032
    %5034 = vset.pattern.permute.xlu0 0
    %5035 = vperm.xlu0 %5034, %v3834
    %v5036 = vpop.permute.xlu0 %5035
    %5037 = vset.pattern.permute.xlu0 0
    %5038 = vperm.xlu0 %5037, %v3883
    %v5039 = vpop.permute.xlu0 %5038
    %5040 = vset.pattern.permute.xlu0 0
    %5041 = vperm.xlu0 %5040, %v3932
    %v5042 = vpop.permute.xlu0 %5041
    %5043 = vset.pattern.permute.xlu0 0
    %5044 = vperm.xlu0 %5043, %v3981
    %v5045 = vpop.permute.xlu0 %5044
    %5046 = vset.pattern.permute.xlu0 0
    %5047 = vperm.xlu0 %5046, %v4030
    %v5048 = vpop.permute.xlu0 %5047
    %5049 = vset.pattern.permute.xlu0 0
    %5050 = vperm.xlu0 %5049, %v4079
    %v5051 = vpop.permute.xlu0 %5050
    %5052 = vset.pattern.permute.xlu0 0
    %5053 = vperm.xlu0 %5052, %v4128
    %v5054 = vpop.permute.xlu0 %5053
    %5055 = vset.pattern.permute.xlu0 0
    %5056 = vperm.xlu0 %5055, %v4177
    %v5057 = vpop.permute.xlu0 %5056
    %5058 = vset.pattern.permute.xlu0 0
    %5059 = vperm.xlu0 %5058, %v4226
    %v5060 = vpop.permute.xlu0 %5059
    %5061 = vset.pattern.permute.xlu0 0
    %5062 = vperm.xlu0 %5061, %v4275
    %v5063 = vpop.permute.xlu0 %5062
    %5064 = vset.pattern.permute.xlu0 0
    %5065 = vperm.xlu0 %5064, %v4324
    %v5066 = vpop.permute.xlu0 %5065
    %5067 = vset.pattern.permute.xlu0 0
    %5068 = vperm.xlu0 %5067, %v4373
    %v5069 = vpop.permute.xlu0 %5068
    %5070 = vset.pattern.permute.xlu0 0
    %5071 = vperm.xlu0 %5070, %v4422
    %v5072 = vpop.permute.xlu0 %5071
    %5073 = vset.pattern.permute.xlu0 0
    %5074 = vperm.xlu0 %5073, %v4471
    %v5075 = vpop.permute.xlu0 %5074
    %5076 = vset.pattern.permute.xlu0 0
    %5077 = vperm.xlu0 %5076, %v4520
    %v5078 = vpop.permute.xlu0 %5077
    %5079 = vset.pattern.permute.xlu0 0
    %5080 = vperm.xlu0 %5079, %v4569
    %v5081 = vpop.permute.xlu0 %5080
    %5082 = vset.pattern.permute.xlu0 0
    %5083 = vperm.xlu0 %5082, %v4618
    %v5084 = vpop.permute.xlu0 %5083
    %5085 = vset.pattern.permute.xlu0 0
    %5086 = vperm.xlu0 %5085, %v4667
    %v5087 = vpop.permute.xlu0 %5086
    %5088 = vset.pattern.permute.xlu0 0
    %5089 = vperm.xlu0 %5088, %v4716
    %v5090 = vpop.permute.xlu0 %5089
    %5091 = vset.pattern.permute.xlu0 0
    %5092 = vperm.xlu0 %5091, %v4765
    %v5093 = vpop.permute.xlu0 %5092
    %5094 = vset.pattern.permute.xlu0 0
    %5095 = vperm.xlu0 %5094, %v4814
    %v5096 = vpop.permute.xlu0 %5095
    %5097 = vset.pattern.permute.xlu0 0
    %5098 = vperm.xlu0 %5097, %v4863
    %v5099 = vpop.permute.xlu0 %5098
    %5100 = vset.pattern.permute.xlu0 0
    %5101 = vperm.xlu0 %5100, %v4912
    %v5102 = vpop.permute.xlu0 %5101
    %5103 = vset.pattern.permute.xlu0 0
    %5104 = vperm.xlu0 %5103, %v4961
    %v5105 = vpop.permute.xlu0 %5104
    %v5106 = vlaneseq
    %v5107 = vand.u32 %v5106, 127
    %v5108 = vlaneseq
    %v5109 = vshrl.u32 %v5108, 7
    %v5110 = vsub.s32 %v5107, %v5109
    %v5111 = vrot.slane %v4964, %v5110
    %v5112 = vadd.s32 %v5107, 4294967288
    %v5113 = vlaneseq
    %v5114 = vshrl.u32 %v5113, 7
    %v5115 = vsub.s32 %v5112, %v5114
    %v5116 = vrot.slane %v4967, %v5115
    %vm5117 = vcmask 130112
    %v5118 = vsel %vm5117, %v5116, %v5111
    %v5119 = vadd.s32 %v5107, 4294967280
    %v5120 = vlaneseq
    %v5121 = vshrl.u32 %v5120, 7
    %v5122 = vsub.s32 %v5119, %v5121
    %v5123 = vrot.slane %v4970, %v5122
    %vm5124 = vcmask 195712
    %v5125 = vsel %vm5124, %v5123, %v5118
    %v5126 = vadd.s32 %v5107, 4294967272
    %v5127 = vlaneseq
    %v5128 = vshrl.u32 %v5127, 7
    %v5129 = vsub.s32 %v5126, %v5128
    %v5130 = vrot.slane %v4973, %v5129
    %vm5131 = vcmask 261312
    %v5132 = vsel %vm5131, %v5130, %v5125
    %v5133 = vadd.s32 %v5107, 4294967264
    %v5134 = vlaneseq
    %v5135 = vshrl.u32 %v5134, 7
    %v5136 = vsub.s32 %v5133, %v5135
    %v5137 = vrot.slane %v4976, %v5136
    %vm5138 = vcmask 326912
    %v5139 = vsel %vm5138, %v5137, %v5132
    %v5140 = vadd.s32 %v5107, 4294967256
    %v5141 = vlaneseq
    %v5142 = vshrl.u32 %v5141, 7
    %v5143 = vsub.s32 %v5140, %v5142
    %v5144 = vrot.slane %v4979, %v5143
    %vm5145 = vcmask 392512
    %v5146 = vsel %vm5145, %v5144, %v5139
    %v5147 = vadd.s32 %v5107, 4294967248
    %v5148 = vlaneseq
    %v5149 = vshrl.u32 %v5148, 7
    %v5150 = vsub.s32 %v5147, %v5149
    %v5151 = vrot.slane %v4982, %v5150
    %vm5152 = vcmask 458112
    %v5153 = vsel %vm5152, %v5151, %v5146
    %v5154 = vadd.s32 %v5107, 4294967240
    %v5155 = vlaneseq
    %v5156 = vshrl.u32 %v5155, 7
    %v5157 = vsub.s32 %v5154, %v5156
    %v5158 = vrot.slane %v4985, %v5157
    %vm5159 = vcmask 523712
    %v5160 = vsel %vm5159, %v5158, %v5153
    %v5161 = vadd.s32 %v5107, 4294967232
    %v5162 = vlaneseq
    %v5163 = vshrl.u32 %v5162, 7
    %v5164 = vsub.s32 %v5161, %v5163
    %v5165 = vrot.slane %v4988, %v5164
    %vm5166 = vcmask 589312
    %v5167 = vsel %vm5166, %v5165, %v5160
    %v5168 = vadd.s32 %v5107, 4294967224
    %v5169 = vlaneseq
    %v5170 = vshrl.u32 %v5169, 7
    %v5171 = vsub.s32 %v5168, %v5170
    %v5172 = vrot.slane %v4991, %v5171
    %vm5173 = vcmask 654912
    %v5174 = vsel %vm5173, %v5172, %v5167
    %v5175 = vadd.s32 %v5107, 4294967216
    %v5176 = vlaneseq
    %v5177 = vshrl.u32 %v5176, 7
    %v5178 = vsub.s32 %v5175, %v5177
    %v5179 = vrot.slane %v4994, %v5178
    %vm5180 = vcmask 720512
    %v5181 = vsel %vm5180, %v5179, %v5174
    %v5182 = vadd.s32 %v5107, 4294967208
    %v5183 = vlaneseq
    %v5184 = vshrl.u32 %v5183, 7
    %v5185 = vsub.s32 %v5182, %v5184
    %v5186 = vrot.slane %v4997, %v5185
    %vm5187 = vcmask 786112
    %v5188 = vsel %vm5187, %v5186, %v5181
    %v5189 = vadd.s32 %v5107, 4294967200
    %v5190 = vlaneseq
    %v5191 = vshrl.u32 %v5190, 7
    %v5192 = vsub.s32 %v5189, %v5191
    %v5193 = vrot.slane %v5000, %v5192
    %vm5194 = vcmask 851712
    %v5195 = vsel %vm5194, %v5193, %v5188
    %v5196 = vadd.s32 %v5107, 4294967192
    %v5197 = vlaneseq
    %v5198 = vshrl.u32 %v5197, 7
    %v5199 = vsub.s32 %v5196, %v5198
    %v5200 = vrot.slane %v5003, %v5199
    %vm5201 = vcmask 917312
    %v5202 = vsel %vm5201, %v5200, %v5195
    %v5203 = vadd.s32 %v5107, 4294967184
    %v5204 = vlaneseq
    %v5205 = vshrl.u32 %v5204, 7
    %v5206 = vsub.s32 %v5203, %v5205
    %v5207 = vrot.slane %v5006, %v5206
    %vm5208 = vcmask 982912
    %v5209 = vsel %vm5208, %v5207, %v5202
    %v5210 = vadd.s32 %v5107, 4294967176
    %v5211 = vlaneseq
    %v5212 = vshrl.u32 %v5211, 7
    %v5213 = vsub.s32 %v5210, %v5212
    %v5214 = vrot.slane %v5009, %v5213
    %vm5215 = vcmask 1048512
    %v5216 = vsel %vm5215, %v5214, %v5209
    %v5217 = vlaneseq
    %v5218 = vshrl.u32 %v5217, 7
    %v5219 = vsub.s32 %v5107, %v5218
    %v5220 = vrot.slane %v5012, %v5219
    %v5221 = vlaneseq
    %v5222 = vshrl.u32 %v5221, 7
    %v5223 = vsub.s32 %v5112, %v5222
    %v5224 = vrot.slane %v5015, %v5223
    %v5225 = vsel %vm5117, %v5224, %v5220
    %v5226 = vlaneseq
    %v5227 = vshrl.u32 %v5226, 7
    %v5228 = vsub.s32 %v5119, %v5227
    %v5229 = vrot.slane %v5018, %v5228
    %v5230 = vsel %vm5124, %v5229, %v5225
    %v5231 = vlaneseq
    %v5232 = vshrl.u32 %v5231, 7
    %v5233 = vsub.s32 %v5126, %v5232
    %v5234 = vrot.slane %v5021, %v5233
    %v5235 = vsel %vm5131, %v5234, %v5230
    %v5236 = vlaneseq
    %v5237 = vshrl.u32 %v5236, 7
    %v5238 = vsub.s32 %v5133, %v5237
    %v5239 = vrot.slane %v5024, %v5238
    %v5240 = vsel %vm5138, %v5239, %v5235
    %v5241 = vlaneseq
    %v5242 = vshrl.u32 %v5241, 7
    %v5243 = vsub.s32 %v5140, %v5242
    %v5244 = vrot.slane %v5027, %v5243
    %v5245 = vsel %vm5145, %v5244, %v5240
    %v5246 = vlaneseq
    %v5247 = vshrl.u32 %v5246, 7
    %v5248 = vsub.s32 %v5147, %v5247
    %v5249 = vrot.slane %v5030, %v5248
    %v5250 = vsel %vm5152, %v5249, %v5245
    %v5251 = vlaneseq
    %v5252 = vshrl.u32 %v5251, 7
    %v5253 = vsub.s32 %v5154, %v5252
    %v5254 = vrot.slane %v5033, %v5253
    %v5255 = vsel %vm5159, %v5254, %v5250
    %v5256 = vlaneseq
    %v5257 = vshrl.u32 %v5256, 7
    %v5258 = vsub.s32 %v5161, %v5257
    %v5259 = vrot.slane %v5036, %v5258
    %v5260 = vsel %vm5166, %v5259, %v5255
    %v5261 = vlaneseq
    %v5262 = vshrl.u32 %v5261, 7
    %v5263 = vsub.s32 %v5168, %v5262
    %v5264 = vrot.slane %v5039, %v5263
    %v5265 = vsel %vm5173, %v5264, %v5260
    %v5266 = vlaneseq
    %v5267 = vshrl.u32 %v5266, 7
    %v5268 = vsub.s32 %v5175, %v5267
    %v5269 = vrot.slane %v5042, %v5268
    %v5270 = vsel %vm5180, %v5269, %v5265
    %v5271 = vlaneseq
    %v5272 = vshrl.u32 %v5271, 7
    %v5273 = vsub.s32 %v5182, %v5272
    %v5274 = vrot.slane %v5045, %v5273
    %v5275 = vsel %vm5187, %v5274, %v5270
    %v5276 = vlaneseq
    %v5277 = vshrl.u32 %v5276, 7
    %v5278 = vsub.s32 %v5189, %v5277
    %v5279 = vrot.slane %v5048, %v5278
    %v5280 = vsel %vm5194, %v5279, %v5275
    %v5281 = vlaneseq
    %v5282 = vshrl.u32 %v5281, 7
    %v5283 = vsub.s32 %v5196, %v5282
    %v5284 = vrot.slane %v5051, %v5283
    %v5285 = vsel %vm5201, %v5284, %v5280
    %v5286 = vlaneseq
    %v5287 = vshrl.u32 %v5286, 7
    %v5288 = vsub.s32 %v5203, %v5287
    %v5289 = vrot.slane %v5054, %v5288
    %v5290 = vsel %vm5208, %v5289, %v5285
    %v5291 = vlaneseq
    %v5292 = vshrl.u32 %v5291, 7
    %v5293 = vsub.s32 %v5210, %v5292
    %v5294 = vrot.slane %v5057, %v5293
    %v5295 = vsel %vm5215, %v5294, %v5290
    %v5296 = vlaneseq
    %v5297 = vshrl.u32 %v5296, 7
    %v5298 = vsub.s32 %v5107, %v5297
    %v5299 = vrot.slane %v5060, %v5298
    %v5300 = vlaneseq
    %v5301 = vshrl.u32 %v5300, 7
    %v5302 = vsub.s32 %v5112, %v5301
    %v5303 = vrot.slane %v5063, %v5302
    %v5304 = vsel %vm5117, %v5303, %v5299
    %v5305 = vlaneseq
    %v5306 = vshrl.u32 %v5305, 7
    %v5307 = vsub.s32 %v5119, %v5306
    %v5308 = vrot.slane %v5066, %v5307
    %v5309 = vsel %vm5124, %v5308, %v5304
    %v5310 = vlaneseq
    %v5311 = vshrl.u32 %v5310, 7
    %v5312 = vsub.s32 %v5126, %v5311
    %v5313 = vrot.slane %v5069, %v5312
    %v5314 = vsel %vm5131, %v5313, %v5309
    %v5315 = vlaneseq
    %v5316 = vshrl.u32 %v5315, 7
    %v5317 = vsub.s32 %v5133, %v5316
    %v5318 = vrot.slane %v5072, %v5317
    %v5319 = vsel %vm5138, %v5318, %v5314
    %v5320 = vlaneseq
    %v5321 = vshrl.u32 %v5320, 7
    %v5322 = vsub.s32 %v5140, %v5321
    %v5323 = vrot.slane %v5075, %v5322
    %v5324 = vsel %vm5145, %v5323, %v5319
    %v5325 = vlaneseq
    %v5326 = vshrl.u32 %v5325, 7
    %v5327 = vsub.s32 %v5147, %v5326
    %v5328 = vrot.slane %v5078, %v5327
    %v5329 = vsel %vm5152, %v5328, %v5324
    %v5330 = vlaneseq
    %v5331 = vshrl.u32 %v5330, 7
    %v5332 = vsub.s32 %v5154, %v5331
    %v5333 = vrot.slane %v5081, %v5332
    %v5334 = vsel %vm5159, %v5333, %v5329
    %v5335 = vlaneseq
    %v5336 = vshrl.u32 %v5335, 7
    %v5337 = vsub.s32 %v5161, %v5336
    %v5338 = vrot.slane %v5084, %v5337
    %v5339 = vsel %vm5166, %v5338, %v5334
    %v5340 = vlaneseq
    %v5341 = vshrl.u32 %v5340, 7
    %v5342 = vsub.s32 %v5168, %v5341
    %v5343 = vrot.slane %v5087, %v5342
    %v5344 = vsel %vm5173, %v5343, %v5339
    %v5345 = vlaneseq
    %v5346 = vshrl.u32 %v5345, 7
    %v5347 = vsub.s32 %v5175, %v5346
    %v5348 = vrot.slane %v5090, %v5347
    %v5349 = vsel %vm5180, %v5348, %v5344
    %v5350 = vlaneseq
    %v5351 = vshrl.u32 %v5350, 7
    %v5352 = vsub.s32 %v5182, %v5351
    %v5353 = vrot.slane %v5093, %v5352
    %v5354 = vsel %vm5187, %v5353, %v5349
    %v5355 = vlaneseq
    %v5356 = vshrl.u32 %v5355, 7
    %v5357 = vsub.s32 %v5189, %v5356
    %v5358 = vrot.slane %v5096, %v5357
    %v5359 = vsel %vm5194, %v5358, %v5354
    %v5360 = vlaneseq
    %v5361 = vshrl.u32 %v5360, 7
    %v5362 = vsub.s32 %v5196, %v5361
    %v5363 = vrot.slane %v5099, %v5362
    %v5364 = vsel %vm5201, %v5363, %v5359
    %v5365 = vlaneseq
    %v5366 = vshrl.u32 %v5365, 7
    %v5367 = vsub.s32 %v5203, %v5366
    %v5368 = vrot.slane %v5102, %v5367
    %v5369 = vsel %vm5208, %v5368, %v5364
    %v5370 = vlaneseq
    %v5371 = vshrl.u32 %v5370, 7
    %v5372 = vsub.s32 %v5210, %v5371
    %v5373 = vrot.slane %v5105, %v5372
    %v5374 = vsel %vm5215, %v5373, %v5369
    %v5375 = vcombine.low %v5216, %v5295
    %v5377 = vunpack.c.l.s4 1966171168
    %v5378 = vunpack.c.0.s8 %v5377
    %v5379 = vlaneseq
    %v5380 = vshrl.u32 %v5379, 7
    %v5381 = vsub.s32 %v5378, %v5380
    %v5382 = vrot.slane %v5375, %v5381
    %v5384 = vunpack.c.l.s4 1966171168
    %v5385 = vunpack.c.0.s8 %v5384
    %v5386 = vlaneseq
    %v5387 = vshrl.u32 %v5386, 7
    %v5388 = vsub.s32 %v5385, %v5387
    %v5389 = vrot.slane %v5374, %v5388
    %v5390 = vcombine.low %v5382, %v5389
    %v5392 = vunpack.c.l.s4 1966171168
    %v5393 = vunpack.c.0.s8 %v5392
    %v5394 = vlaneseq
    %v5395 = vshrl.u32 %v5394, 7
    %v5396 = vsub.s32 %v5393, %v5395
    %v5397 = vrot.slane %v5390, %v5396
    %v5399 = vlaneseq
    %vm5400 = vcmp.ge.s32.totalorder %v5399, 0
    %vm5401 = vcmp.lt.s32.totalorder %v5399, 384
    %vm5402 = vmand %vm5400, %vm5401
    %5403 = vst.msk [vmem:[%s5] sm:$0x7] %vm5402, %v5397
    // Predicated region
    $region30: #{classifier_forward.1} parent=1 // pred_check
      _
    $region31: #{classifier_forward.1} parent=1 // pred_check_branch
      %5405 = sbr.rel (0) target = $region33
    $region32: #{classifier_forward.1} parent=1 // pred_region
      _
    $region33: #{classifier_forward.1} parent=1 // pred_fallthru
      _
    // Predicated region
    $region34: #{classifier_forward.1} parent=1 // pred_check
      _
    $region35: #{classifier_forward.1} parent=1 // pred_check_branch
      %5407 = sbr.rel (0) target = $region37
    $region36: #{classifier_forward.1} parent=1 // pred_region
      _
    $region37: #{classifier_forward.1} parent=1 // pred_fallthru
      _
    %5408 = vsyncpa [#allocation4], 1
    %5409 = vsyncpa [#allocation6], 1

</llo_original>
